<compile_context>
chip_gen: v7x
topology: tpu7x:2x2x1
jax: 0.10.0
libtpu: 0.0.40
codegen_flags: <defaults>
</compile_context>

<pallas_src>
import jax
import jax.numpy as jnp
from jax.experimental import pallas as pl
from jax.experimental.pallas import tpu as pltpu

_BN_EPS = 1e-5
# Tiles chosen by _choose_tile_h stay far below this; re-derive for realistic
# shapes per generation (v7x has 64 MiB physical VMEM, v5e/v6e 128 MiB).
_VMEM_LIMIT_BYTES = 32 * 1024 * 1024


def _round_up(x, m):
    return (x + m - 1) // m * m


# ---------------------------------------------------------------------------
# Pallas kernels
# ---------------------------------------------------------------------------
def _conv1_stats_kernel(x_ref, w_ref, y_ref, stats_ref):
    """3x3 conv (pad=1) + per-tile BatchNorm partial statistics.

    x_ref:     (1, 1, TH+2, Wp, Ci) bf16   spatially pre-padded halo window
    w_ref:     (9, Ci, Cm)          bf16   conv1 weights, tap-major (dh*3+dw)
    y_ref:     (1, TH, W, Cm)       bf16   pre-BN conv1 output (valid region)
    stats_ref: (1, 1, 2, Cm)        f32    row 0 = sum(y), row 1 = sum((y-mean_tile)^2)
    """
    THp, Wp, Ci = x_ref.shape[2], x_ref.shape[3], x_ref.shape[4]
    TH, W, Cm = y_ref.shape[1], y_ref.shape[2], y_ref.shape[3]
    L = THp * Wp
    M = TH * Wp

    # Wp % 8 == 0 -> this reshape keeps the (sublane, lane) tiling: no relayout.
    x = x_ref[0, 0].astype(jnp.float32).reshape(L, Ci)

    acc = jnp.zeros((M, Cm), jnp.float32)
    for k in range(9):                                     # unrolled: 9 MXU GEMMs
        off = (k // 3) * Wp + (k % 3)
        # Tap views come from an XLU sublane roll (different bundle slot than
        # vld/vst) instead of sublane-unaligned slices.
        xs = x if off == 0 else pltpu.roll(x, shift=L - off, axis=0)
        tap = xs[:M, :].astype(jnp.bfloat16)               # tile-aligned prefix
        acc = acc + jnp.dot(tap, w_ref[k], preferred_element_type=jnp.float32)

    # Keep only the real output columns (cols >= W are junk produced by the
    # right-side zero padding of the flat layout).
    y_bf = acc.reshape(TH, Wp, Cm)[:, :W, :].astype(y_ref.dtype)
    y_ref[0] = y_bf

    # BN partial stats from the *stored* (bf16-rounded) tensor, so statistics
    # match exactly what pass 2 normalizes.  Centered per-tile second moment ->
    # numerically stable cross-tile combine (parallel/Chan variance).
    yf = y_bf.astype(jnp.float32)
    s = jnp.sum(yf, axis=(0, 1), keepdims=True).reshape(1, Cm)
    mean_t = s / float(TH * W)
    d = yf - mean_t.reshape(1, 1, Cm)
    m2 = jnp.sum(d * d, axis=(0, 1), keepdims=True).reshape(1, Cm)
    stats_ref[0, 0] = jnp.concatenate([s, m2], axis=0)     # (2, Cm)


def _bn_conv2_relu_kernel(y_ref, scale_ref, bias_ref, w_ref, o_ref):
    """Fused BN normalize + 3x3 conv (pad=1) + ReLU.

    y_ref:     (1, 1, TH+2, Wp, Cm) bf16   pre-BN conv1 output, halo window
    scale_ref: (1, Cm) f32                 gamma * rsqrt(var + eps)
    bias_ref:  (1, Cm) f32                 beta - mean * scale
    w_ref:     (9, Cm, Co) bf16            conv2 weights, tap-major
    o_ref:     (1, TH, W, Co) f32          final output tile
    """
    THp, Wp, Cm = y_ref.shape[2], y_ref.shape[3], y_ref.shape[4]
    TH, W, Co = o_ref.shape[1], o_ref.shape[2], o_ref.shape[3]
    L = THp * Wp
    M = TH * Wp
    t = pl.program_id(1)
    n_h = pl.num_programs(1)

    y = y_ref[0, 0].astype(jnp.float32)                    # (THp, Wp, Cm)

    # conv2's zero padding is applied AFTER the BN affine (as in PyTorch), so
    # positions that correspond to padding must be exactly 0 post-affine.  One
    # select replaces the two full-tile concatenates of the old kernel.  Rows
    # beyond the image exist only on the first/last H-tile; interior halo rows
    # are real neighbor pixels and get normalized like everything else.
    row = jax.lax.broadcasted_iota(jnp.int32, (THp, Wp, Cm), 0)
    col = jax.lax.broadcasted_iota(jnp.int32, (THp, Wp, Cm), 1)
    row_lo = jnp.where(t == 0, 1, 0)
    row_hi = jnp.where(t == n_h - 1, TH, TH + 1)
    valid = (row >= row_lo) & (row <= row_hi) & (col >= 1) & (col <= W)
    yn = jnp.where(valid, y * scale_ref[...] + bias_ref[...], 0.0)
    yn = yn.reshape(L, Cm)                                  # free relabel (Wp%8==0)

    acc = jnp.zeros((M, Co), jnp.float32)
    for k in range(9):
        off = (k // 3) * Wp + (k % 3)
        ys = yn if off == 0 else pltpu.roll(yn, shift=L - off, axis=0)
        tap = ys[:M, :].astype(jnp.bfloat16)
        acc = acc + jnp.dot(tap, w_ref[k], preferred_element_type=jnp.float32)

    out = jnp.maximum(acc, 0.0).reshape(TH, Wp, Co)[:, :W, :]
    o_ref[0] = out.astype(o_ref.dtype)


# ---------------------------------------------------------------------------
# pallas_call wrappers
# ---------------------------------------------------------------------------
def _conv1_stats_pallas(x_win, w1, th, W):
    N, n_h, THp, Wp, Ci = x_win.shape
    Cm = w1.shape[-1]
    H = n_h * th
    return pl.pallas_call(
        _conv1_stats_kernel,
        out_shape=(
            jax.ShapeDtypeStruct((N, H, W, Cm), jnp.bfloat16),
            jax.ShapeDtypeStruct((N, n_h, 2, Cm), jnp.float32),
        ),
        grid=(N, n_h),
        in_specs=[
            pl.BlockSpec((1, 1, THp, Wp, Ci), lambda n, t: (n, t, 0, 0, 0)),
            pl.BlockSpec((9, Ci, Cm), lambda n, t: (0, 0, 0)),   # VMEM-resident
        ],
        out_specs=(
            pl.BlockSpec((1, th, W, Cm), lambda n, t: (n, t, 0, 0)),
            pl.BlockSpec((1, 1, 2, Cm), lambda n, t: (n, t, 0, 0)),
        ),
        compiler_params=pltpu.CompilerParams(
            dimension_semantics=("parallel", "parallel"),
            vmem_limit_bytes=_VMEM_LIMIT_BYTES,
        ),
    )(x_win, w1)


def _bn_conv2_relu_pallas(y_win, scale, bias, w2, th, W):
    N, n_h, THp, Wp, Cm = y_win.shape
    Co = w2.shape[-1]
    H = n_h * th
    return pl.pallas_call(
        _bn_conv2_relu_kernel,
        out_shape=jax.ShapeDtypeStruct((N, H, W, Co), jnp.float32),
        grid=(N, n_h),
        in_specs=[
            pl.BlockSpec((1, 1, THp, Wp, Cm), lambda n, t: (n, t, 0, 0, 0)),
            pl.BlockSpec((1, Cm), lambda n, t: (0, 0)),
            pl.BlockSpec((1, Cm), lambda n, t: (0, 0)),
            pl.BlockSpec((9, Cm, Co), lambda n, t: (0, 0, 0)),   # VMEM-resident
        ],
        out_specs=pl.BlockSpec((1, th, W, Co), lambda n, t: (n, t, 0, 0)),
        compiler_params=pltpu.CompilerParams(
            dimension_semantics=("parallel", "parallel"),
            vmem_limit_bytes=_VMEM_LIMIT_BYTES,
        ),
    )(y_win, scale, bias, w2)


# ---------------------------------------------------------------------------
# Plain-JAX glue: upsample, pad, concat, halo windows
# ---------------------------------------------------------------------------
def _upsample_bilinear_x2_align_corners(x):
    """x: (N, H, W, C) -> (N, 2H, 2W, C); matches torch Upsample(align_corners=True)."""
    N, H, W, C = x.shape
    Hout, Wout = 2 * H, 2 * W
    ys = jnp.arange(Hout, dtype=jnp.float32) * (H - 1) / (Hout - 1)
    xs = jnp.arange(Wout, dtype=jnp.float32) * (W - 1) / (Wout - 1)
    y0 = jnp.floor(ys).astype(jnp.int32)
    x0 = jnp.floor(xs).astype(jnp.int32)
    y1 = jnp.minimum(y0 + 1, H - 1)
    x1 = jnp.minimum(x0 + 1, W - 1)
    wy = (ys - y0.astype(jnp.float32))[None, :, None, None]
    wx = (xs - x0.astype(jnp.float32))[None, None, :, None]
    row0 = x[:, y0]
    row1 = x[:, y1]
    top = row0[:, :, x0] * (1.0 - wx) + row0[:, :, x1] * wx
    bot = row1[:, :, x0] * (1.0 - wx) + row1[:, :, x1] * wx
    return top * (1.0 - wy) + bot * wy


def _upsample_pad_concat(x1_nchw, x2_nchw, dtype):
    """NCHW -> NHWC, bilinear x2, pad to x2's size, channel concat (x2 first)."""
    x1 = jnp.transpose(x1_nchw, (0, 2, 3, 1)).astype(jnp.float32)
    x2 = jnp.transpose(x2_nchw, (0, 2, 3, 1)).astype(jnp.float32)
    x1 = _upsample_bilinear_x2_align_corners(x1)
    diff_y = x2.shape[1] - x1.shape[1]
    diff_x = x2.shape[2] - x1.shape[2]
    x1 = jnp.pad(
        x1,
        ((0, 0),
         (diff_y // 2, diff_y - diff_y // 2),
         (diff_x // 2, diff_x - diff_x // 2),
         (0, 0)),
    )
    # Cast before the concat so the producer pass feeding conv1 moves bf16.
    return jnp.concatenate([x2.astype(dtype), x1.astype(dtype)], axis=-1)


def _h_windows(x_pad, th):
    """(N, H+2, Wp, C) -> (N, H//th, th+2, Wp, C) overlapping row windows."""
    N, Hp, Wp, C = x_pad.shape
    n_h = (Hp - 2) // th
    idx = jnp.arange(n_h)[:, None] * th + jnp.arange(th + 2)[None, :]
    return x_pad[:, idx]


def _choose_tile_h(H, Wp, ci, cm, co):
    """Largest divisor of H whose per-step footprint is modest; prefer >= 2
    tiles per image so the (N, n_h) grid pipelines / load-balances v7x cores."""
    def est(th):
        rows = th + 2
        bytes_in = 2 * rows * Wp * max(ci, cm) * 2            # bf16, double-buffered
        bytes_out = 2 * th * Wp * max(cm, co) * 4
        bytes_tmp = 2 * rows * Wp * (max(ci, cm) * 4 + max(cm, co) * 4)
        return bytes_in + bytes_out + bytes_tmp
    divisors = [d for d in range(1, H + 1) if H % d == 0]
    fitting = [d for d in divisors if est(d) <= 4 * 1024 * 1024] or [1]
    preferred = [d for d in fitting if H // d >= 2] or fitting
    return max(preferred)


# ---------------------------------------------------------------------------
# Up module forward
# ---------------------------------------------------------------------------
def init_up_params(key, in_channels, out_channels):
    """DoubleConv(in_channels, out_channels, mid=in_channels//2), deterministic init."""
    mid = in_channels // 2
    k1, k2 = jax.random.split(key, 2)
    w1 = 0.1 * jax.random.normal(k1, (3, 3, in_channels, mid), jnp.float32)   # HWIO
    w2 = 0.1 * jax.random.normal(k2, (3, 3, mid, out_channels), jnp.float32)  # HWIO
    gamma = jnp.ones((mid,), jnp.float32)
    beta = jnp.zeros((mid,), jnp.float32)
    return {"w1": w1, "w2": w2, "gamma": gamma, "beta": beta}


def up_forward(params, x1_nchw, x2_nchw):
    """Inputs/outputs in NCHW like the PyTorch module."""
    x = _upsample_pad_concat(x1_nchw, x2_nchw, jnp.bfloat16)  # (N, H, W, Cin) bf16
    N, H, W, Cin = x.shape
    mid = params["w1"].shape[-1]
    out_c = params["w2"].shape[-1]

    Wp = _round_up(W + 2, 8)          # padded width: col0 halo, 1..W real, W+1 halo, rest 0
    th = _choose_tile_h(H, Wp, Cin, mid, out_c)
    n_h = H // th

    # Tap-major weights (k = dh*3 + dw).  Channels are NOT padded to 128 lanes.
    w1 = params["w1"].reshape(9, Cin, mid).astype(jnp.bfloat16)
    w2 = params["w2"].reshape(9, mid, out_c).astype(jnp.bfloat16)

    # Pass-1 input: conv1's spatial zero padding + per-H-tile halo windows are
    # built once in HBM (one XLA pad + gather) so the kernel never pads in VMEM.
    x_pad = jnp.pad(x, ((0, 0), (1, 1), (1, Wp - W - 1), (0, 0)))
    x_win = _h_windows(x_pad, th)                         # (N, n_h, th+2, Wp, Cin)

    # Pass 1: conv1 + per-tile BN partial statistics (Pallas, pipelined over (N, n_h)).
    y, stats = _conv1_stats_pallas(x_win, w1, th, W)      # y: (N, H, W, mid) bf16

    # Tiny (C,)-sized epilogue: combine per-tile (sum, centered M2) with the
    # parallel-variance formula and fold gamma/beta into one scale/bias FMA.
    n_t = float(th * W)
    cnt = float(N * n_h) * n_t
    sums = stats[:, :, 0, :]                              # (N, n_h, mid)
    m2s = stats[:, :, 1, :]
    mean_t = sums / n_t
    mean = jnp.sum(sums, axis=(0, 1)) / cnt
    m2 = jnp.sum(m2s, axis=(0, 1)) + n_t * jnp.sum((mean_t - mean) ** 2, axis=(0, 1))
    var = m2 / cnt
    inv_std = jax.lax.rsqrt(var + _BN_EPS)
    scale = (params["gamma"] * inv_std).reshape(1, mid).astype(jnp.float32)
    bias = (params["beta"] - mean * params["gamma"] * inv_std).reshape(1, mid).astype(jnp.float32)
    # NOTE: the BN scale could be folded into w2 (review suggestion); kept as an
    # in-kernel FMA to avoid the bias/scale division (gamma ~ 0 hazard).

    # Pass-2 input: same halo-window layout for y; conv2's zero padding is
    # re-established post-BN inside the kernel.
    y_pad = jnp.pad(y, ((0, 0), (1, 1), (1, Wp - W - 1), (0, 0)))
    y_win = _h_windows(y_pad, th)                         # (N, n_h, th+2, Wp, mid)

    # Pass 2: BN normalize + conv2 + ReLU, fused.
    z = _bn_conv2_relu_pallas(y_win, scale, bias, w2, th, W)   # (N, H, W, out_c) f32
    return jnp.transpose(z, (0, 3, 1, 2))                 # NHWC -> NCHW


# ---------------------------------------------------------------------------
# Pure-JAX reference (f32) for correctness checking
# ---------------------------------------------------------------------------
def _reference_forward(params, x1_nchw, x2_nchw):
    x = _upsample_pad_concat(x1_nchw, x2_nchw, jnp.float32)
    dn = ("NHWC", "HWIO", "NHWC")
    y = jax.lax.conv_general_dilated(
        x, params["w1"], (1, 1), ((1, 1), (1, 1)), dimension_numbers=dn,
        precision=jax.lax.Precision.HIGHEST)
    mean = jnp.mean(y, axis=(0, 1, 2))
    var = jnp.mean((y - mean) ** 2, axis=(0, 1, 2))
    y = (y - mean) * jax.lax.rsqrt(var + _BN_EPS) * params["gamma"] + params["beta"]
    z = jax.lax.conv_general_dilated(
        y, params["w2"], (1, 1), ((1, 1), (1, 1)), dimension_numbers=dn,
        precision=jax.lax.Precision.HIGHEST)
    z = jnp.maximum(z, 0.0)
    return jnp.transpose(z, (0, 3, 1, 2))


if __name__ == "__main__":
    key = jax.random.PRNGKey(0)
    k_x1, k_x2, k_p = jax.random.split(key, 3)

    # x1: decoder feature (smaller spatial), x2: skip connection.
    x1 = jax.random.normal(k_x1, (2, 4, 8, 8), jnp.float32)      # NCHW
    x2 = jax.random.normal(k_x2, (2, 4, 16, 16), jnp.float32)    # NCHW

    in_channels = x1.shape[1] + x2.shape[1]   # channels after concat = 8
    out_channels = 4
    params = init_up_params(k_p, in_channels, out_channels)

    fwd = jax.jit(up_forward)
    out = jax.block_until_ready(fwd(params, x1, x2))

    assert out.shape == (2, out_channels, 16, 16), out.shape
    assert bool(jnp.all(jnp.isfinite(out)))

    # Correctness vs f32 reference (bf16 MXU inputs -> loose tolerance).
    ref = _reference_forward(params, x1, x2)
    max_err = float(jnp.max(jnp.abs(out - ref)))
    assert max_err < 0.1, f"mismatch vs reference: max abs err {max_err}"

    print("KERNEL_OK")
</pallas_src>

<mosaic_0001>
module attributes {stable_mosaic.version = 11 : i64} {
  func.func @_conv1_stats_kernel(%arg0: i32, %arg1: i32, %arg2: memref<1x1x10x24x8xbf16, #tpu.memory_space<vmem>>, %arg3: memref<9x8x4xbf16, #tpu.memory_space<vmem>>, %arg4: memref<1x8x16x4xbf16, #tpu.memory_space<vmem>>, %arg5: memref<1x1x2x4xf32, #tpu.memory_space<vmem>>) attributes {dimension_semantics = [#tpu.dimension_semantics<parallel>, #tpu.dimension_semantics<parallel>], iteration_bounds = array<i64: 2, 2>, scalar_prefetch = 0 : i64, scratch_operands = 0 : i64, tpu.core_type = #tpu.core_type<tc>, window_params = [{transform_indices = @transform_0, window_bounds = array<i64: 1, 1, 10, 24, 8>}, {pipeline_mode = #tpu.pipeline_mode<synchronous>, transform_indices = @transform_1, window_bounds = array<i64: 9, 8, 4>}, {transform_indices = @transform_2, window_bounds = array<i64: 1, 8, 16, 4>}, {transform_indices = @transform_3, window_bounds = array<i64: 1, 1, 2, 4>}]} {
    %c0 = arith.constant 0 : index
    %c0_0 = arith.constant 0 : index
    %c0_1 = arith.constant 0 : index
    %c0_2 = arith.constant 0 : index
    %c0_3 = arith.constant 0 : index
    %0 = vector.load %arg2[%c0, %c0_0, %c0_1, %c0_2, %c0_3] : memref<1x1x10x24x8xbf16, #tpu.memory_space<vmem>>, vector<1x1x10x24x8xbf16>
    %1 = vector.shape_cast %0 : vector<1x1x10x24x8xbf16> to vector<10x24x8xbf16>
    %2 = arith.extf %1 : vector<10x24x8xbf16> to vector<10x24x8xf32>
    %3 = vector.shape_cast %2 : vector<10x24x8xf32> to vector<240x8xf32>
    %cst = arith.constant 0.000000e+00 : f32
    %4 = vector.broadcast %cst : f32 to vector<192x4xf32>
    %5 = vector.extract_strided_slice %3 {offsets = [0, 0], sizes = [192, 8], strides = [1, 1]} : vector<240x8xf32> to vector<192x8xf32>
    %6 = arith.truncf %5 : vector<192x8xf32> to vector<192x8xbf16>
    %c0_4 = arith.constant 0 : index
    %c0_5 = arith.constant 0 : index
    %c0_6 = arith.constant 0 : index
    %7 = vector.load %arg3[%c0_4, %c0_5, %c0_6] : memref<9x8x4xbf16, #tpu.memory_space<vmem>>, vector<1x8x4xbf16>
    %8 = vector.shape_cast %7 : vector<1x8x4xbf16> to vector<8x4xbf16>
    %cst_7 = arith.constant dense<0.000000e+00> : vector<192x4xf32>
    %9 = tpu.matmul %6, %8, %cst_7 {dimension_numbers = #tpu.dot_dimension_numbers<[1], [0], [0], [1], [0, 0, 1, 1], [], []>} : vector<192x8xbf16>, vector<8x4xbf16>, vector<192x4xf32> -> vector<192x4xf32>
    %10 = arith.addf %4, %9 : vector<192x4xf32>
    %c239_i32 = arith.constant 239 : i32
    %11 = tpu.dynamic_rotate %3 by %c239_i32 dim 0 : vector<240x8xf32>, i32 -> vector<240x8xf32>
    %12 = vector.extract_strided_slice %11 {offsets = [0, 0], sizes = [192, 8], strides = [1, 1]} : vector<240x8xf32> to vector<192x8xf32>
    %13 = arith.truncf %12 : vector<192x8xf32> to vector<192x8xbf16>
    %c1 = arith.constant 1 : index
    %c0_8 = arith.constant 0 : index
    %c0_9 = arith.constant 0 : index
    %14 = vector.load %arg3[%c1, %c0_8, %c0_9] : memref<9x8x4xbf16, #tpu.memory_space<vmem>>, vector<1x8x4xbf16>
    %15 = vector.shape_cast %14 : vector<1x8x4xbf16> to vector<8x4xbf16>
    %cst_10 = arith.constant dense<0.000000e+00> : vector<192x4xf32>
    %16 = tpu.matmul %13, %15, %cst_10 {dimension_numbers = #tpu.dot_dimension_numbers<[1], [0], [0], [1], [0, 0, 1, 1], [], []>} : vector<192x8xbf16>, vector<8x4xbf16>, vector<192x4xf32> -> vector<192x4xf32>
    %17 = arith.addf %10, %16 : vector<192x4xf32>
    %c238_i32 = arith.constant 238 : i32
    %18 = tpu.dynamic_rotate %3 by %c238_i32 dim 0 : vector<240x8xf32>, i32 -> vector<240x8xf32>
    %19 = vector.extract_strided_slice %18 {offsets = [0, 0], sizes = [192, 8], strides = [1, 1]} : vector<240x8xf32> to vector<192x8xf32>
    %20 = arith.truncf %19 : vector<192x8xf32> to vector<192x8xbf16>
    %c2 = arith.constant 2 : index
    %c0_11 = arith.constant 0 : index
    %c0_12 = arith.constant 0 : index
    %21 = vector.load %arg3[%c2, %c0_11, %c0_12] : memref<9x8x4xbf16, #tpu.memory_space<vmem>>, vector<1x8x4xbf16>
    %22 = vector.shape_cast %21 : vector<1x8x4xbf16> to vector<8x4xbf16>
    %cst_13 = arith.constant dense<0.000000e+00> : vector<192x4xf32>
    %23 = tpu.matmul %20, %22, %cst_13 {dimension_numbers = #tpu.dot_dimension_numbers<[1], [0], [0], [1], [0, 0, 1, 1], [], []>} : vector<192x8xbf16>, vector<8x4xbf16>, vector<192x4xf32> -> vector<192x4xf32>
    %24 = arith.addf %17, %23 : vector<192x4xf32>
    %c216_i32 = arith.constant 216 : i32
    %25 = tpu.dynamic_rotate %3 by %c216_i32 dim 0 : vector<240x8xf32>, i32 -> vector<240x8xf32>
    %26 = vector.extract_strided_slice %25 {offsets = [0, 0], sizes = [192, 8], strides = [1, 1]} : vector<240x8xf32> to vector<192x8xf32>
    %27 = arith.truncf %26 : vector<192x8xf32> to vector<192x8xbf16>
    %c3 = arith.constant 3 : index
    %c0_14 = arith.constant 0 : index
    %c0_15 = arith.constant 0 : index
    %28 = vector.load %arg3[%c3, %c0_14, %c0_15] : memref<9x8x4xbf16, #tpu.memory_space<vmem>>, vector<1x8x4xbf16>
    %29 = vector.shape_cast %28 : vector<1x8x4xbf16> to vector<8x4xbf16>
    %cst_16 = arith.constant dense<0.000000e+00> : vector<192x4xf32>
    %30 = tpu.matmul %27, %29, %cst_16 {dimension_numbers = #tpu.dot_dimension_numbers<[1], [0], [0], [1], [0, 0, 1, 1], [], []>} : vector<192x8xbf16>, vector<8x4xbf16>, vector<192x4xf32> -> vector<192x4xf32>
    %31 = arith.addf %24, %30 : vector<192x4xf32>
    %c215_i32 = arith.constant 215 : i32
    %32 = tpu.dynamic_rotate %3 by %c215_i32 dim 0 : vector<240x8xf32>, i32 -> vector<240x8xf32>
    %33 = vector.extract_strided_slice %32 {offsets = [0, 0], sizes = [192, 8], strides = [1, 1]} : vector<240x8xf32> to vector<192x8xf32>
    %34 = arith.truncf %33 : vector<192x8xf32> to vector<192x8xbf16>
    %c4 = arith.constant 4 : index
    %c0_17 = arith.constant 0 : index
    %c0_18 = arith.constant 0 : index
    %35 = vector.load %arg3[%c4, %c0_17, %c0_18] : memref<9x8x4xbf16, #tpu.memory_space<vmem>>, vector<1x8x4xbf16>
    %36 = vector.shape_cast %35 : vector<1x8x4xbf16> to vector<8x4xbf16>
    %cst_19 = arith.constant dense<0.000000e+00> : vector<192x4xf32>
    %37 = tpu.matmul %34, %36, %cst_19 {dimension_numbers = #tpu.dot_dimension_numbers<[1], [0], [0], [1], [0, 0, 1, 1], [], []>} : vector<192x8xbf16>, vector<8x4xbf16>, vector<192x4xf32> -> vector<192x4xf32>
    %38 = arith.addf %31, %37 : vector<192x4xf32>
    %c214_i32 = arith.constant 214 : i32
    %39 = tpu.dynamic_rotate %3 by %c214_i32 dim 0 : vector<240x8xf32>, i32 -> vector<240x8xf32>
    %40 = vector.extract_strided_slice %39 {offsets = [0, 0], sizes = [192, 8], strides = [1, 1]} : vector<240x8xf32> to vector<192x8xf32>
    %41 = arith.truncf %40 : vector<192x8xf32> to vector<192x8xbf16>
    %c5 = arith.constant 5 : index
    %c0_20 = arith.constant 0 : index
    %c0_21 = arith.constant 0 : index
    %42 = vector.load %arg3[%c5, %c0_20, %c0_21] : memref<9x8x4xbf16, #tpu.memory_space<vmem>>, vector<1x8x4xbf16>
    %43 = vector.shape_cast %42 : vector<1x8x4xbf16> to vector<8x4xbf16>
    %cst_22 = arith.constant dense<0.000000e+00> : vector<192x4xf32>
    %44 = tpu.matmul %41, %43, %cst_22 {dimension_numbers = #tpu.dot_dimension_numbers<[1], [0], [0], [1], [0, 0, 1, 1], [], []>} : vector<192x8xbf16>, vector<8x4xbf16>, vector<192x4xf32> -> vector<192x4xf32>
    %45 = arith.addf %38, %44 : vector<192x4xf32>
    %c192_i32 = arith.constant 192 : i32
    %46 = tpu.dynamic_rotate %3 by %c192_i32 dim 0 : vector<240x8xf32>, i32 -> vector<240x8xf32>
    %47 = vector.extract_strided_slice %46 {offsets = [0, 0], sizes = [192, 8], strides = [1, 1]} : vector<240x8xf32> to vector<192x8xf32>
    %48 = arith.truncf %47 : vector<192x8xf32> to vector<192x8xbf16>
    %c6 = arith.constant 6 : index
    %c0_23 = arith.constant 0 : index
    %c0_24 = arith.constant 0 : index
    %49 = vector.load %arg3[%c6, %c0_23, %c0_24] : memref<9x8x4xbf16, #tpu.memory_space<vmem>>, vector<1x8x4xbf16>
    %50 = vector.shape_cast %49 : vector<1x8x4xbf16> to vector<8x4xbf16>
    %cst_25 = arith.constant dense<0.000000e+00> : vector<192x4xf32>
    %51 = tpu.matmul %48, %50, %cst_25 {dimension_numbers = #tpu.dot_dimension_numbers<[1], [0], [0], [1], [0, 0, 1, 1], [], []>} : vector<192x8xbf16>, vector<8x4xbf16>, vector<192x4xf32> -> vector<192x4xf32>
    %52 = arith.addf %45, %51 : vector<192x4xf32>
    %c191_i32 = arith.constant 191 : i32
    %53 = tpu.dynamic_rotate %3 by %c191_i32 dim 0 : vector<240x8xf32>, i32 -> vector<240x8xf32>
    %54 = vector.extract_strided_slice %53 {offsets = [0, 0], sizes = [192, 8], strides = [1, 1]} : vector<240x8xf32> to vector<192x8xf32>
    %55 = arith.truncf %54 : vector<192x8xf32> to vector<192x8xbf16>
    %c7 = arith.constant 7 : index
    %c0_26 = arith.constant 0 : index
    %c0_27 = arith.constant 0 : index
    %56 = vector.load %arg3[%c7, %c0_26, %c0_27] : memref<9x8x4xbf16, #tpu.memory_space<vmem>>, vector<1x8x4xbf16>
    %57 = vector.shape_cast %56 : vector<1x8x4xbf16> to vector<8x4xbf16>
    %cst_28 = arith.constant dense<0.000000e+00> : vector<192x4xf32>
    %58 = tpu.matmul %55, %57, %cst_28 {dimension_numbers = #tpu.dot_dimension_numbers<[1], [0], [0], [1], [0, 0, 1, 1], [], []>} : vector<192x8xbf16>, vector<8x4xbf16>, vector<192x4xf32> -> vector<192x4xf32>
    %59 = arith.addf %52, %58 : vector<192x4xf32>
    %c190_i32 = arith.constant 190 : i32
    %60 = tpu.dynamic_rotate %3 by %c190_i32 dim 0 : vector<240x8xf32>, i32 -> vector<240x8xf32>
    %61 = vector.extract_strided_slice %60 {offsets = [0, 0], sizes = [192, 8], strides = [1, 1]} : vector<240x8xf32> to vector<192x8xf32>
    %62 = arith.truncf %61 : vector<192x8xf32> to vector<192x8xbf16>
    %c8 = arith.constant 8 : index
    %c0_29 = arith.constant 0 : index
    %c0_30 = arith.constant 0 : index
    %63 = vector.load %arg3[%c8, %c0_29, %c0_30] : memref<9x8x4xbf16, #tpu.memory_space<vmem>>, vector<1x8x4xbf16>
    %64 = vector.shape_cast %63 : vector<1x8x4xbf16> to vector<8x4xbf16>
    %cst_31 = arith.constant dense<0.000000e+00> : vector<192x4xf32>
    %65 = tpu.matmul %62, %64, %cst_31 {dimension_numbers = #tpu.dot_dimension_numbers<[1], [0], [0], [1], [0, 0, 1, 1], [], []>} : vector<192x8xbf16>, vector<8x4xbf16>, vector<192x4xf32> -> vector<192x4xf32>
    %66 = arith.addf %59, %65 : vector<192x4xf32>
    %67 = vector.shape_cast %66 : vector<192x4xf32> to vector<8x24x4xf32>
    %68 = vector.extract_strided_slice %67 {offsets = [0, 0, 0], sizes = [8, 16, 4], strides = [1, 1, 1]} : vector<8x24x4xf32> to vector<8x16x4xf32>
    %69 = arith.truncf %68 : vector<8x16x4xf32> to vector<8x16x4xbf16>
    %c0_32 = arith.constant 0 : index
    %c0_33 = arith.constant 0 : index
    %c0_34 = arith.constant 0 : index
    %c0_35 = arith.constant 0 : index
    %70 = vector.load %arg4[%c0_32, %c0_33, %c0_34, %c0_35] : memref<1x8x16x4xbf16, #tpu.memory_space<vmem>>, vector<1x8x16x4xbf16>
    %71 = vector.shape_cast %70 : vector<1x8x16x4xbf16> to vector<8x16x4xbf16>
    %72 = vector.shape_cast %69 : vector<8x16x4xbf16> to vector<1x8x16x4xbf16>
    tpu.vector_store %arg4[%c0_32, %c0_33, %c0_34, %c0_35], %72 {strides = array<i32>} : memref<1x8x16x4xbf16, #tpu.memory_space<vmem>>, vector<1x8x16x4xbf16>,
    %73 = arith.extf %69 : vector<8x16x4xbf16> to vector<8x16x4xf32>
    %cst_36 = arith.constant dense<0.000000e+00> : vector<4xf32>
    %74 = vector.multi_reduction <add>, %73, %cst_36 [0, 1] : vector<8x16x4xf32> to vector<4xf32>
    %75 = vector.shape_cast %74 : vector<4xf32> to vector<1x1x4xf32>
    %76 = vector.shape_cast %75 : vector<1x1x4xf32> to vector<1x4xf32>
    %cst_37 = arith.constant 1.280000e+02 : f32
    %77 = vector.broadcast %cst_37 : f32 to vector<1x4xf32>
    %78 = arith.divf %76, %77 : vector<1x4xf32>
    %79 = vector.shape_cast %78 : vector<1x4xf32> to vector<1x1x4xf32>
    %80 = vector.broadcast %79 : vector<1x1x4xf32> to vector<8x16x4xf32>
    %81 = arith.subf %73, %80 : vector<8x16x4xf32>
    %82 = arith.mulf %81, %81 : vector<8x16x4xf32>
    %cst_38 = arith.constant dense<0.000000e+00> : vector<4xf32>
    %83 = vector.multi_reduction <add>, %82, %cst_38 [0, 1] : vector<8x16x4xf32> to vector<4xf32>
    %84 = vector.shape_cast %83 : vector<4xf32> to vector<1x1x4xf32>
    %85 = vector.shape_cast %84 : vector<1x1x4xf32> to vector<1x4xf32>
    %86 = tpu.concatenate %76, %85 in 0 : vector<1x4xf32>, vector<1x4xf32> -> vector<2x4xf32>
    %c0_39 = arith.constant 0 : index
    %c0_40 = arith.constant 0 : index
    %c0_41 = arith.constant 0 : index
    %c0_42 = arith.constant 0 : index
    %87 = vector.load %arg5[%c0_39, %c0_40, %c0_41, %c0_42] : memref<1x1x2x4xf32, #tpu.memory_space<vmem>>, vector<1x1x2x4xf32>
    %88 = vector.shape_cast %87 : vector<1x1x2x4xf32> to vector<2x4xf32>
    %89 = vector.shape_cast %86 : vector<2x4xf32> to vector<1x1x2x4xf32>
    tpu.vector_store %arg5[%c0_39, %c0_40, %c0_41, %c0_42], %89 {strides = array<i32>} : memref<1x1x2x4xf32, #tpu.memory_space<vmem>>, vector<1x1x2x4xf32>,
    return
  }
  func.func @transform_0(%arg0: i32, %arg1: i32) -> (i32, i32, i32, i32, i32) {
    %c0_i32 = arith.constant 0 : i32
    %c0_i32_0 = arith.constant 0 : i32
    %c0_i32_1 = arith.constant 0 : i32
    %c0_i32_2 = arith.constant 0 : i32
    return %arg0, %arg1, %c0_i32, %c0_i32_0, %c0_i32_1 : i32, i32, i32, i32, i32
  }
  func.func @transform_1(%arg0: i32, %arg1: i32) -> (i32, i32, i32) {
    %c0_i32 = arith.constant 0 : i32
    %c0_i32_0 = arith.constant 0 : i32
    %c0_i32_1 = arith.constant 0 : i32
    %c0_i32_2 = arith.constant 0 : i32
    return %c0_i32, %c0_i32_0, %c0_i32_1 : i32, i32, i32
  }
  func.func @transform_2(%arg0: i32, %arg1: i32) -> (i32, i32, i32, i32) {
    %c0_i32 = arith.constant 0 : i32
    %c0_i32_0 = arith.constant 0 : i32
    %c0_i32_1 = arith.constant 0 : i32
    return %arg0, %arg1, %c0_i32, %c0_i32_0 : i32, i32, i32, i32
  }
  func.func @transform_3(%arg0: i32, %arg1: i32) -> (i32, i32, i32, i32) {
    %c0_i32 = arith.constant 0 : i32
    %c0_i32_0 = arith.constant 0 : i32
    %c0_i32_1 = arith.constant 0 : i32
    return %arg0, %arg1, %c0_i32, %c0_i32_0 : i32, i32, i32, i32
  }
}

module attributes {stable_mosaic.version = 11 : i64} {
  func.func @_bn_conv2_relu_kernel(%arg0: i32, %arg1: i32, %arg2: memref<1x1x10x24x4xbf16, #tpu.memory_space<vmem>>, %arg3: memref<1x4xf32, #tpu.memory_space<vmem>>, %arg4: memref<1x4xf32, #tpu.memory_space<vmem>>, %arg5: memref<9x4x4xbf16, #tpu.memory_space<vmem>>, %arg6: memref<1x8x16x4xf32, #tpu.memory_space<vmem>>) attributes {dimension_semantics = [#tpu.dimension_semantics<parallel>, #tpu.dimension_semantics<parallel>], iteration_bounds = array<i64: 2, 2>, scalar_prefetch = 0 : i64, scratch_operands = 0 : i64, tpu.core_type = #tpu.core_type<tc>, window_params = [{transform_indices = @transform_0, window_bounds = array<i64: 1, 1, 10, 24, 4>}, {pipeline_mode = #tpu.pipeline_mode<synchronous>, transform_indices = @transform_1, window_bounds = array<i64: 1, 4>}, {pipeline_mode = #tpu.pipeline_mode<synchronous>, transform_indices = @transform_2, window_bounds = array<i64: 1, 4>}, {pipeline_mode = #tpu.pipeline_mode<synchronous>, transform_indices = @transform_3, window_bounds = array<i64: 9, 4, 4>}, {transform_indices = @transform_4, window_bounds = array<i64: 1, 8, 16, 4>}]} {
    %c0 = arith.constant 0 : index
    %c0_0 = arith.constant 0 : index
    %c0_1 = arith.constant 0 : index
    %c0_2 = arith.constant 0 : index
    %c0_3 = arith.constant 0 : index
    %0 = vector.load %arg2[%c0, %c0_0, %c0_1, %c0_2, %c0_3] : memref<1x1x10x24x4xbf16, #tpu.memory_space<vmem>>, vector<1x1x10x24x4xbf16>
    %1 = vector.shape_cast %0 : vector<1x1x10x24x4xbf16> to vector<10x24x4xbf16>
    %2 = arith.extf %1 : vector<10x24x4xbf16> to vector<10x24x4xf32>
    %3 = tpu.iota {dimensions = array<i32: 0>} : vector<10x24x4xi32>
    %4 = tpu.iota {dimensions = array<i32: 1>} : vector<10x24x4xi32>
    %c0_i32 = arith.constant 0 : i32
    %5 = arith.cmpi eq, %arg1, %c0_i32 : i32
    %c1_i32 = arith.constant 1 : i32
    %c0_i32_4 = arith.constant 0 : i32
    %6 = arith.select %5, %c1_i32, %c0_i32_4 : i32
    %c1_i32_5 = arith.constant 1 : i32
    %7 = arith.cmpi eq, %arg1, %c1_i32_5 : i32
    %c8_i32 = arith.constant 8 : i32
    %c9_i32 = arith.constant 9 : i32
    %8 = arith.select %7, %c8_i32, %c9_i32 : i32
    %9 = vector.broadcast %6 : i32 to vector<10x24x4xi32>
    %10 = arith.cmpi sge, %3, %9 : vector<10x24x4xi32>
    %11 = vector.broadcast %8 : i32 to vector<10x24x4xi32>
    %12 = arith.cmpi sle, %3, %11 : vector<10x24x4xi32>
    %13 = arith.andi %10, %12 : vector<10x24x4xi1>
    %c1_i32_6 = arith.constant 1 : i32
    %14 = vector.broadcast %c1_i32_6 : i32 to vector<10x24x4xi32>
    %15 = arith.cmpi sge, %4, %14 : vector<10x24x4xi32>
    %16 = arith.andi %13, %15 : vector<10x24x4xi1>
    %c16_i32 = arith.constant 16 : i32
    %17 = vector.broadcast %c16_i32 : i32 to vector<10x24x4xi32>
    %18 = arith.cmpi sle, %4, %17 : vector<10x24x4xi32>
    %19 = arith.andi %16, %18 : vector<10x24x4xi1>
    %c0_7 = arith.constant 0 : index
    %c0_8 = arith.constant 0 : index
    %20 = vector.load %arg3[%c0_7, %c0_8] : memref<1x4xf32, #tpu.memory_space<vmem>>, vector<1x4xf32>
    %21 = vector.shape_cast %20 : vector<1x4xf32> to vector<1x1x4xf32>
    %22 = vector.broadcast %21 : vector<1x1x4xf32> to vector<10x24x4xf32>
    %23 = arith.mulf %2, %22 : vector<10x24x4xf32>
    %c0_9 = arith.constant 0 : index
    %c0_10 = arith.constant 0 : index
    %24 = vector.load %arg4[%c0_9, %c0_10] : memref<1x4xf32, #tpu.memory_space<vmem>>, vector<1x4xf32>
    %25 = vector.shape_cast %24 : vector<1x4xf32> to vector<1x1x4xf32>
    %26 = vector.broadcast %25 : vector<1x1x4xf32> to vector<10x24x4xf32>
    %27 = arith.addf %23, %26 : vector<10x24x4xf32>
    %cst = arith.constant 0.000000e+00 : f32
    %28 = vector.broadcast %cst : f32 to vector<10x24x4xf32>
    %29 = arith.select %19, %27, %28 : vector<10x24x4xi1>, vector<10x24x4xf32>
    %30 = vector.shape_cast %29 : vector<10x24x4xf32> to vector<240x4xf32>
    %cst_11 = arith.constant 0.000000e+00 : f32
    %31 = vector.broadcast %cst_11 : f32 to vector<192x4xf32>
    %32 = vector.extract_strided_slice %30 {offsets = [0, 0], sizes = [192, 4], strides = [1, 1]} : vector<240x4xf32> to vector<192x4xf32>
    %33 = arith.truncf %32 : vector<192x4xf32> to vector<192x4xbf16>
    %c0_12 = arith.constant 0 : index
    %c0_13 = arith.constant 0 : index
    %c0_14 = arith.constant 0 : index
    %34 = vector.load %arg5[%c0_12, %c0_13, %c0_14] : memref<9x4x4xbf16, #tpu.memory_space<vmem>>, vector<1x4x4xbf16>
    %35 = vector.shape_cast %34 : vector<1x4x4xbf16> to vector<4x4xbf16>
    %cst_15 = arith.constant dense<0.000000e+00> : vector<192x4xf32>
    %36 = tpu.matmul %33, %35, %cst_15 {dimension_numbers = #tpu.dot_dimension_numbers<[1], [0], [0], [1], [0, 0, 1, 1], [], []>} : vector<192x4xbf16>, vector<4x4xbf16>, vector<192x4xf32> -> vector<192x4xf32>
    %37 = arith.addf %31, %36 : vector<192x4xf32>
    %c239_i32 = arith.constant 239 : i32
    %38 = tpu.dynamic_rotate %30 by %c239_i32 dim 0 : vector<240x4xf32>, i32 -> vector<240x4xf32>
    %39 = vector.extract_strided_slice %38 {offsets = [0, 0], sizes = [192, 4], strides = [1, 1]} : vector<240x4xf32> to vector<192x4xf32>
    %40 = arith.truncf %39 : vector<192x4xf32> to vector<192x4xbf16>
    %c1 = arith.constant 1 : index
    %c0_16 = arith.constant 0 : index
    %c0_17 = arith.constant 0 : index
    %41 = vector.load %arg5[%c1, %c0_16, %c0_17] : memref<9x4x4xbf16, #tpu.memory_space<vmem>>, vector<1x4x4xbf16>
    %42 = vector.shape_cast %41 : vector<1x4x4xbf16> to vector<4x4xbf16>
    %cst_18 = arith.constant dense<0.000000e+00> : vector<192x4xf32>
    %43 = tpu.matmul %40, %42, %cst_18 {dimension_numbers = #tpu.dot_dimension_numbers<[1], [0], [0], [1], [0, 0, 1, 1], [], []>} : vector<192x4xbf16>, vector<4x4xbf16>, vector<192x4xf32> -> vector<192x4xf32>
    %44 = arith.addf %37, %43 : vector<192x4xf32>
    %c238_i32 = arith.constant 238 : i32
    %45 = tpu.dynamic_rotate %30 by %c238_i32 dim 0 : vector<240x4xf32>, i32 -> vector<240x4xf32>
    %46 = vector.extract_strided_slice %45 {offsets = [0, 0], sizes = [192, 4], strides = [1, 1]} : vector<240x4xf32> to vector<192x4xf32>
    %47 = arith.truncf %46 : vector<192x4xf32> to vector<192x4xbf16>
    %c2 = arith.constant 2 : index
    %c0_19 = arith.constant 0 : index
    %c0_20 = arith.constant 0 : index
    %48 = vector.load %arg5[%c2, %c0_19, %c0_20] : memref<9x4x4xbf16, #tpu.memory_space<vmem>>, vector<1x4x4xbf16>
    %49 = vector.shape_cast %48 : vector<1x4x4xbf16> to vector<4x4xbf16>
    %cst_21 = arith.constant dense<0.000000e+00> : vector<192x4xf32>
    %50 = tpu.matmul %47, %49, %cst_21 {dimension_numbers = #tpu.dot_dimension_numbers<[1], [0], [0], [1], [0, 0, 1, 1], [], []>} : vector<192x4xbf16>, vector<4x4xbf16>, vector<192x4xf32> -> vector<192x4xf32>
    %51 = arith.addf %44, %50 : vector<192x4xf32>
    %c216_i32 = arith.constant 216 : i32
    %52 = tpu.dynamic_rotate %30 by %c216_i32 dim 0 : vector<240x4xf32>, i32 -> vector<240x4xf32>
    %53 = vector.extract_strided_slice %52 {offsets = [0, 0], sizes = [192, 4], strides = [1, 1]} : vector<240x4xf32> to vector<192x4xf32>
    %54 = arith.truncf %53 : vector<192x4xf32> to vector<192x4xbf16>
    %c3 = arith.constant 3 : index
    %c0_22 = arith.constant 0 : index
    %c0_23 = arith.constant 0 : index
    %55 = vector.load %arg5[%c3, %c0_22, %c0_23] : memref<9x4x4xbf16, #tpu.memory_space<vmem>>, vector<1x4x4xbf16>
    %56 = vector.shape_cast %55 : vector<1x4x4xbf16> to vector<4x4xbf16>
    %cst_24 = arith.constant dense<0.000000e+00> : vector<192x4xf32>
    %57 = tpu.matmul %54, %56, %cst_24 {dimension_numbers = #tpu.dot_dimension_numbers<[1], [0], [0], [1], [0, 0, 1, 1], [], []>} : vector<192x4xbf16>, vector<4x4xbf16>, vector<192x4xf32> -> vector<192x4xf32>
    %58 = arith.addf %51, %57 : vector<192x4xf32>
    %c215_i32 = arith.constant 215 : i32
    %59 = tpu.dynamic_rotate %30 by %c215_i32 dim 0 : vector<240x4xf32>, i32 -> vector<240x4xf32>
    %60 = vector.extract_strided_slice %59 {offsets = [0, 0], sizes = [192, 4], strides = [1, 1]} : vector<240x4xf32> to vector<192x4xf32>
    %61 = arith.truncf %60 : vector<192x4xf32> to vector<192x4xbf16>
    %c4 = arith.constant 4 : index
    %c0_25 = arith.constant 0 : index
    %c0_26 = arith.constant 0 : index
    %62 = vector.load %arg5[%c4, %c0_25, %c0_26] : memref<9x4x4xbf16, #tpu.memory_space<vmem>>, vector<1x4x4xbf16>
    %63 = vector.shape_cast %62 : vector<1x4x4xbf16> to vector<4x4xbf16>
    %cst_27 = arith.constant dense<0.000000e+00> : vector<192x4xf32>
    %64 = tpu.matmul %61, %63, %cst_27 {dimension_numbers = #tpu.dot_dimension_numbers<[1], [0], [0], [1], [0, 0, 1, 1], [], []>} : vector<192x4xbf16>, vector<4x4xbf16>, vector<192x4xf32> -> vector<192x4xf32>
    %65 = arith.addf %58, %64 : vector<192x4xf32>
    %c214_i32 = arith.constant 214 : i32
    %66 = tpu.dynamic_rotate %30 by %c214_i32 dim 0 : vector<240x4xf32>, i32 -> vector<240x4xf32>
    %67 = vector.extract_strided_slice %66 {offsets = [0, 0], sizes = [192, 4], strides = [1, 1]} : vector<240x4xf32> to vector<192x4xf32>
    %68 = arith.truncf %67 : vector<192x4xf32> to vector<192x4xbf16>
    %c5 = arith.constant 5 : index
    %c0_28 = arith.constant 0 : index
    %c0_29 = arith.constant 0 : index
    %69 = vector.load %arg5[%c5, %c0_28, %c0_29] : memref<9x4x4xbf16, #tpu.memory_space<vmem>>, vector<1x4x4xbf16>
    %70 = vector.shape_cast %69 : vector<1x4x4xbf16> to vector<4x4xbf16>
    %cst_30 = arith.constant dense<0.000000e+00> : vector<192x4xf32>
    %71 = tpu.matmul %68, %70, %cst_30 {dimension_numbers = #tpu.dot_dimension_numbers<[1], [0], [0], [1], [0, 0, 1, 1], [], []>} : vector<192x4xbf16>, vector<4x4xbf16>, vector<192x4xf32> -> vector<192x4xf32>
    %72 = arith.addf %65, %71 : vector<192x4xf32>
    %c192_i32 = arith.constant 192 : i32
    %73 = tpu.dynamic_rotate %30 by %c192_i32 dim 0 : vector<240x4xf32>, i32 -> vector<240x4xf32>
    %74 = vector.extract_strided_slice %73 {offsets = [0, 0], sizes = [192, 4], strides = [1, 1]} : vector<240x4xf32> to vector<192x4xf32>
    %75 = arith.truncf %74 : vector<192x4xf32> to vector<192x4xbf16>
    %c6 = arith.constant 6 : index
    %c0_31 = arith.constant 0 : index
    %c0_32 = arith.constant 0 : index
    %76 = vector.load %arg5[%c6, %c0_31, %c0_32] : memref<9x4x4xbf16, #tpu.memory_space<vmem>>, vector<1x4x4xbf16>
    %77 = vector.shape_cast %76 : vector<1x4x4xbf16> to vector<4x4xbf16>
    %cst_33 = arith.constant dense<0.000000e+00> : vector<192x4xf32>
    %78 = tpu.matmul %75, %77, %cst_33 {dimension_numbers = #tpu.dot_dimension_numbers<[1], [0], [0], [1], [0, 0, 1, 1], [], []>} : vector<192x4xbf16>, vector<4x4xbf16>, vector<192x4xf32> -> vector<192x4xf32>
    %79 = arith.addf %72, %78 : vector<192x4xf32>
    %c191_i32 = arith.constant 191 : i32
    %80 = tpu.dynamic_rotate %30 by %c191_i32 dim 0 : vector<240x4xf32>, i32 -> vector<240x4xf32>
    %81 = vector.extract_strided_slice %80 {offsets = [0, 0], sizes = [192, 4], strides = [1, 1]} : vector<240x4xf32> to vector<192x4xf32>
    %82 = arith.truncf %81 : vector<192x4xf32> to vector<192x4xbf16>
    %c7 = arith.constant 7 : index
    %c0_34 = arith.constant 0 : index
    %c0_35 = arith.constant 0 : index
    %83 = vector.load %arg5[%c7, %c0_34, %c0_35] : memref<9x4x4xbf16, #tpu.memory_space<vmem>>, vector<1x4x4xbf16>
    %84 = vector.shape_cast %83 : vector<1x4x4xbf16> to vector<4x4xbf16>
    %cst_36 = arith.constant dense<0.000000e+00> : vector<192x4xf32>
    %85 = tpu.matmul %82, %84, %cst_36 {dimension_numbers = #tpu.dot_dimension_numbers<[1], [0], [0], [1], [0, 0, 1, 1], [], []>} : vector<192x4xbf16>, vector<4x4xbf16>, vector<192x4xf32> -> vector<192x4xf32>
    %86 = arith.addf %79, %85 : vector<192x4xf32>
    %c190_i32 = arith.constant 190 : i32
    %87 = tpu.dynamic_rotate %30 by %c190_i32 dim 0 : vector<240x4xf32>, i32 -> vector<240x4xf32>
    %88 = vector.extract_strided_slice %87 {offsets = [0, 0], sizes = [192, 4], strides = [1, 1]} : vector<240x4xf32> to vector<192x4xf32>
    %89 = arith.truncf %88 : vector<192x4xf32> to vector<192x4xbf16>
    %c8 = arith.constant 8 : index
    %c0_37 = arith.constant 0 : index
    %c0_38 = arith.constant 0 : index
    %90 = vector.load %arg5[%c8, %c0_37, %c0_38] : memref<9x4x4xbf16, #tpu.memory_space<vmem>>, vector<1x4x4xbf16>
    %91 = vector.shape_cast %90 : vector<1x4x4xbf16> to vector<4x4xbf16>
    %cst_39 = arith.constant dense<0.000000e+00> : vector<192x4xf32>
    %92 = tpu.matmul %89, %91, %cst_39 {dimension_numbers = #tpu.dot_dimension_numbers<[1], [0], [0], [1], [0, 0, 1, 1], [], []>} : vector<192x4xbf16>, vector<4x4xbf16>, vector<192x4xf32> -> vector<192x4xf32>
    %93 = arith.addf %86, %92 : vector<192x4xf32>
    %cst_40 = arith.constant 0.000000e+00 : f32
    %94 = vector.broadcast %cst_40 : f32 to vector<192x4xf32>
    %95 = arith.maximumf %93, %94 : vector<192x4xf32>
    %96 = vector.shape_cast %95 : vector<192x4xf32> to vector<8x24x4xf32>
    %97 = vector.extract_strided_slice %96 {offsets = [0, 0, 0], sizes = [8, 16, 4], strides = [1, 1, 1]} : vector<8x24x4xf32> to vector<8x16x4xf32>
    %c0_41 = arith.constant 0 : index
    %c0_42 = arith.constant 0 : index
    %c0_43 = arith.constant 0 : index
    %c0_44 = arith.constant 0 : index
    %98 = vector.load %arg6[%c0_41, %c0_42, %c0_43, %c0_44] : memref<1x8x16x4xf32, #tpu.memory_space<vmem>>, vector<1x8x16x4xf32>
    %99 = vector.shape_cast %98 : vector<1x8x16x4xf32> to vector<8x16x4xf32>
    %100 = vector.shape_cast %97 : vector<8x16x4xf32> to vector<1x8x16x4xf32>
    tpu.vector_store %arg6[%c0_41, %c0_42, %c0_43, %c0_44], %100 {strides = array<i32>} : memref<1x8x16x4xf32, #tpu.memory_space<vmem>>, vector<1x8x16x4xf32>,
    return
  }
  func.func @transform_0(%arg0: i32, %arg1: i32) -> (i32, i32, i32, i32, i32) {
    %c0_i32 = arith.constant 0 : i32
    %c0_i32_0 = arith.constant 0 : i32
    %c0_i32_1 = arith.constant 0 : i32
    %c0_i32_2 = arith.constant 0 : i32
    return %arg0, %arg1, %c0_i32, %c0_i32_0, %c0_i32_1 : i32, i32, i32, i32, i32
  }
  func.func @transform_1(%arg0: i32, %arg1: i32) -> (i32, i32) {
    %c0_i32 = arith.constant 0 : i32
    %c0_i32_0 = arith.constant 0 : i32
    %c0_i32_1 = arith.constant 0 : i32
    return %c0_i32, %c0_i32_0 : i32, i32
  }
  func.func @transform_2(%arg0: i32, %arg1: i32) -> (i32, i32) {
    %c0_i32 = arith.constant 0 : i32
    %c0_i32_0 = arith.constant 0 : i32
    %c0_i32_1 = arith.constant 0 : i32
    return %c0_i32, %c0_i32_0 : i32, i32
  }
  func.func @transform_3(%arg0: i32, %arg1: i32) -> (i32, i32, i32) {
    %c0_i32 = arith.constant 0 : i32
    %c0_i32_0 = arith.constant 0 : i32
    %c0_i32_1 = arith.constant 0 : i32
    %c0_i32_2 = arith.constant 0 : i32
    return %c0_i32, %c0_i32_0, %c0_i32_1 : i32, i32, i32
  }
  func.func @transform_4(%arg0: i32, %arg1: i32) -> (i32, i32, i32, i32) {
    %c0_i32 = arith.constant 0 : i32
    %c0_i32_0 = arith.constant 0 : i32
    %c0_i32_1 = arith.constant 0 : i32
    return %arg0, %arg1, %c0_i32, %c0_i32_0 : i32, i32, i32, i32
  }
}

</mosaic_0001>

<llo_original>
// kernel: up_forward.2
$region0: #{up_forward.2}
  #allocation0 [shape = 'u32[]', space=smem, size = 0x4, offset = 0x4, fixed_abs, tag = 'smem constant byte address 0x4 - core index']
  #allocation1 [shape = 'u32[144,128]{1,0:T(1,128)}', space=vmem, size = 0x12000, scoped, tag = 'internal scratch']
  %s0 = inlined_call_operand.vmem [shape: bf16[2,2,10,24,8], index: 0, kind: input, shape index: {}]
  %s1 = inlined_call_operand.vmem [shape: bf16[9,8,4], index: 1, kind: input, shape index: {}]
  %s2 = inlined_call_operand.vmem [shape: bf16[2,16,16,4], index: 2, kind: output, shape index: {0}]
  %s3 = inlined_call_operand.vmem [shape: f32[2,2,2,4], index: 3, kind: output, shape index: {1}]
  %4 = xla_tuple %s2, %s3
  %s5 = sld [smem:[#allocation0]]
  $region49: #{up_forward.2} parent=0
    _
  %s7 = ssub.s32 1, %s5
  %s8 = scalar_select 0, %s7, %s5
  loop: start=0, step=1, limit=6
  $region2: #{up_forward.2} parent=0 // loop_pre_header
    _
  $region3: #{up_forward.2} parent=0 // loop_header
    %s10 = sphi 0, %s14
    %p11 = scmp.ge.s32.totalorder %s10, 6
    %s17 = sphi 0, %s29
    %s18 = sphi 0, %s25
    %s19 = sphi 0, %s17
    %s20 = sphi 0, %s18
    %s21 = sphi 0, %s19
    %s22 = sphi 0, %s20
    %s34 = sphi 0, %s36
    %s37 = sphi 0, %s34
    %s38 = sphi 0, %s37
    %s54 = sphi 0, %s38
    %s58 = sphi 0, %s58
    %s60 = sphi 0, %s58
    %s61 = sphi 0, %s60
    %s75 = sphi 0, %s61
    %s83 = sphi 0, %s85
    %s86 = sphi 0, %s83
    %s87 = sphi 0, %s86
    %s103 = sphi 0, %s87
    %s111 = sphi 0, %s113
    %s114 = sphi 0, %s111
    %s115 = sphi 0, %s114
    %s131 = sphi 0, %s115
  $region4: #{up_forward.2} parent=0 // loop_header_branch
    %13 = sbr.rel (%p11) target = $region8
  $region5: #{up_forward.2} parent=0 // loop_body
    %s15 = ssub.s32 %s10, 1
    %s16 = ssub.s32 %s10, 2
    %s23 = sadd.s32 1, %s18
    %p24 = scmp.ge.s32.totalorder %s23, 2
    %s25 = scalar_select %p24, 0, %s23
    %s26 = sadd.s32 1, %s17
    %s27 = scalar_select %p24, %s26, %s17
    %p28 = scmp.ge.s32.totalorder %s27, 2
    %s29 = scalar_select %p28, 0, %s27
    %s30 = ssub.s32 %s17, %s29
    %s31 = ssub.s32 %s18, %s25
    %s32 = sor.u32 %s30, %s31
    %p33 = scmp.eq.s32.totalorder %s32, 0
    %s35 = sadd.s32 %s34, 1
    %s36 = scalar_select %p33, %s34, %s35
    %p39 = pneg %p33
    %p40 = scmp.eq.s32.totalorder %s10, 3
    %p41 = por %p39, %p40
    %p42 = scmp.ne.s32.totalorder %s34, %s37
    %p43 = scmp.eq.s32.totalorder %s10, 0
    %p44 = por %p42, %p43
    %p45 = scmp.ne.s32.totalorder %s34, %s37
    %p46 = scmp.eq.s32.totalorder %s15, 3
    %p47 = por %p45, %p46
    %p48 = scmp.ne.s32.totalorder %s37, %s38
    %p49 = scmp.eq.s32.totalorder %s15, 0
    %p50 = por %p48, %p49
    %p51 = scmp.ne.s32.totalorder %s37, %s38
    %p52 = scmp.eq.s32.totalorder %s16, 3
    %p53 = por %p51, %p52
    %p55 = scmp.ne.s32.totalorder %s38, %s54
    %p56 = scmp.eq.s32.totalorder %s16, 0
    %p57 = por %p55, %p56
    %s59 = sadd.s32 %s58, 1
    %p62 = scmp.eq.s32.totalorder %s10, 3
    %p63 = scmp.ne.s32.totalorder %s58, %s60
    %p64 = scmp.eq.s32.totalorder %s10, 0
    %p65 = por %p63, %p64
    %p66 = scmp.ne.s32.totalorder %s58, %s60
    %p67 = scmp.eq.s32.totalorder %s15, 3
    %p68 = por %p66, %p67
    %p69 = scmp.ne.s32.totalorder %s60, %s61
    %p70 = scmp.eq.s32.totalorder %s15, 0
    %p71 = por %p69, %p70
    %p72 = scmp.ne.s32.totalorder %s60, %s61
    %p73 = scmp.eq.s32.totalorder %s16, 3
    %p74 = por %p72, %p73
    %p76 = scmp.ne.s32.totalorder %s61, %s75
    %p77 = scmp.eq.s32.totalorder %s16, 0
    %p78 = por %p76, %p77
    %s79 = ssub.s32 %s17, %s29
    %s80 = ssub.s32 %s18, %s25
    %s81 = sor.u32 %s79, %s80
    %p82 = scmp.eq.s32.totalorder %s81, 0
    %s84 = sadd.s32 %s83, 1
    %s85 = scalar_select %p82, %s83, %s84
    %p88 = pneg %p82
    %p89 = scmp.eq.s32.totalorder %s10, 3
    %p90 = por %p88, %p89
    %p91 = scmp.ne.s32.totalorder %s83, %s86
    %p92 = scmp.eq.s32.totalorder %s10, 0
    %p93 = por %p91, %p92
    %p94 = scmp.ne.s32.totalorder %s83, %s86
    %p95 = scmp.eq.s32.totalorder %s15, 3
    %p96 = por %p94, %p95
    %p97 = scmp.ne.s32.totalorder %s86, %s87
    %p98 = scmp.eq.s32.totalorder %s15, 0
    %p99 = por %p97, %p98
    %p100 = scmp.ne.s32.totalorder %s86, %s87
    %p101 = scmp.eq.s32.totalorder %s16, 3
    %p102 = por %p100, %p101
    %p104 = scmp.ne.s32.totalorder %s87, %s103
    %p105 = scmp.eq.s32.totalorder %s16, 0
    %p106 = por %p104, %p105
    %s107 = ssub.s32 %s17, %s29
    %s108 = ssub.s32 %s18, %s25
    %s109 = sor.u32 %s107, %s108
    %p110 = scmp.eq.s32.totalorder %s109, 0
    %s112 = sadd.s32 %s111, 1
    %s113 = scalar_select %p110, %s111, %s112
    %p116 = pneg %p110
    %p117 = scmp.eq.s32.totalorder %s10, 3
    %p118 = por %p116, %p117
    %p119 = scmp.ne.s32.totalorder %s111, %s114
    %p120 = scmp.eq.s32.totalorder %s10, 0
    %p121 = por %p119, %p120
    %p122 = scmp.ne.s32.totalorder %s111, %s114
    %p123 = scmp.eq.s32.totalorder %s15, 3
    %p124 = por %p122, %p123
    %p125 = scmp.ne.s32.totalorder %s114, %s115
    %p126 = scmp.eq.s32.totalorder %s15, 0
    %p127 = por %p125, %p126
    %p128 = scmp.ne.s32.totalorder %s114, %s115
    %p129 = scmp.eq.s32.totalorder %s16, 3
    %p130 = por %p128, %p129
    %p132 = scmp.ne.s32.totalorder %s115, %s131
    %p133 = scmp.eq.s32.totalorder %s16, 0
    %p134 = por %p132, %p133
    %p135 = scmp.le.s32.totalorder 1, %s10
    %p136 = scmp.lt.s32.totalorder %s10, 5
    %p137 = pnand %p135, %p136
    %p138 = pneg %p137
    // Predicated region
    $region9: #{up_forward.2} parent=5 // pred_check
      _
    $region10: #{up_forward.2} parent=5 // pred_check_branch
      %140 = sbr.rel (%p137) target = $region12
    $region11: #{up_forward.2} parent=5 // pred_region
      %s141 = ssub.s32 %s10, 1
      // Predicated region
      $region13: #{up_forward.2} parent=11 // pred_check
        %p142 = pneg %p71
      $region14: #{up_forward.2} parent=11 // pred_check_branch
        %144 = sbr.rel (%p142) target = $region16
      $region15: #{up_forward.2} parent=11 // pred_region
        _
      $region16: #{up_forward.2} parent=11 // pred_fallthru
        _
    $region12: #{up_forward.2} parent=5 // pred_fallthru
      _
    %p145 = scmp.lt.s32.totalorder %s10, 4
    // Predicated region
    $region17: #{up_forward.2} parent=5 // pred_check
      %p146 = pneg %p145
    $region18: #{up_forward.2} parent=5 // pred_check_branch
      %148 = sbr.rel (%p146) target = $region20
    $region19: #{up_forward.2} parent=5 // pred_region
      // Predicated region
      $region21: #{up_forward.2} parent=19 // pred_check
        %p149 = pneg %p44
      $region22: #{up_forward.2} parent=19 // pred_check_branch
        %151 = sbr.rel (%p149) target = $region24
      $region23: #{up_forward.2} parent=19 // pred_region
        %p152 = scmp.lt.s32.totalorder %s17, 1
        %s153 = scalar_select %p152, %s17, 1
        %p154 = scmp.lt.s32.totalorder %s18, 1
        %s155 = scalar_select %p154, %s18, 1
        %s156 = smul.addr %s155, 30
        %s157 = smul.addr %s153, 60
        %s158 = sadd.s32 %s156, %s157
        %s159 = smul.addr %s158, 4
        %s160 = scalar_lea.vmem %s0, %s159
      $region24: #{up_forward.2} parent=19 // pred_fallthru
        _
    $region20: #{up_forward.2} parent=5 // pred_fallthru
      _
    %p161 = scmp.le.s32.totalorder 1, %s10
    %p162 = scmp.lt.s32.totalorder %s10, 5
    %p163 = pnand %p161, %p162
    %p164 = pneg %p163
    // Predicated region
    $region25: #{up_forward.2} parent=5 // pred_check
      _
    $region26: #{up_forward.2} parent=5 // pred_check_branch
      %166 = sbr.rel (%p163) target = $region28
    $region27: #{up_forward.2} parent=5 // pred_region
      %s167 = ssub.s32 %s10, 1
      %p168 = scmp.lt.s32.totalorder %s19, 1
      %s169 = scalar_select %p168, %s19, 1
      %p170 = scmp.lt.s32.totalorder %s20, 1
      %s171 = scalar_select %p170, %s20, 1
      %s172 = smul.addr %s171, 30
      %s173 = smul.addr %s169, 60
      %s174 = sadd.s32 %s172, %s173
      %s175 = smul.addr %s174, 4
      %s176 = scalar_lea.vmem %s0, %s175
      %p177 = pneg %p50
      %p178 = pneg %p47
      %p179 = pneg %p71
      %p180 = pneg %p68
      %p181 = pneg %p99
      %p182 = pneg %p96
      %s183 = smul.u32 8, %s20
      %p184 = scmp.lt.s32.totalorder %s19, 1
      %s185 = scalar_select %p184, %s19, 1
      %p186 = scmp.lt.s32.totalorder %s183, 15
      %s187 = scalar_select %p186, %s183, 15
      %s188 = smul.addr %s187, 2
      %s189 = smul.addr %s185, 32
      %s190 = sadd.s32 %s188, %s189
      %s191 = smul.addr %s190, 4
      %s192 = scalar_lea.vmem %s2, %s191
      %p193 = pneg %p127
      %p194 = pneg %p124
      %p195 = scmp.lt.s32.totalorder %s19, 1
      %s196 = scalar_select %p195, %s19, 1
      %p197 = scmp.lt.s32.totalorder %s20, 1
      %s198 = scalar_select %p197, %s20, 1
      %s199 = smul.addr %s196, 2
      %s200 = sadd.s32 %s198, %s199
      %s201 = smul.addr %s200, 2
      %s202 = scalar_lea.vmem %s3, %s201
      %p203 = scmp.lt.s32.totalorder %s19, 1
      %s204 = scalar_select %p203, %s19, 1
      %p205 = scmp.lt.s32.totalorder %s20, 1
      %s206 = scalar_select %p205, %s20, 1
      %s207 = smul.addr %s206, 30
      %s208 = smul.addr %s204, 60
      %s209 = sadd.s32 %s207, %s208
      %s210 = smul.addr %s209, 4
      %s211 = scalar_lea.vmem %s0, %s210
      %s212 = smul.u32 8, %s20
      %p213 = scmp.lt.s32.totalorder %s19, 1
      %s214 = scalar_select %p213, %s19, 1
      %p215 = scmp.lt.s32.totalorder %s212, 15
      %s216 = scalar_select %p215, %s212, 15
      %s217 = smul.addr %s216, 2
      %s218 = smul.addr %s214, 32
      %s219 = sadd.s32 %s217, %s218
      %s220 = smul.addr %s219, 4
      %s221 = scalar_lea.vmem %s2, %s220
      %s222 = smul.u32 8, %s20
      %p223 = scmp.lt.s32.totalorder %s19, 1
      %s224 = scalar_select %p223, %s19, 1
      %p225 = scmp.lt.s32.totalorder %s20, 1
      %s226 = scalar_select %p225, %s20, 1
      %s227 = smul.addr %s224, 2
      %s228 = sadd.s32 %s226, %s227
      %s229 = smul.addr %s228, 2
      %s230 = scalar_lea.vmem %s3, %s229
      %v232 = vld [vmem:[%s211] sm:$0xf]
      %v233 = vld [vmem:[%s211 + $0x4] sm:$0xf]
      %v234 = vld [vmem:[%s211 + $0x8] sm:$0xf]
      %v235 = vld [vmem:[%s211 + $0xc] sm:$0xf]
      %v236 = vld [vmem:[%s211 + $0x10] sm:$0xf]
      %v237 = vld [vmem:[%s211 + $0x14] sm:$0xf]
      %v238 = vld [vmem:[%s211 + $0x18] sm:$0xf]
      %v239 = vld [vmem:[%s211 + $0x1c] sm:$0xf]
      %v240 = vld [vmem:[%s211 + $0x20] sm:$0xf]
      %v241 = vld [vmem:[%s211 + $0x24] sm:$0xf]
      %v242 = vld [vmem:[%s211 + $0x28] sm:$0xf]
      %v243 = vld [vmem:[%s211 + $0x2c] sm:$0xf]
      %v244 = vld [vmem:[%s211 + $0x30] sm:$0xf]
      %v245 = vld [vmem:[%s211 + $0x34] sm:$0xf]
      %v246 = vld [vmem:[%s211 + $0x38] sm:$0xf]
      %v247 = vld [vmem:[%s211 + $0x3c] sm:$0xf]
      %v248 = vld [vmem:[%s211 + $0x40] sm:$0xf]
      %v249 = vld [vmem:[%s211 + $0x44] sm:$0xf]
      %v250 = vld [vmem:[%s211 + $0x48] sm:$0xf]
      %v251 = vld [vmem:[%s211 + $0x4c] sm:$0xf]
      %v252 = vld [vmem:[%s211 + $0x50] sm:$0xf]
      %v253 = vld [vmem:[%s211 + $0x54] sm:$0xf]
      %v254 = vld [vmem:[%s211 + $0x58] sm:$0xf]
      %v255 = vld [vmem:[%s211 + $0x5c] sm:$0xf]
      %v256 = vld [vmem:[%s211 + $0x60] sm:$0xf]
      %v257 = vld [vmem:[%s211 + $0x64] sm:$0xf]
      %v258 = vld [vmem:[%s211 + $0x68] sm:$0xf]
      %v259 = vld [vmem:[%s211 + $0x6c] sm:$0xf]
      %v260 = vld [vmem:[%s211 + $0x70] sm:$0xf]
      %v261 = vld [vmem:[%s211 + $0x74] sm:$0xf]
      %v262 = vunpack.c.l.bf16 %v232
      %v263 = vunpack.c.l.bf16 %v233
      %v264 = vunpack.c.l.bf16 %v234
      %v265 = vunpack.c.l.bf16 %v235
      %v266 = vunpack.c.l.bf16 %v236
      %v267 = vunpack.c.l.bf16 %v237
      %v268 = vunpack.c.l.bf16 %v238
      %v269 = vunpack.c.l.bf16 %v239
      %v270 = vunpack.c.l.bf16 %v240
      %v271 = vunpack.c.l.bf16 %v241
      %v272 = vunpack.c.l.bf16 %v242
      %v273 = vunpack.c.l.bf16 %v243
      %v274 = vunpack.c.l.bf16 %v244
      %v275 = vunpack.c.l.bf16 %v245
      %v276 = vunpack.c.l.bf16 %v246
      %v277 = vunpack.c.l.bf16 %v247
      %v278 = vunpack.c.l.bf16 %v248
      %v279 = vunpack.c.l.bf16 %v249
      %v280 = vunpack.c.l.bf16 %v250
      %v281 = vunpack.c.l.bf16 %v251
      %v282 = vunpack.c.l.bf16 %v252
      %v283 = vunpack.c.l.bf16 %v253
      %v284 = vunpack.c.l.bf16 %v254
      %v285 = vunpack.c.l.bf16 %v255
      %v286 = vunpack.c.l.bf16 %v256
      %v287 = vunpack.c.l.bf16 %v257
      %v288 = vunpack.c.l.bf16 %v258
      %v289 = vunpack.c.l.bf16 %v259
      %v290 = vunpack.c.l.bf16 %v260
      %v291 = vunpack.c.l.bf16 %v261
      %v292 = vpack.c.bf16 %v263, %v262
      %v293 = vpack.c.bf16 %v265, %v264
      %v294 = vpack.c.bf16 %v267, %v266
      %v295 = vpack.c.bf16 %v269, %v268
      %v296 = vpack.c.bf16 %v271, %v270
      %v297 = vpack.c.bf16 %v273, %v272
      %v298 = vpack.c.bf16 %v275, %v274
      %v299 = vpack.c.bf16 %v277, %v276
      %v300 = vpack.c.bf16 %v279, %v278
      %v301 = vpack.c.bf16 %v281, %v280
      %v302 = vpack.c.bf16 %v283, %v282
      %v303 = vpack.c.bf16 %v285, %v284
      %v304 = vld [vmem:[%s1] sm:$0xf]
      %v305 = vrot.slane %v262, 1
      %v306 = vrot.slane %v263, 1
      %v307 = vrot.slane %v264, 1
      %v308 = vrot.slane %v265, 1
      %v309 = vrot.slane %v266, 1
      %v310 = vrot.slane %v267, 1
      %v311 = vrot.slane %v268, 1
      %v312 = vrot.slane %v269, 1
      %v313 = vrot.slane %v270, 1
      %v314 = vrot.slane %v271, 1
      %v315 = vrot.slane %v272, 1
      %v316 = vrot.slane %v273, 1
      %v317 = vrot.slane %v274, 1
      %v318 = vrot.slane %v275, 1
      %v319 = vrot.slane %v276, 1
      %v320 = vrot.slane %v277, 1
      %v321 = vrot.slane %v278, 1
      %v322 = vrot.slane %v279, 1
      %v323 = vrot.slane %v280, 1
      %v324 = vrot.slane %v281, 1
      %v325 = vrot.slane %v282, 1
      %v326 = vrot.slane %v283, 1
      %v327 = vrot.slane %v284, 1
      %v328 = vrot.slane %v285, 1
      %v329 = vrot.slane %v286, 1
      %v330 = vlaneseq
      %v331 = vshrl.u32 %v330, 7
      %vm332 = vcmp.lt.s32.totalorder %v331, 7
      %v333 = vsel %vm332, %v328, %v329
      %v334 = vsel %vm332, %v327, %v328
      %v335 = vsel %vm332, %v326, %v327
      %v336 = vsel %vm332, %v325, %v326
      %v337 = vsel %vm332, %v324, %v325
      %v338 = vsel %vm332, %v323, %v324
      %v339 = vsel %vm332, %v322, %v323
      %v340 = vsel %vm332, %v321, %v322
      %v341 = vsel %vm332, %v320, %v321
      %v342 = vsel %vm332, %v319, %v320
      %v343 = vsel %vm332, %v318, %v319
      %v344 = vsel %vm332, %v317, %v318
      %v345 = vsel %vm332, %v316, %v317
      %v346 = vsel %vm332, %v315, %v316
      %v347 = vsel %vm332, %v314, %v315
      %v348 = vsel %vm332, %v313, %v314
      %v349 = vsel %vm332, %v312, %v313
      %v350 = vsel %vm332, %v311, %v312
      %v351 = vsel %vm332, %v310, %v311
      %v352 = vsel %vm332, %v309, %v310
      %v353 = vsel %vm332, %v308, %v309
      %v354 = vsel %vm332, %v307, %v308
      %v355 = vsel %vm332, %v306, %v307
      %v356 = vsel %vm332, %v305, %v306
      %v357 = vpack.c.bf16 %v355, %v356
      %v358 = vpack.c.bf16 %v353, %v354
      %v359 = vpack.c.bf16 %v351, %v352
      %v360 = vpack.c.bf16 %v349, %v350
      %v361 = vpack.c.bf16 %v347, %v348
      %v362 = vpack.c.bf16 %v345, %v346
      %v363 = vpack.c.bf16 %v343, %v344
      %v364 = vpack.c.bf16 %v341, %v342
      %v365 = vpack.c.bf16 %v339, %v340
      %v366 = vpack.c.bf16 %v337, %v338
      %v367 = vpack.c.bf16 %v335, %v336
      %v368 = vpack.c.bf16 %v333, %v334
      %s369 = scalar_lea.vmem %s1, 4
      %v370 = vld [vmem:[%s369] sm:$0xf]
      %vm371 = vcmask 64512
      %v373 = vsel %vm371, %v357, 0
      %v376 = vsel %vm371, %v358, 0
      %v379 = vsel %vm371, %v359, 0
      %v382 = vsel %vm371, %v360, 0
      %v385 = vsel %vm371, %v361, 0
      %v388 = vsel %vm371, %v362, 0
      %v391 = vsel %vm371, %v363, 0
      %v394 = vsel %vm371, %v364, 0
      %v397 = vsel %vm371, %v365, 0
      %v400 = vsel %vm371, %v366, 0
      %v403 = vsel %vm371, %v367, 0
      %v406 = vsel %vm371, %v368, 0
      %vm408 = vcmask 1043456
      %v410 = vsel %vm408, %v370, 0
      %412 = vmatprep.subr.bf16.mxu0 0
      %413 = vmatpush1.bf16.msra.mxu0 %v410
      %414 = vmatprep.subr.bf16.mxu0 0
      %415 = vmatpush1.bf16.msra.mxu0 0
      %416 = vmatprep.subr.bf16.mxu0 0
      %417 = vmatpush1.bf16.msra.mxu0 0
      %418 = vmatprep.subr.bf16.mxu0 0
      %419 = vmatpush1.bf16.msra.mxu0 0
      %420 = vmatprep.subr.bf16.mxu0 0
      %421 = vmatpush1.bf16.msra.mxu0 0
      %422 = vmatprep.subr.bf16.mxu0 0
      %423 = vmatpush1.bf16.msra.mxu0 0
      %424 = vmatprep.subr.bf16.mxu0 0
      %425 = vmatpush1.bf16.msra.mxu0 0
      %426 = vmatprep.subr.bf16.mxu0 0
      %427 = vmatpush1.bf16.msra.mxu0 0
      %428 = vmatprep.subr.bf16.mxu0 0
      %429 = vmatpush1.bf16.msra.mxu0 0
      %430 = vmatprep.subr.bf16.mxu0 0
      %431 = vmatpush1.bf16.msra.mxu0 0
      %432 = vmatprep.subr.bf16.mxu0 0
      %433 = vmatpush1.bf16.msra.mxu0 0
      %434 = vmatprep.subr.bf16.mxu0 0
      %435 = vmatpush1.bf16.msra.mxu0 0
      %436 = vmatprep.subr.bf16.mxu0 0
      %437 = vmatpush1.bf16.msra.mxu0 0
      %438 = vmatprep.subr.bf16.mxu0 0
      %439 = vmatpush1.bf16.msra.mxu0 0
      %440 = vmatprep.subr.bf16.mxu0 0
      %441 = vmatpush1.bf16.msra.mxu0 0
      %442 = vmatprep.subr.bf16.mxu0 0
      %443 = vmatpush1.bf16.msra.mxu0 0
      %444 = vmatprep.mubr.bf16.mxu0 0
      %445 = vmatmul.mubr.bf16.gmra.mrb[0].mxu0 %v373
      %v446 = vpop.f32.mrb[0].mxu0
      %v447 = vadd.f32 0.0, %v446
      %v448 = vpop.f32.mrb[0].mxu0
      %v449 = vpop.f32.mrb[0].mxu0
      %v450 = vadd.f32 0.0, %v449
      %v451 = vpop.f32.mrb[0].mxu0
      %452 = vmatprep.mubr.bf16.mxu0 0
      %453 = vmatmul.mubr.bf16.gmra.mrb[0].mxu0 %v376
      %v454 = vpop.f32.mrb[0].mxu0
      %v455 = vpop.f32.mrb[0].mxu0
      %v456 = vpop.f32.mrb[0].mxu0
      %v457 = vadd.f32 0.0, %v456
      %v458 = vpop.f32.mrb[0].mxu0
      %459 = vmatprep.mubr.bf16.mxu0 0
      %460 = vmatmul.mubr.bf16.gmra.mrb[0].mxu0 %v379
      %v461 = vpop.f32.mrb[0].mxu0
      %v462 = vadd.f32 0.0, %v461
      %v463 = vpop.f32.mrb[0].mxu0
      %v464 = vpop.f32.mrb[0].mxu0
      %v465 = vpop.f32.mrb[0].mxu0
      %466 = vmatprep.mubr.bf16.mxu0 0
      %467 = vmatmul.mubr.bf16.gmra.mrb[0].mxu0 %v382
      %v468 = vpop.f32.mrb[0].mxu0
      %v469 = vadd.f32 0.0, %v468
      %v470 = vpop.f32.mrb[0].mxu0
      %v471 = vpop.f32.mrb[0].mxu0
      %v472 = vadd.f32 0.0, %v471
      %v473 = vpop.f32.mrb[0].mxu0
      %474 = vmatprep.mubr.bf16.mxu0 0
      %475 = vmatmul.mubr.bf16.gmra.mrb[0].mxu0 %v385
      %v476 = vpop.f32.mrb[0].mxu0
      %v477 = vpop.f32.mrb[0].mxu0
      %v478 = vpop.f32.mrb[0].mxu0
      %v479 = vadd.f32 0.0, %v478
      %v480 = vpop.f32.mrb[0].mxu0
      %481 = vmatprep.mubr.bf16.mxu0 0
      %482 = vmatmul.mubr.bf16.gmra.mrb[0].mxu0 %v388
      %v483 = vpop.f32.mrb[0].mxu0
      %v484 = vadd.f32 0.0, %v483
      %v485 = vpop.f32.mrb[0].mxu0
      %v486 = vpop.f32.mrb[0].mxu0
      %v487 = vpop.f32.mrb[0].mxu0
      %488 = vmatprep.mubr.bf16.mxu0 0
      %489 = vmatmul.mubr.bf16.gmra.mrb[0].mxu0 %v391
      %v490 = vpop.f32.mrb[0].mxu0
      %v491 = vadd.f32 0.0, %v490
      %v492 = vpop.f32.mrb[0].mxu0
      %v493 = vpop.f32.mrb[0].mxu0
      %v494 = vadd.f32 0.0, %v493
      %v495 = vpop.f32.mrb[0].mxu0
      %496 = vmatprep.mubr.bf16.mxu0 0
      %497 = vmatmul.mubr.bf16.gmra.mrb[0].mxu0 %v394
      %v498 = vpop.f32.mrb[0].mxu0
      %v499 = vpop.f32.mrb[0].mxu0
      %v500 = vpop.f32.mrb[0].mxu0
      %v501 = vadd.f32 0.0, %v500
      %v502 = vpop.f32.mrb[0].mxu0
      %503 = vmatprep.mubr.bf16.mxu0 0
      %504 = vmatmul.mubr.bf16.gmra.mrb[0].mxu0 %v397
      %v505 = vpop.f32.mrb[0].mxu0
      %v506 = vadd.f32 0.0, %v505
      %v507 = vpop.f32.mrb[0].mxu0
      %v508 = vpop.f32.mrb[0].mxu0
      %v509 = vpop.f32.mrb[0].mxu0
      %510 = vmatprep.mubr.bf16.mxu0 0
      %511 = vmatmul.mubr.bf16.gmra.mrb[0].mxu0 %v400
      %v512 = vpop.f32.mrb[0].mxu0
      %v513 = vadd.f32 0.0, %v512
      %v514 = vpop.f32.mrb[0].mxu0
      %v515 = vpop.f32.mrb[0].mxu0
      %v516 = vadd.f32 0.0, %v515
      %v517 = vpop.f32.mrb[0].mxu0
      %518 = vmatprep.mubr.bf16.mxu0 0
      %519 = vmatmul.mubr.bf16.gmra.mrb[0].mxu0 %v403
      %v520 = vpop.f32.mrb[0].mxu0
      %v521 = vpop.f32.mrb[0].mxu0
      %v522 = vpop.f32.mrb[0].mxu0
      %v523 = vadd.f32 0.0, %v522
      %v524 = vpop.f32.mrb[0].mxu0
      %525 = vmatprep.mubr.bf16.mxu0 0
      %526 = vmatmul.mubr.bf16.gmra.mrb[0].mxu0 %v406
      %v527 = vpop.f32.mrb[0].mxu0
      %v528 = vadd.f32 0.0, %v527
      %v529 = vpop.f32.mrb[0].mxu0
      %v530 = vpop.f32.mrb[0].mxu0
      %v531 = vpop.f32.mrb[0].mxu0
      %532 = vdwg.mxu0
      %v534 = vsel %vm371, %v292, 0
      %v537 = vsel %vm371, %v293, 0
      %v540 = vsel %vm371, %v294, 0
      %v543 = vsel %vm371, %v295, 0
      %v546 = vsel %vm371, %v296, 0
      %v549 = vsel %vm371, %v297, 0
      %v552 = vsel %vm371, %v298, 0
      %v555 = vsel %vm371, %v299, 0
      %v558 = vsel %vm371, %v300, 0
      %v561 = vsel %vm371, %v301, 0
      %v564 = vsel %vm371, %v302, 0
      %v567 = vsel %vm371, %v303, 0
      %v570 = vsel %vm408, %v304, 0
      %572 = vmatprep.subr.bf16.mxu0 0
      %573 = vmatpush1.bf16.msra.mxu0 %v570
      %574 = vmatprep.subr.bf16.mxu0 0
      %575 = vmatpush1.bf16.msra.mxu0 0
      %576 = vmatprep.subr.bf16.mxu0 0
      %577 = vmatpush1.bf16.msra.mxu0 0
      %578 = vmatprep.subr.bf16.mxu0 0
      %579 = vmatpush1.bf16.msra.mxu0 0
      %580 = vmatprep.subr.bf16.mxu0 0
      %581 = vmatpush1.bf16.msra.mxu0 0
      %582 = vmatprep.subr.bf16.mxu0 0
      %583 = vmatpush1.bf16.msra.mxu0 0
      %584 = vmatprep.subr.bf16.mxu0 0
      %585 = vmatpush1.bf16.msra.mxu0 0
      %586 = vmatprep.subr.bf16.mxu0 0
      %587 = vmatpush1.bf16.msra.mxu0 0
      %588 = vmatprep.subr.bf16.mxu0 0
      %589 = vmatpush1.bf16.msra.mxu0 0
      %590 = vmatprep.subr.bf16.mxu0 0
      %591 = vmatpush1.bf16.msra.mxu0 0
      %592 = vmatprep.subr.bf16.mxu0 0
      %593 = vmatpush1.bf16.msra.mxu0 0
      %594 = vmatprep.subr.bf16.mxu0 0
      %595 = vmatpush1.bf16.msra.mxu0 0
      %596 = vmatprep.subr.bf16.mxu0 0
      %597 = vmatpush1.bf16.msra.mxu0 0
      %598 = vmatprep.subr.bf16.mxu0 0
      %599 = vmatpush1.bf16.msra.mxu0 0
      %600 = vmatprep.subr.bf16.mxu0 0
      %601 = vmatpush1.bf16.msra.mxu0 0
      %602 = vmatprep.subr.bf16.mxu0 0
      %603 = vmatpush1.bf16.msra.mxu0 0
      %604 = vmatprep.mubr.bf16.mxu0 0
      %605 = vmatmul.mubr.bf16.gmra.mrb[0].mxu0 %v534
      %v606 = vpop.f32.mrb[0].mxu0
      %v607 = vadd.f32 %v447, %v606
      %v608 = vpop.f32.mrb[0].mxu0
      %v609 = vpop.f32.mrb[0].mxu0
      %v610 = vadd.f32 %v450, %v609
      %v611 = vpop.f32.mrb[0].mxu0
      %612 = vmatprep.mubr.bf16.mxu0 0
      %613 = vmatmul.mubr.bf16.gmra.mrb[0].mxu0 %v537
      %v614 = vpop.f32.mrb[0].mxu0
      %v615 = vpop.f32.mrb[0].mxu0
      %v616 = vpop.f32.mrb[0].mxu0
      %v617 = vadd.f32 %v457, %v616
      %v618 = vpop.f32.mrb[0].mxu0
      %619 = vmatprep.mubr.bf16.mxu0 0
      %620 = vmatmul.mubr.bf16.gmra.mrb[0].mxu0 %v540
      %v621 = vpop.f32.mrb[0].mxu0
      %v622 = vadd.f32 %v462, %v621
      %v623 = vpop.f32.mrb[0].mxu0
      %v624 = vpop.f32.mrb[0].mxu0
      %v625 = vpop.f32.mrb[0].mxu0
      %626 = vmatprep.mubr.bf16.mxu0 0
      %627 = vmatmul.mubr.bf16.gmra.mrb[0].mxu0 %v543
      %v628 = vpop.f32.mrb[0].mxu0
      %v629 = vadd.f32 %v469, %v628
      %v630 = vpop.f32.mrb[0].mxu0
      %v631 = vpop.f32.mrb[0].mxu0
      %v632 = vadd.f32 %v472, %v631
      %v633 = vpop.f32.mrb[0].mxu0
      %634 = vmatprep.mubr.bf16.mxu0 0
      %635 = vmatmul.mubr.bf16.gmra.mrb[0].mxu0 %v546
      %v636 = vpop.f32.mrb[0].mxu0
      %v637 = vpop.f32.mrb[0].mxu0
      %v638 = vpop.f32.mrb[0].mxu0
      %v639 = vadd.f32 %v479, %v638
      %v640 = vpop.f32.mrb[0].mxu0
      %641 = vmatprep.mubr.bf16.mxu0 0
      %642 = vmatmul.mubr.bf16.gmra.mrb[0].mxu0 %v549
      %v643 = vpop.f32.mrb[0].mxu0
      %v644 = vadd.f32 %v484, %v643
      %v645 = vpop.f32.mrb[0].mxu0
      %v646 = vpop.f32.mrb[0].mxu0
      %v647 = vpop.f32.mrb[0].mxu0
      %648 = vmatprep.mubr.bf16.mxu0 0
      %649 = vmatmul.mubr.bf16.gmra.mrb[0].mxu0 %v552
      %v650 = vpop.f32.mrb[0].mxu0
      %v651 = vadd.f32 %v491, %v650
      %v652 = vpop.f32.mrb[0].mxu0
      %v653 = vpop.f32.mrb[0].mxu0
      %v654 = vadd.f32 %v494, %v653
      %v655 = vpop.f32.mrb[0].mxu0
      %656 = vmatprep.mubr.bf16.mxu0 0
      %657 = vmatmul.mubr.bf16.gmra.mrb[0].mxu0 %v555
      %v658 = vpop.f32.mrb[0].mxu0
      %v659 = vpop.f32.mrb[0].mxu0
      %v660 = vpop.f32.mrb[0].mxu0
      %v661 = vadd.f32 %v501, %v660
      %v662 = vpop.f32.mrb[0].mxu0
      %663 = vmatprep.mubr.bf16.mxu0 0
      %664 = vmatmul.mubr.bf16.gmra.mrb[0].mxu0 %v558
      %v665 = vpop.f32.mrb[0].mxu0
      %v666 = vadd.f32 %v506, %v665
      %v667 = vpop.f32.mrb[0].mxu0
      %v668 = vpop.f32.mrb[0].mxu0
      %v669 = vpop.f32.mrb[0].mxu0
      %670 = vmatprep.mubr.bf16.mxu0 0
      %671 = vmatmul.mubr.bf16.gmra.mrb[0].mxu0 %v561
      %v672 = vpop.f32.mrb[0].mxu0
      %v673 = vadd.f32 %v513, %v672
      %v674 = vpop.f32.mrb[0].mxu0
      %v675 = vpop.f32.mrb[0].mxu0
      %v676 = vadd.f32 %v516, %v675
      %v677 = vpop.f32.mrb[0].mxu0
      %678 = vmatprep.mubr.bf16.mxu0 0
      %679 = vmatmul.mubr.bf16.gmra.mrb[0].mxu0 %v564
      %v680 = vpop.f32.mrb[0].mxu0
      %v681 = vpop.f32.mrb[0].mxu0
      %v682 = vpop.f32.mrb[0].mxu0
      %v683 = vadd.f32 %v523, %v682
      %v684 = vpop.f32.mrb[0].mxu0
      %685 = vmatprep.mubr.bf16.mxu0 0
      %686 = vmatmul.mubr.bf16.gmra.mrb[0].mxu0 %v567
      %v687 = vpop.f32.mrb[0].mxu0
      %v688 = vadd.f32 %v528, %v687
      %v689 = vpop.f32.mrb[0].mxu0
      %v690 = vpop.f32.mrb[0].mxu0
      %v691 = vpop.f32.mrb[0].mxu0
      %692 = vdwg.mxu0
      %v693 = vrot.slane %v262, 2
      %v694 = vrot.slane %v263, 2
      %v695 = vrot.slane %v264, 2
      %v696 = vrot.slane %v265, 2
      %v697 = vrot.slane %v266, 2
      %v698 = vrot.slane %v267, 2
      %v699 = vrot.slane %v268, 2
      %v700 = vrot.slane %v269, 2
      %v701 = vrot.slane %v270, 2
      %v702 = vrot.slane %v271, 2
      %v703 = vrot.slane %v272, 2
      %v704 = vrot.slane %v273, 2
      %v705 = vrot.slane %v274, 2
      %v706 = vrot.slane %v275, 2
      %v707 = vrot.slane %v276, 2
      %v708 = vrot.slane %v277, 2
      %v709 = vrot.slane %v278, 2
      %v710 = vrot.slane %v279, 2
      %v711 = vrot.slane %v280, 2
      %v712 = vrot.slane %v281, 2
      %v713 = vrot.slane %v282, 2
      %v714 = vrot.slane %v283, 2
      %v715 = vrot.slane %v284, 2
      %v716 = vrot.slane %v285, 2
      %v717 = vrot.slane %v286, 2
      %vm718 = vcmp.lt.s32.totalorder %v331, 6
      %v719 = vsel %vm718, %v716, %v717
      %v720 = vsel %vm718, %v715, %v716
      %v721 = vsel %vm718, %v714, %v715
      %v722 = vsel %vm718, %v713, %v714
      %v723 = vsel %vm718, %v712, %v713
      %v724 = vsel %vm718, %v711, %v712
      %v725 = vsel %vm718, %v710, %v711
      %v726 = vsel %vm718, %v709, %v710
      %v727 = vsel %vm718, %v708, %v709
      %v728 = vsel %vm718, %v707, %v708
      %v729 = vsel %vm718, %v706, %v707
      %v730 = vsel %vm718, %v705, %v706
      %v731 = vsel %vm718, %v704, %v705
      %v732 = vsel %vm718, %v703, %v704
      %v733 = vsel %vm718, %v702, %v703
      %v734 = vsel %vm718, %v701, %v702
      %v735 = vsel %vm718, %v700, %v701
      %v736 = vsel %vm718, %v699, %v700
      %v737 = vsel %vm718, %v698, %v699
      %v738 = vsel %vm718, %v697, %v698
      %v739 = vsel %vm718, %v696, %v697
      %v740 = vsel %vm718, %v695, %v696
      %v741 = vsel %vm718, %v694, %v695
      %v742 = vsel %vm718, %v693, %v694
      %v743 = vpack.c.bf16 %v741, %v742
      %v744 = vpack.c.bf16 %v739, %v740
      %v745 = vpack.c.bf16 %v737, %v738
      %v746 = vpack.c.bf16 %v735, %v736
      %v747 = vpack.c.bf16 %v733, %v734
      %v748 = vpack.c.bf16 %v731, %v732
      %v749 = vpack.c.bf16 %v729, %v730
      %v750 = vpack.c.bf16 %v727, %v728
      %v751 = vpack.c.bf16 %v725, %v726
      %v752 = vpack.c.bf16 %v723, %v724
      %v753 = vpack.c.bf16 %v721, %v722
      %v754 = vpack.c.bf16 %v719, %v720
      %s755 = scalar_lea.vmem %s1, 8
      %v756 = vld [vmem:[%s755] sm:$0xf]
      %v758 = vsel %vm371, %v743, 0
      %v761 = vsel %vm371, %v744, 0
      %v764 = vsel %vm371, %v745, 0
      %v767 = vsel %vm371, %v746, 0
      %v770 = vsel %vm371, %v747, 0
      %v773 = vsel %vm371, %v748, 0
      %v776 = vsel %vm371, %v749, 0
      %v779 = vsel %vm371, %v750, 0
      %v782 = vsel %vm371, %v751, 0
      %v785 = vsel %vm371, %v752, 0
      %v788 = vsel %vm371, %v753, 0
      %v791 = vsel %vm371, %v754, 0
      %v794 = vsel %vm408, %v756, 0
      %796 = vmatprep.subr.bf16.mxu0 0
      %797 = vmatpush1.bf16.msra.mxu0 %v794
      %798 = vmatprep.subr.bf16.mxu0 0
      %799 = vmatpush1.bf16.msra.mxu0 0
      %800 = vmatprep.subr.bf16.mxu0 0
      %801 = vmatpush1.bf16.msra.mxu0 0
      %802 = vmatprep.subr.bf16.mxu0 0
      %803 = vmatpush1.bf16.msra.mxu0 0
      %804 = vmatprep.subr.bf16.mxu0 0
      %805 = vmatpush1.bf16.msra.mxu0 0
      %806 = vmatprep.subr.bf16.mxu0 0
      %807 = vmatpush1.bf16.msra.mxu0 0
      %808 = vmatprep.subr.bf16.mxu0 0
      %809 = vmatpush1.bf16.msra.mxu0 0
      %810 = vmatprep.subr.bf16.mxu0 0
      %811 = vmatpush1.bf16.msra.mxu0 0
      %812 = vmatprep.subr.bf16.mxu0 0
      %813 = vmatpush1.bf16.msra.mxu0 0
      %814 = vmatprep.subr.bf16.mxu0 0
      %815 = vmatpush1.bf16.msra.mxu0 0
      %816 = vmatprep.subr.bf16.mxu0 0
      %817 = vmatpush1.bf16.msra.mxu0 0
      %818 = vmatprep.subr.bf16.mxu0 0
      %819 = vmatpush1.bf16.msra.mxu0 0
      %820 = vmatprep.subr.bf16.mxu0 0
      %821 = vmatpush1.bf16.msra.mxu0 0
      %822 = vmatprep.subr.bf16.mxu0 0
      %823 = vmatpush1.bf16.msra.mxu0 0
      %824 = vmatprep.subr.bf16.mxu0 0
      %825 = vmatpush1.bf16.msra.mxu0 0
      %826 = vmatprep.subr.bf16.mxu0 0
      %827 = vmatpush1.bf16.msra.mxu0 0
      %828 = vmatprep.mubr.bf16.mxu0 0
      %829 = vmatmul.mubr.bf16.gmra.mrb[0].mxu0 %v758
      %v830 = vpop.f32.mrb[0].mxu0
      %v831 = vadd.f32 0.0, %v830
      %v832 = vpop.f32.mrb[0].mxu0
      %v833 = vpop.f32.mrb[0].mxu0
      %v834 = vadd.f32 0.0, %v833
      %v835 = vpop.f32.mrb[0].mxu0
      %836 = vmatprep.mubr.bf16.mxu0 0
      %837 = vmatmul.mubr.bf16.gmra.mrb[0].mxu0 %v761
      %v838 = vpop.f32.mrb[0].mxu0
      %v839 = vpop.f32.mrb[0].mxu0
      %v840 = vpop.f32.mrb[0].mxu0
      %v841 = vadd.f32 0.0, %v840
      %v842 = vpop.f32.mrb[0].mxu0
      %843 = vmatprep.mubr.bf16.mxu0 0
      %844 = vmatmul.mubr.bf16.gmra.mrb[0].mxu0 %v764
      %v845 = vpop.f32.mrb[0].mxu0
      %v846 = vadd.f32 0.0, %v845
      %v847 = vpop.f32.mrb[0].mxu0
      %v848 = vpop.f32.mrb[0].mxu0
      %v849 = vpop.f32.mrb[0].mxu0
      %850 = vmatprep.mubr.bf16.mxu0 0
      %851 = vmatmul.mubr.bf16.gmra.mrb[0].mxu0 %v767
      %v852 = vpop.f32.mrb[0].mxu0
      %v853 = vadd.f32 0.0, %v852
      %v854 = vpop.f32.mrb[0].mxu0
      %v855 = vpop.f32.mrb[0].mxu0
      %v856 = vadd.f32 0.0, %v855
      %v857 = vpop.f32.mrb[0].mxu0
      %858 = vmatprep.mubr.bf16.mxu0 0
      %859 = vmatmul.mubr.bf16.gmra.mrb[0].mxu0 %v770
      %v860 = vpop.f32.mrb[0].mxu0
      %v861 = vpop.f32.mrb[0].mxu0
      %v862 = vpop.f32.mrb[0].mxu0
      %v863 = vadd.f32 0.0, %v862
      %v864 = vpop.f32.mrb[0].mxu0
      %865 = vmatprep.mubr.bf16.mxu0 0
      %866 = vmatmul.mubr.bf16.gmra.mrb[0].mxu0 %v773
      %v867 = vpop.f32.mrb[0].mxu0
      %v868 = vadd.f32 0.0, %v867
      %v869 = vpop.f32.mrb[0].mxu0
      %v870 = vpop.f32.mrb[0].mxu0
      %v871 = vpop.f32.mrb[0].mxu0
      %872 = vmatprep.mubr.bf16.mxu0 0
      %873 = vmatmul.mubr.bf16.gmra.mrb[0].mxu0 %v776
      %v874 = vpop.f32.mrb[0].mxu0
      %v875 = vadd.f32 0.0, %v874
      %v876 = vpop.f32.mrb[0].mxu0
      %v877 = vpop.f32.mrb[0].mxu0
      %v878 = vadd.f32 0.0, %v877
      %v879 = vpop.f32.mrb[0].mxu0
      %880 = vmatprep.mubr.bf16.mxu0 0
      %881 = vmatmul.mubr.bf16.gmra.mrb[0].mxu0 %v779
      %v882 = vpop.f32.mrb[0].mxu0
      %v883 = vpop.f32.mrb[0].mxu0
      %v884 = vpop.f32.mrb[0].mxu0
      %v885 = vadd.f32 0.0, %v884
      %v886 = vpop.f32.mrb[0].mxu0
      %887 = vmatprep.mubr.bf16.mxu0 0
      %888 = vmatmul.mubr.bf16.gmra.mrb[0].mxu0 %v782
      %v889 = vpop.f32.mrb[0].mxu0
      %v890 = vadd.f32 0.0, %v889
      %v891 = vpop.f32.mrb[0].mxu0
      %v892 = vpop.f32.mrb[0].mxu0
      %v893 = vpop.f32.mrb[0].mxu0
      %894 = vmatprep.mubr.bf16.mxu0 0
      %895 = vmatmul.mubr.bf16.gmra.mrb[0].mxu0 %v785
      %v896 = vpop.f32.mrb[0].mxu0
      %v897 = vadd.f32 0.0, %v896
      %v898 = vpop.f32.mrb[0].mxu0
      %v899 = vpop.f32.mrb[0].mxu0
      %v900 = vadd.f32 0.0, %v899
      %v901 = vpop.f32.mrb[0].mxu0
      %902 = vmatprep.mubr.bf16.mxu0 0
      %903 = vmatmul.mubr.bf16.gmra.mrb[0].mxu0 %v788
      %v904 = vpop.f32.mrb[0].mxu0
      %v905 = vpop.f32.mrb[0].mxu0
      %v906 = vpop.f32.mrb[0].mxu0
      %v907 = vadd.f32 0.0, %v906
      %v908 = vpop.f32.mrb[0].mxu0
      %909 = vmatprep.mubr.bf16.mxu0 0
      %910 = vmatmul.mubr.bf16.gmra.mrb[0].mxu0 %v791
      %v911 = vpop.f32.mrb[0].mxu0
      %v912 = vadd.f32 0.0, %v911
      %v913 = vpop.f32.mrb[0].mxu0
      %v914 = vpop.f32.mrb[0].mxu0
      %v915 = vpop.f32.mrb[0].mxu0
      %916 = vdwg.mxu0
      %v917 = vadd.f32 %v607, %v831
      %v918 = vadd.f32 %v610, %v834
      %v919 = vadd.f32 %v617, %v841
      %v920 = vadd.f32 %v622, %v846
      %v921 = vadd.f32 %v629, %v853
      %v922 = vadd.f32 %v632, %v856
      %v923 = vadd.f32 %v639, %v863
      %v924 = vadd.f32 %v644, %v868
      %v925 = vadd.f32 %v651, %v875
      %v926 = vadd.f32 %v654, %v878
      %v927 = vadd.f32 %v661, %v885
      %v928 = vadd.f32 %v666, %v890
      %v929 = vadd.f32 %v673, %v897
      %v930 = vadd.f32 %v676, %v900
      %v931 = vadd.f32 %v683, %v907
      %v932 = vadd.f32 %v688, %v912
      %v933 = vpack.c.bf16 %v266, %v265
      %v934 = vpack.c.bf16 %v268, %v267
      %v935 = vpack.c.bf16 %v270, %v269
      %v936 = vpack.c.bf16 %v272, %v271
      %v937 = vpack.c.bf16 %v274, %v273
      %v938 = vpack.c.bf16 %v276, %v275
      %v939 = vpack.c.bf16 %v278, %v277
      %v940 = vpack.c.bf16 %v280, %v279
      %v941 = vpack.c.bf16 %v282, %v281
      %v942 = vpack.c.bf16 %v284, %v283
      %v943 = vpack.c.bf16 %v286, %v285
      %v944 = vpack.c.bf16 %v288, %v287
      %s945 = scalar_lea.vmem %s1, 12
      %v946 = vld [vmem:[%s945] sm:$0xf]
      %v948 = vsel %vm371, %v933, 0
      %v951 = vsel %vm371, %v934, 0
      %v954 = vsel %vm371, %v935, 0
      %v957 = vsel %vm371, %v936, 0
      %v960 = vsel %vm371, %v937, 0
      %v963 = vsel %vm371, %v938, 0
      %v966 = vsel %vm371, %v939, 0
      %v969 = vsel %vm371, %v940, 0
      %v972 = vsel %vm371, %v941, 0
      %v975 = vsel %vm371, %v942, 0
      %v978 = vsel %vm371, %v943, 0
      %v981 = vsel %vm371, %v944, 0
      %v984 = vsel %vm408, %v946, 0
      %986 = vmatprep.subr.bf16.mxu0 0
      %987 = vmatpush1.bf16.msra.mxu0 %v984
      %988 = vmatprep.subr.bf16.mxu0 0
      %989 = vmatpush1.bf16.msra.mxu0 0
      %990 = vmatprep.subr.bf16.mxu0 0
      %991 = vmatpush1.bf16.msra.mxu0 0
      %992 = vmatprep.subr.bf16.mxu0 0
      %993 = vmatpush1.bf16.msra.mxu0 0
      %994 = vmatprep.subr.bf16.mxu0 0
      %995 = vmatpush1.bf16.msra.mxu0 0
      %996 = vmatprep.subr.bf16.mxu0 0
      %997 = vmatpush1.bf16.msra.mxu0 0
      %998 = vmatprep.subr.bf16.mxu0 0
      %999 = vmatpush1.bf16.msra.mxu0 0
      %1000 = vmatprep.subr.bf16.mxu0 0
      %1001 = vmatpush1.bf16.msra.mxu0 0
      %1002 = vmatprep.subr.bf16.mxu0 0
      %1003 = vmatpush1.bf16.msra.mxu0 0
      %1004 = vmatprep.subr.bf16.mxu0 0
      %1005 = vmatpush1.bf16.msra.mxu0 0
      %1006 = vmatprep.subr.bf16.mxu0 0
      %1007 = vmatpush1.bf16.msra.mxu0 0
      %1008 = vmatprep.subr.bf16.mxu0 0
      %1009 = vmatpush1.bf16.msra.mxu0 0
      %1010 = vmatprep.subr.bf16.mxu0 0
      %1011 = vmatpush1.bf16.msra.mxu0 0
      %1012 = vmatprep.subr.bf16.mxu0 0
      %1013 = vmatpush1.bf16.msra.mxu0 0
      %1014 = vmatprep.subr.bf16.mxu0 0
      %1015 = vmatpush1.bf16.msra.mxu0 0
      %1016 = vmatprep.subr.bf16.mxu0 0
      %1017 = vmatpush1.bf16.msra.mxu0 0
      %1018 = vmatprep.mubr.bf16.mxu0 0
      %1019 = vmatmul.mubr.bf16.gmra.mrb[0].mxu0 %v948
      %v1020 = vpop.f32.mrb[0].mxu0
      %v1021 = vadd.f32 0.0, %v1020
      %v1022 = vpop.f32.mrb[0].mxu0
      %v1023 = vpop.f32.mrb[0].mxu0
      %v1024 = vadd.f32 0.0, %v1023
      %v1025 = vpop.f32.mrb[0].mxu0
      %1026 = vmatprep.mubr.bf16.mxu0 0
      %1027 = vmatmul.mubr.bf16.gmra.mrb[0].mxu0 %v951
      %v1028 = vpop.f32.mrb[0].mxu0
      %v1029 = vpop.f32.mrb[0].mxu0
      %v1030 = vpop.f32.mrb[0].mxu0
      %v1031 = vadd.f32 0.0, %v1030
      %v1032 = vpop.f32.mrb[0].mxu0
      %1033 = vmatprep.mubr.bf16.mxu0 0
      %1034 = vmatmul.mubr.bf16.gmra.mrb[0].mxu0 %v954
      %v1035 = vpop.f32.mrb[0].mxu0
      %v1036 = vadd.f32 0.0, %v1035
      %v1037 = vpop.f32.mrb[0].mxu0
      %v1038 = vpop.f32.mrb[0].mxu0
      %v1039 = vpop.f32.mrb[0].mxu0
      %1040 = vmatprep.mubr.bf16.mxu0 0
      %1041 = vmatmul.mubr.bf16.gmra.mrb[0].mxu0 %v957
      %v1042 = vpop.f32.mrb[0].mxu0
      %v1043 = vadd.f32 0.0, %v1042
      %v1044 = vpop.f32.mrb[0].mxu0
      %v1045 = vpop.f32.mrb[0].mxu0
      %v1046 = vadd.f32 0.0, %v1045
      %v1047 = vpop.f32.mrb[0].mxu0
      %1048 = vmatprep.mubr.bf16.mxu0 0
      %1049 = vmatmul.mubr.bf16.gmra.mrb[0].mxu0 %v960
      %v1050 = vpop.f32.mrb[0].mxu0
      %v1051 = vpop.f32.mrb[0].mxu0
      %v1052 = vpop.f32.mrb[0].mxu0
      %v1053 = vadd.f32 0.0, %v1052
      %v1054 = vpop.f32.mrb[0].mxu0
      %1055 = vmatprep.mubr.bf16.mxu0 0
      %1056 = vmatmul.mubr.bf16.gmra.mrb[0].mxu0 %v963
      %v1057 = vpop.f32.mrb[0].mxu0
      %v1058 = vadd.f32 0.0, %v1057
      %v1059 = vpop.f32.mrb[0].mxu0
      %v1060 = vpop.f32.mrb[0].mxu0
      %v1061 = vpop.f32.mrb[0].mxu0
      %1062 = vmatprep.mubr.bf16.mxu0 0
      %1063 = vmatmul.mubr.bf16.gmra.mrb[0].mxu0 %v966
      %v1064 = vpop.f32.mrb[0].mxu0
      %v1065 = vadd.f32 0.0, %v1064
      %v1066 = vpop.f32.mrb[0].mxu0
      %v1067 = vpop.f32.mrb[0].mxu0
      %v1068 = vadd.f32 0.0, %v1067
      %v1069 = vpop.f32.mrb[0].mxu0
      %1070 = vmatprep.mubr.bf16.mxu0 0
      %1071 = vmatmul.mubr.bf16.gmra.mrb[0].mxu0 %v969
      %v1072 = vpop.f32.mrb[0].mxu0
      %v1073 = vpop.f32.mrb[0].mxu0
      %v1074 = vpop.f32.mrb[0].mxu0
      %v1075 = vadd.f32 0.0, %v1074
      %v1076 = vpop.f32.mrb[0].mxu0
      %1077 = vmatprep.mubr.bf16.mxu0 0
      %1078 = vmatmul.mubr.bf16.gmra.mrb[0].mxu0 %v972
      %v1079 = vpop.f32.mrb[0].mxu0
      %v1080 = vadd.f32 0.0, %v1079
      %v1081 = vpop.f32.mrb[0].mxu0
      %v1082 = vpop.f32.mrb[0].mxu0
      %v1083 = vpop.f32.mrb[0].mxu0
      %1084 = vmatprep.mubr.bf16.mxu0 0
      %1085 = vmatmul.mubr.bf16.gmra.mrb[0].mxu0 %v975
      %v1086 = vpop.f32.mrb[0].mxu0
      %v1087 = vadd.f32 0.0, %v1086
      %v1088 = vpop.f32.mrb[0].mxu0
      %v1089 = vpop.f32.mrb[0].mxu0
      %v1090 = vadd.f32 0.0, %v1089
      %v1091 = vpop.f32.mrb[0].mxu0
      %1092 = vmatprep.mubr.bf16.mxu0 0
      %1093 = vmatmul.mubr.bf16.gmra.mrb[0].mxu0 %v978
      %v1094 = vpop.f32.mrb[0].mxu0
      %v1095 = vpop.f32.mrb[0].mxu0
      %v1096 = vpop.f32.mrb[0].mxu0
      %v1097 = vadd.f32 0.0, %v1096
      %v1098 = vpop.f32.mrb[0].mxu0
      %1099 = vmatprep.mubr.bf16.mxu0 0
      %1100 = vmatmul.mubr.bf16.gmra.mrb[0].mxu0 %v981
      %v1101 = vpop.f32.mrb[0].mxu0
      %v1102 = vadd.f32 0.0, %v1101
      %v1103 = vpop.f32.mrb[0].mxu0
      %v1104 = vpop.f32.mrb[0].mxu0
      %v1105 = vpop.f32.mrb[0].mxu0
      %1106 = vdwg.mxu0
      %v1107 = vadd.f32 %v917, %v1021
      %v1108 = vadd.f32 %v918, %v1024
      %v1109 = vadd.f32 %v919, %v1031
      %v1110 = vadd.f32 %v920, %v1036
      %v1111 = vadd.f32 %v921, %v1043
      %v1112 = vadd.f32 %v922, %v1046
      %v1113 = vadd.f32 %v923, %v1053
      %v1114 = vadd.f32 %v924, %v1058
      %v1115 = vadd.f32 %v925, %v1065
      %v1116 = vadd.f32 %v926, %v1068
      %v1117 = vadd.f32 %v927, %v1075
      %v1118 = vadd.f32 %v928, %v1080
      %v1119 = vadd.f32 %v929, %v1087
      %v1120 = vadd.f32 %v930, %v1090
      %v1121 = vadd.f32 %v931, %v1097
      %v1122 = vadd.f32 %v932, %v1102
      %v1123 = vrot.slane %v287, 1
      %v1124 = vrot.slane %v288, 1
      %v1125 = vrot.slane %v289, 1
      %v1126 = vsel %vm332, %v1124, %v1125
      %v1127 = vsel %vm332, %v1123, %v1124
      %v1128 = vsel %vm332, %v329, %v1123
      %v1129 = vpack.c.bf16 %v352, %v353
      %v1130 = vpack.c.bf16 %v350, %v351
      %v1131 = vpack.c.bf16 %v348, %v349
      %v1132 = vpack.c.bf16 %v346, %v347
      %v1133 = vpack.c.bf16 %v344, %v345
      %v1134 = vpack.c.bf16 %v342, %v343
      %v1135 = vpack.c.bf16 %v340, %v341
      %v1136 = vpack.c.bf16 %v338, %v339
      %v1137 = vpack.c.bf16 %v336, %v337
      %v1138 = vpack.c.bf16 %v334, %v335
      %v1139 = vpack.c.bf16 %v1128, %v333
      %v1140 = vpack.c.bf16 %v1126, %v1127
      %s1141 = scalar_lea.vmem %s1, 16
      %v1142 = vld [vmem:[%s1141] sm:$0xf]
      %v1144 = vsel %vm371, %v1129, 0
      %v1147 = vsel %vm371, %v1130, 0
      %v1150 = vsel %vm371, %v1131, 0
      %v1153 = vsel %vm371, %v1132, 0
      %v1156 = vsel %vm371, %v1133, 0
      %v1159 = vsel %vm371, %v1134, 0
      %v1162 = vsel %vm371, %v1135, 0
      %v1165 = vsel %vm371, %v1136, 0
      %v1168 = vsel %vm371, %v1137, 0
      %v1171 = vsel %vm371, %v1138, 0
      %v1174 = vsel %vm371, %v1139, 0
      %v1177 = vsel %vm371, %v1140, 0
      %v1180 = vsel %vm408, %v1142, 0
      %1182 = vmatprep.subr.bf16.mxu0 0
      %1183 = vmatpush1.bf16.msra.mxu0 %v1180
      %1184 = vmatprep.subr.bf16.mxu0 0
      %1185 = vmatpush1.bf16.msra.mxu0 0
      %1186 = vmatprep.subr.bf16.mxu0 0
      %1187 = vmatpush1.bf16.msra.mxu0 0
      %1188 = vmatprep.subr.bf16.mxu0 0
      %1189 = vmatpush1.bf16.msra.mxu0 0
      %1190 = vmatprep.subr.bf16.mxu0 0
      %1191 = vmatpush1.bf16.msra.mxu0 0
      %1192 = vmatprep.subr.bf16.mxu0 0
      %1193 = vmatpush1.bf16.msra.mxu0 0
      %1194 = vmatprep.subr.bf16.mxu0 0
      %1195 = vmatpush1.bf16.msra.mxu0 0
      %1196 = vmatprep.subr.bf16.mxu0 0
      %1197 = vmatpush1.bf16.msra.mxu0 0
      %1198 = vmatprep.subr.bf16.mxu0 0
      %1199 = vmatpush1.bf16.msra.mxu0 0
      %1200 = vmatprep.subr.bf16.mxu0 0
      %1201 = vmatpush1.bf16.msra.mxu0 0
      %1202 = vmatprep.subr.bf16.mxu0 0
      %1203 = vmatpush1.bf16.msra.mxu0 0
      %1204 = vmatprep.subr.bf16.mxu0 0
      %1205 = vmatpush1.bf16.msra.mxu0 0
      %1206 = vmatprep.subr.bf16.mxu0 0
      %1207 = vmatpush1.bf16.msra.mxu0 0
      %1208 = vmatprep.subr.bf16.mxu0 0
      %1209 = vmatpush1.bf16.msra.mxu0 0
      %1210 = vmatprep.subr.bf16.mxu0 0
      %1211 = vmatpush1.bf16.msra.mxu0 0
      %1212 = vmatprep.subr.bf16.mxu0 0
      %1213 = vmatpush1.bf16.msra.mxu0 0
      %1214 = vmatprep.mubr.bf16.mxu0 0
      %1215 = vmatmul.mubr.bf16.gmra.mrb[0].mxu0 %v1144
      %v1216 = vpop.f32.mrb[0].mxu0
      %v1217 = vadd.f32 0.0, %v1216
      %v1218 = vpop.f32.mrb[0].mxu0
      %v1219 = vpop.f32.mrb[0].mxu0
      %v1220 = vadd.f32 0.0, %v1219
      %v1221 = vpop.f32.mrb[0].mxu0
      %1222 = vmatprep.mubr.bf16.mxu0 0
      %1223 = vmatmul.mubr.bf16.gmra.mrb[0].mxu0 %v1147
      %v1224 = vpop.f32.mrb[0].mxu0
      %v1225 = vpop.f32.mrb[0].mxu0
      %v1226 = vpop.f32.mrb[0].mxu0
      %v1227 = vadd.f32 0.0, %v1226
      %v1228 = vpop.f32.mrb[0].mxu0
      %1229 = vmatprep.mubr.bf16.mxu0 0
      %1230 = vmatmul.mubr.bf16.gmra.mrb[0].mxu0 %v1150
      %v1231 = vpop.f32.mrb[0].mxu0
      %v1232 = vadd.f32 0.0, %v1231
      %v1233 = vpop.f32.mrb[0].mxu0
      %v1234 = vpop.f32.mrb[0].mxu0
      %v1235 = vpop.f32.mrb[0].mxu0
      %1236 = vmatprep.mubr.bf16.mxu0 0
      %1237 = vmatmul.mubr.bf16.gmra.mrb[0].mxu0 %v1153
      %v1238 = vpop.f32.mrb[0].mxu0
      %v1239 = vadd.f32 0.0, %v1238
      %v1240 = vpop.f32.mrb[0].mxu0
      %v1241 = vpop.f32.mrb[0].mxu0
      %v1242 = vadd.f32 0.0, %v1241
      %v1243 = vpop.f32.mrb[0].mxu0
      %1244 = vmatprep.mubr.bf16.mxu0 0
      %1245 = vmatmul.mubr.bf16.gmra.mrb[0].mxu0 %v1156
      %v1246 = vpop.f32.mrb[0].mxu0
      %v1247 = vpop.f32.mrb[0].mxu0
      %v1248 = vpop.f32.mrb[0].mxu0
      %v1249 = vadd.f32 0.0, %v1248
      %v1250 = vpop.f32.mrb[0].mxu0
      %1251 = vmatprep.mubr.bf16.mxu0 0
      %1252 = vmatmul.mubr.bf16.gmra.mrb[0].mxu0 %v1159
      %v1253 = vpop.f32.mrb[0].mxu0
      %v1254 = vadd.f32 0.0, %v1253
      %v1255 = vpop.f32.mrb[0].mxu0
      %v1256 = vpop.f32.mrb[0].mxu0
      %v1257 = vpop.f32.mrb[0].mxu0
      %1258 = vmatprep.mubr.bf16.mxu0 0
      %1259 = vmatmul.mubr.bf16.gmra.mrb[0].mxu0 %v1162
      %v1260 = vpop.f32.mrb[0].mxu0
      %v1261 = vadd.f32 0.0, %v1260
      %v1262 = vpop.f32.mrb[0].mxu0
      %v1263 = vpop.f32.mrb[0].mxu0
      %v1264 = vadd.f32 0.0, %v1263
      %v1265 = vpop.f32.mrb[0].mxu0
      %1266 = vmatprep.mubr.bf16.mxu0 0
      %1267 = vmatmul.mubr.bf16.gmra.mrb[0].mxu0 %v1165
      %v1268 = vpop.f32.mrb[0].mxu0
      %v1269 = vpop.f32.mrb[0].mxu0
      %v1270 = vpop.f32.mrb[0].mxu0
      %v1271 = vadd.f32 0.0, %v1270
      %v1272 = vpop.f32.mrb[0].mxu0
      %1273 = vmatprep.mubr.bf16.mxu0 0
      %1274 = vmatmul.mubr.bf16.gmra.mrb[0].mxu0 %v1168
      %v1275 = vpop.f32.mrb[0].mxu0
      %v1276 = vadd.f32 0.0, %v1275
      %v1277 = vpop.f32.mrb[0].mxu0
      %v1278 = vpop.f32.mrb[0].mxu0
      %v1279 = vpop.f32.mrb[0].mxu0
      %1280 = vmatprep.mubr.bf16.mxu0 0
      %1281 = vmatmul.mubr.bf16.gmra.mrb[0].mxu0 %v1171
      %v1282 = vpop.f32.mrb[0].mxu0
      %v1283 = vadd.f32 0.0, %v1282
      %v1284 = vpop.f32.mrb[0].mxu0
      %v1285 = vpop.f32.mrb[0].mxu0
      %v1286 = vadd.f32 0.0, %v1285
      %v1287 = vpop.f32.mrb[0].mxu0
      %1288 = vmatprep.mubr.bf16.mxu0 0
      %1289 = vmatmul.mubr.bf16.gmra.mrb[0].mxu0 %v1174
      %v1290 = vpop.f32.mrb[0].mxu0
      %v1291 = vpop.f32.mrb[0].mxu0
      %v1292 = vpop.f32.mrb[0].mxu0
      %v1293 = vadd.f32 0.0, %v1292
      %v1294 = vpop.f32.mrb[0].mxu0
      %1295 = vmatprep.mubr.bf16.mxu0 0
      %1296 = vmatmul.mubr.bf16.gmra.mrb[0].mxu0 %v1177
      %v1297 = vpop.f32.mrb[0].mxu0
      %v1298 = vadd.f32 0.0, %v1297
      %v1299 = vpop.f32.mrb[0].mxu0
      %v1300 = vpop.f32.mrb[0].mxu0
      %v1301 = vpop.f32.mrb[0].mxu0
      %1302 = vdwg.mxu0
      %v1303 = vadd.f32 %v1107, %v1217
      %v1304 = vadd.f32 %v1108, %v1220
      %v1305 = vadd.f32 %v1109, %v1227
      %v1306 = vadd.f32 %v1110, %v1232
      %v1307 = vadd.f32 %v1111, %v1239
      %v1308 = vadd.f32 %v1112, %v1242
      %v1309 = vadd.f32 %v1113, %v1249
      %v1310 = vadd.f32 %v1114, %v1254
      %v1311 = vadd.f32 %v1115, %v1261
      %v1312 = vadd.f32 %v1116, %v1264
      %v1313 = vadd.f32 %v1117, %v1271
      %v1314 = vadd.f32 %v1118, %v1276
      %v1315 = vadd.f32 %v1119, %v1283
      %v1316 = vadd.f32 %v1120, %v1286
      %v1317 = vadd.f32 %v1121, %v1293
      %v1318 = vadd.f32 %v1122, %v1298
      %v1319 = vrot.slane %v287, 2
      %v1320 = vrot.slane %v288, 2
      %v1321 = vrot.slane %v289, 2
      %v1322 = vsel %vm718, %v1320, %v1321
      %v1323 = vsel %vm718, %v1319, %v1320
      %v1324 = vsel %vm718, %v717, %v1319
      %v1325 = vpack.c.bf16 %v738, %v739
      %v1326 = vpack.c.bf16 %v736, %v737
      %v1327 = vpack.c.bf16 %v734, %v735
      %v1328 = vpack.c.bf16 %v732, %v733
      %v1329 = vpack.c.bf16 %v730, %v731
      %v1330 = vpack.c.bf16 %v728, %v729
      %v1331 = vpack.c.bf16 %v726, %v727
      %v1332 = vpack.c.bf16 %v724, %v725
      %v1333 = vpack.c.bf16 %v722, %v723
      %v1334 = vpack.c.bf16 %v720, %v721
      %v1335 = vpack.c.bf16 %v1324, %v719
      %v1336 = vpack.c.bf16 %v1322, %v1323
      %s1337 = scalar_lea.vmem %s1, 20
      %v1338 = vld [vmem:[%s1337] sm:$0xf]
      %v1340 = vsel %vm371, %v1325, 0
      %v1343 = vsel %vm371, %v1326, 0
      %v1346 = vsel %vm371, %v1327, 0
      %v1349 = vsel %vm371, %v1328, 0
      %v1352 = vsel %vm371, %v1329, 0
      %v1355 = vsel %vm371, %v1330, 0
      %v1358 = vsel %vm371, %v1331, 0
      %v1361 = vsel %vm371, %v1332, 0
      %v1364 = vsel %vm371, %v1333, 0
      %v1367 = vsel %vm371, %v1334, 0
      %v1370 = vsel %vm371, %v1335, 0
      %v1373 = vsel %vm371, %v1336, 0
      %v1376 = vsel %vm408, %v1338, 0
      %1378 = vmatprep.subr.bf16.mxu0 0
      %1379 = vmatpush1.bf16.msra.mxu0 %v1376
      %1380 = vmatprep.subr.bf16.mxu0 0
      %1381 = vmatpush1.bf16.msra.mxu0 0
      %1382 = vmatprep.subr.bf16.mxu0 0
      %1383 = vmatpush1.bf16.msra.mxu0 0
      %1384 = vmatprep.subr.bf16.mxu0 0
      %1385 = vmatpush1.bf16.msra.mxu0 0
      %1386 = vmatprep.subr.bf16.mxu0 0
      %1387 = vmatpush1.bf16.msra.mxu0 0
      %1388 = vmatprep.subr.bf16.mxu0 0
      %1389 = vmatpush1.bf16.msra.mxu0 0
      %1390 = vmatprep.subr.bf16.mxu0 0
      %1391 = vmatpush1.bf16.msra.mxu0 0
      %1392 = vmatprep.subr.bf16.mxu0 0
      %1393 = vmatpush1.bf16.msra.mxu0 0
      %1394 = vmatprep.subr.bf16.mxu0 0
      %1395 = vmatpush1.bf16.msra.mxu0 0
      %1396 = vmatprep.subr.bf16.mxu0 0
      %1397 = vmatpush1.bf16.msra.mxu0 0
      %1398 = vmatprep.subr.bf16.mxu0 0
      %1399 = vmatpush1.bf16.msra.mxu0 0
      %1400 = vmatprep.subr.bf16.mxu0 0
      %1401 = vmatpush1.bf16.msra.mxu0 0
      %1402 = vmatprep.subr.bf16.mxu0 0
      %1403 = vmatpush1.bf16.msra.mxu0 0
      %1404 = vmatprep.subr.bf16.mxu0 0
      %1405 = vmatpush1.bf16.msra.mxu0 0
      %1406 = vmatprep.subr.bf16.mxu0 0
      %1407 = vmatpush1.bf16.msra.mxu0 0
      %1408 = vmatprep.subr.bf16.mxu0 0
      %1409 = vmatpush1.bf16.msra.mxu0 0
      %1410 = vmatprep.mubr.bf16.mxu0 0
      %1411 = vmatmul.mubr.bf16.gmra.mrb[0].mxu0 %v1340
      %v1412 = vpop.f32.mrb[0].mxu0
      %v1413 = vadd.f32 0.0, %v1412
      %v1414 = vpop.f32.mrb[0].mxu0
      %v1415 = vpop.f32.mrb[0].mxu0
      %v1416 = vadd.f32 0.0, %v1415
      %v1417 = vpop.f32.mrb[0].mxu0
      %1418 = vmatprep.mubr.bf16.mxu0 0
      %1419 = vmatmul.mubr.bf16.gmra.mrb[0].mxu0 %v1343
      %v1420 = vpop.f32.mrb[0].mxu0
      %v1421 = vpop.f32.mrb[0].mxu0
      %v1422 = vpop.f32.mrb[0].mxu0
      %v1423 = vadd.f32 0.0, %v1422
      %v1424 = vpop.f32.mrb[0].mxu0
      %1425 = vmatprep.mubr.bf16.mxu0 0
      %1426 = vmatmul.mubr.bf16.gmra.mrb[0].mxu0 %v1346
      %v1427 = vpop.f32.mrb[0].mxu0
      %v1428 = vadd.f32 0.0, %v1427
      %v1429 = vpop.f32.mrb[0].mxu0
      %v1430 = vpop.f32.mrb[0].mxu0
      %v1431 = vpop.f32.mrb[0].mxu0
      %1432 = vmatprep.mubr.bf16.mxu0 0
      %1433 = vmatmul.mubr.bf16.gmra.mrb[0].mxu0 %v1349
      %v1434 = vpop.f32.mrb[0].mxu0
      %v1435 = vadd.f32 0.0, %v1434
      %v1436 = vpop.f32.mrb[0].mxu0
      %v1437 = vpop.f32.mrb[0].mxu0
      %v1438 = vadd.f32 0.0, %v1437
      %v1439 = vpop.f32.mrb[0].mxu0
      %1440 = vmatprep.mubr.bf16.mxu0 0
      %1441 = vmatmul.mubr.bf16.gmra.mrb[0].mxu0 %v1352
      %v1442 = vpop.f32.mrb[0].mxu0
      %v1443 = vpop.f32.mrb[0].mxu0
      %v1444 = vpop.f32.mrb[0].mxu0
      %v1445 = vadd.f32 0.0, %v1444
      %v1446 = vpop.f32.mrb[0].mxu0
      %1447 = vmatprep.mubr.bf16.mxu0 0
      %1448 = vmatmul.mubr.bf16.gmra.mrb[0].mxu0 %v1355
      %v1449 = vpop.f32.mrb[0].mxu0
      %v1450 = vadd.f32 0.0, %v1449
      %v1451 = vpop.f32.mrb[0].mxu0
      %v1452 = vpop.f32.mrb[0].mxu0
      %v1453 = vpop.f32.mrb[0].mxu0
      %1454 = vmatprep.mubr.bf16.mxu0 0
      %1455 = vmatmul.mubr.bf16.gmra.mrb[0].mxu0 %v1358
      %v1456 = vpop.f32.mrb[0].mxu0
      %v1457 = vadd.f32 0.0, %v1456
      %v1458 = vpop.f32.mrb[0].mxu0
      %v1459 = vpop.f32.mrb[0].mxu0
      %v1460 = vadd.f32 0.0, %v1459
      %v1461 = vpop.f32.mrb[0].mxu0
      %1462 = vmatprep.mubr.bf16.mxu0 0
      %1463 = vmatmul.mubr.bf16.gmra.mrb[0].mxu0 %v1361
      %v1464 = vpop.f32.mrb[0].mxu0
      %v1465 = vpop.f32.mrb[0].mxu0
      %v1466 = vpop.f32.mrb[0].mxu0
      %v1467 = vadd.f32 0.0, %v1466
      %v1468 = vpop.f32.mrb[0].mxu0
      %1469 = vmatprep.mubr.bf16.mxu0 0
      %1470 = vmatmul.mubr.bf16.gmra.mrb[0].mxu0 %v1364
      %v1471 = vpop.f32.mrb[0].mxu0
      %v1472 = vadd.f32 0.0, %v1471
      %v1473 = vpop.f32.mrb[0].mxu0
      %v1474 = vpop.f32.mrb[0].mxu0
      %v1475 = vpop.f32.mrb[0].mxu0
      %1476 = vmatprep.mubr.bf16.mxu0 0
      %1477 = vmatmul.mubr.bf16.gmra.mrb[0].mxu0 %v1367
      %v1478 = vpop.f32.mrb[0].mxu0
      %v1479 = vadd.f32 0.0, %v1478
      %v1480 = vpop.f32.mrb[0].mxu0
      %v1481 = vpop.f32.mrb[0].mxu0
      %v1482 = vadd.f32 0.0, %v1481
      %v1483 = vpop.f32.mrb[0].mxu0
      %1484 = vmatprep.mubr.bf16.mxu0 0
      %1485 = vmatmul.mubr.bf16.gmra.mrb[0].mxu0 %v1370
      %v1486 = vpop.f32.mrb[0].mxu0
      %v1487 = vpop.f32.mrb[0].mxu0
      %v1488 = vpop.f32.mrb[0].mxu0
      %v1489 = vadd.f32 0.0, %v1488
      %v1490 = vpop.f32.mrb[0].mxu0
      %1491 = vmatprep.mubr.bf16.mxu0 0
      %1492 = vmatmul.mubr.bf16.gmra.mrb[0].mxu0 %v1373
      %v1493 = vpop.f32.mrb[0].mxu0
      %v1494 = vadd.f32 0.0, %v1493
      %v1495 = vpop.f32.mrb[0].mxu0
      %v1496 = vpop.f32.mrb[0].mxu0
      %v1497 = vpop.f32.mrb[0].mxu0
      %1498 = vdwg.mxu0
      %v1499 = vadd.f32 %v1303, %v1413
      %v1500 = vadd.f32 %v1304, %v1416
      %v1501 = vadd.f32 %v1305, %v1423
      %v1502 = vadd.f32 %v1306, %v1428
      %v1503 = vadd.f32 %v1307, %v1435
      %v1504 = vadd.f32 %v1308, %v1438
      %v1505 = vadd.f32 %v1309, %v1445
      %v1506 = vadd.f32 %v1310, %v1450
      %v1507 = vadd.f32 %v1311, %v1457
      %v1508 = vadd.f32 %v1312, %v1460
      %v1509 = vadd.f32 %v1313, %v1467
      %v1510 = vadd.f32 %v1314, %v1472
      %v1511 = vadd.f32 %v1315, %v1479
      %v1512 = vadd.f32 %v1316, %v1482
      %v1513 = vadd.f32 %v1317, %v1489
      %v1514 = vadd.f32 %v1318, %v1494
      %v1515 = vpack.c.bf16 %v287, %v286
      %v1516 = vpack.c.bf16 %v289, %v288
      %v1517 = vpack.c.bf16 %v291, %v290
      %s1518 = scalar_lea.vmem %s1, 24
      %v1519 = vld [vmem:[%s1518] sm:$0xf]
      %v1521 = vsel %vm371, %v1515, 0
      %v1524 = vsel %vm371, %v1516, 0
      %v1527 = vsel %vm371, %v1517, 0
      %v1530 = vsel %vm408, %v1519, 0
      %1532 = vmatprep.subr.bf16.mxu0 0
      %1533 = vmatpush1.bf16.msra.mxu0 %v1530
      %1534 = vmatprep.subr.bf16.mxu0 0
      %1535 = vmatpush1.bf16.msra.mxu0 0
      %1536 = vmatprep.subr.bf16.mxu0 0
      %1537 = vmatpush1.bf16.msra.mxu0 0
      %1538 = vmatprep.subr.bf16.mxu0 0
      %1539 = vmatpush1.bf16.msra.mxu0 0
      %1540 = vmatprep.subr.bf16.mxu0 0
      %1541 = vmatpush1.bf16.msra.mxu0 0
      %1542 = vmatprep.subr.bf16.mxu0 0
      %1543 = vmatpush1.bf16.msra.mxu0 0
      %1544 = vmatprep.subr.bf16.mxu0 0
      %1545 = vmatpush1.bf16.msra.mxu0 0
      %1546 = vmatprep.subr.bf16.mxu0 0
      %1547 = vmatpush1.bf16.msra.mxu0 0
      %1548 = vmatprep.subr.bf16.mxu0 0
      %1549 = vmatpush1.bf16.msra.mxu0 0
      %1550 = vmatprep.subr.bf16.mxu0 0
      %1551 = vmatpush1.bf16.msra.mxu0 0
      %1552 = vmatprep.subr.bf16.mxu0 0
      %1553 = vmatpush1.bf16.msra.mxu0 0
      %1554 = vmatprep.subr.bf16.mxu0 0
      %1555 = vmatpush1.bf16.msra.mxu0 0
      %1556 = vmatprep.subr.bf16.mxu0 0
      %1557 = vmatpush1.bf16.msra.mxu0 0
      %1558 = vmatprep.subr.bf16.mxu0 0
      %1559 = vmatpush1.bf16.msra.mxu0 0
      %1560 = vmatprep.subr.bf16.mxu0 0
      %1561 = vmatpush1.bf16.msra.mxu0 0
      %1562 = vmatprep.subr.bf16.mxu0 0
      %1563 = vmatpush1.bf16.msra.mxu0 0
      %1564 = vmatprep.mubr.bf16.mxu0 0
      %1565 = vmatmul.mubr.bf16.gmra.mrb[0].mxu0 %v543
      %v1566 = vpop.f32.mrb[0].mxu0
      %v1567 = vadd.f32 0.0, %v1566
      %v1568 = vpop.f32.mrb[0].mxu0
      %v1569 = vpop.f32.mrb[0].mxu0
      %v1570 = vadd.f32 0.0, %v1569
      %v1571 = vpop.f32.mrb[0].mxu0
      %1572 = vmatprep.mubr.bf16.mxu0 0
      %1573 = vmatmul.mubr.bf16.gmra.mrb[0].mxu0 %v546
      %v1574 = vpop.f32.mrb[0].mxu0
      %v1575 = vpop.f32.mrb[0].mxu0
      %v1576 = vpop.f32.mrb[0].mxu0
      %v1577 = vadd.f32 0.0, %v1576
      %v1578 = vpop.f32.mrb[0].mxu0
      %1579 = vmatprep.mubr.bf16.mxu0 0
      %1580 = vmatmul.mubr.bf16.gmra.mrb[0].mxu0 %v549
      %v1581 = vpop.f32.mrb[0].mxu0
      %v1582 = vadd.f32 0.0, %v1581
      %v1583 = vpop.f32.mrb[0].mxu0
      %v1584 = vpop.f32.mrb[0].mxu0
      %v1585 = vpop.f32.mrb[0].mxu0
      %1586 = vmatprep.mubr.bf16.mxu0 0
      %1587 = vmatmul.mubr.bf16.gmra.mrb[0].mxu0 %v552
      %v1588 = vpop.f32.mrb[0].mxu0
      %v1589 = vadd.f32 0.0, %v1588
      %v1590 = vpop.f32.mrb[0].mxu0
      %v1591 = vpop.f32.mrb[0].mxu0
      %v1592 = vadd.f32 0.0, %v1591
      %v1593 = vpop.f32.mrb[0].mxu0
      %1594 = vmatprep.mubr.bf16.mxu0 0
      %1595 = vmatmul.mubr.bf16.gmra.mrb[0].mxu0 %v555
      %v1596 = vpop.f32.mrb[0].mxu0
      %v1597 = vpop.f32.mrb[0].mxu0
      %v1598 = vpop.f32.mrb[0].mxu0
      %v1599 = vadd.f32 0.0, %v1598
      %v1600 = vpop.f32.mrb[0].mxu0
      %1601 = vmatprep.mubr.bf16.mxu0 0
      %1602 = vmatmul.mubr.bf16.gmra.mrb[0].mxu0 %v558
      %v1603 = vpop.f32.mrb[0].mxu0
      %v1604 = vadd.f32 0.0, %v1603
      %v1605 = vpop.f32.mrb[0].mxu0
      %v1606 = vpop.f32.mrb[0].mxu0
      %v1607 = vpop.f32.mrb[0].mxu0
      %1608 = vmatprep.mubr.bf16.mxu0 0
      %1609 = vmatmul.mubr.bf16.gmra.mrb[0].mxu0 %v561
      %v1610 = vpop.f32.mrb[0].mxu0
      %v1611 = vadd.f32 0.0, %v1610
      %v1612 = vpop.f32.mrb[0].mxu0
      %v1613 = vpop.f32.mrb[0].mxu0
      %v1614 = vadd.f32 0.0, %v1613
      %v1615 = vpop.f32.mrb[0].mxu0
      %1616 = vmatprep.mubr.bf16.mxu0 0
      %1617 = vmatmul.mubr.bf16.gmra.mrb[0].mxu0 %v564
      %v1618 = vpop.f32.mrb[0].mxu0
      %v1619 = vpop.f32.mrb[0].mxu0
      %v1620 = vpop.f32.mrb[0].mxu0
      %v1621 = vadd.f32 0.0, %v1620
      %v1622 = vpop.f32.mrb[0].mxu0
      %1623 = vmatprep.mubr.bf16.mxu0 0
      %1624 = vmatmul.mubr.bf16.gmra.mrb[0].mxu0 %v567
      %v1625 = vpop.f32.mrb[0].mxu0
      %v1626 = vadd.f32 0.0, %v1625
      %v1627 = vpop.f32.mrb[0].mxu0
      %v1628 = vpop.f32.mrb[0].mxu0
      %v1629 = vpop.f32.mrb[0].mxu0
      %1630 = vmatprep.mubr.bf16.mxu0 0
      %1631 = vmatmul.mubr.bf16.gmra.mrb[0].mxu0 %v1521
      %v1632 = vpop.f32.mrb[0].mxu0
      %v1633 = vadd.f32 0.0, %v1632
      %v1634 = vpop.f32.mrb[0].mxu0
      %v1635 = vpop.f32.mrb[0].mxu0
      %v1636 = vadd.f32 0.0, %v1635
      %v1637 = vpop.f32.mrb[0].mxu0
      %1638 = vmatprep.mubr.bf16.mxu0 0
      %1639 = vmatmul.mubr.bf16.gmra.mrb[0].mxu0 %v1524
      %v1640 = vpop.f32.mrb[0].mxu0
      %v1641 = vpop.f32.mrb[0].mxu0
      %v1642 = vpop.f32.mrb[0].mxu0
      %v1643 = vadd.f32 0.0, %v1642
      %v1644 = vpop.f32.mrb[0].mxu0
      %1645 = vmatprep.mubr.bf16.mxu0 0
      %1646 = vmatmul.mubr.bf16.gmra.mrb[0].mxu0 %v1527
      %v1647 = vpop.f32.mrb[0].mxu0
      %v1648 = vadd.f32 0.0, %v1647
      %v1649 = vpop.f32.mrb[0].mxu0
      %v1650 = vpop.f32.mrb[0].mxu0
      %v1651 = vpop.f32.mrb[0].mxu0
      %1652 = vdwg.mxu0
      %v1653 = vadd.f32 %v1499, %v1567
      %v1654 = vadd.f32 %v1500, %v1570
      %v1655 = vadd.f32 %v1501, %v1577
      %v1656 = vadd.f32 %v1502, %v1582
      %v1657 = vadd.f32 %v1503, %v1589
      %v1658 = vadd.f32 %v1504, %v1592
      %v1659 = vadd.f32 %v1505, %v1599
      %v1660 = vadd.f32 %v1506, %v1604
      %v1661 = vadd.f32 %v1507, %v1611
      %v1662 = vadd.f32 %v1508, %v1614
      %v1663 = vadd.f32 %v1509, %v1621
      %v1664 = vadd.f32 %v1510, %v1626
      %v1665 = vadd.f32 %v1511, %v1633
      %v1666 = vadd.f32 %v1512, %v1636
      %v1667 = vadd.f32 %v1513, %v1643
      %v1668 = vadd.f32 %v1514, %v1648
      %v1669 = vrot.slane %v290, 1
      %v1670 = vrot.slane %v291, 1
      %v1671 = vsel %vm332, %v1669, %v1670
      %v1672 = vsel %vm332, %v1125, %v1669
      %v1673 = vsel %vm332, %v1670, %v305
      %v1674 = vpack.c.bf16 %v1127, %v1128
      %v1675 = vpack.c.bf16 %v1672, %v1126
      %v1676 = vpack.c.bf16 %v1673, %v1671
      %s1677 = scalar_lea.vmem %s1, 28
      %v1678 = vld [vmem:[%s1677] sm:$0xf]
      %v1680 = vsel %vm371, %v1674, 0
      %v1683 = vsel %vm371, %v1675, 0
      %v1686 = vsel %vm371, %v1676, 0
      %v1689 = vsel %vm408, %v1678, 0
      %1691 = vmatprep.subr.bf16.mxu0 0
      %1692 = vmatpush1.bf16.msra.mxu0 %v1689
      %1693 = vmatprep.subr.bf16.mxu0 0
      %1694 = vmatpush1.bf16.msra.mxu0 0
      %1695 = vmatprep.subr.bf16.mxu0 0
      %1696 = vmatpush1.bf16.msra.mxu0 0
      %1697 = vmatprep.subr.bf16.mxu0 0
      %1698 = vmatpush1.bf16.msra.mxu0 0
      %1699 = vmatprep.subr.bf16.mxu0 0
      %1700 = vmatpush1.bf16.msra.mxu0 0
      %1701 = vmatprep.subr.bf16.mxu0 0
      %1702 = vmatpush1.bf16.msra.mxu0 0
      %1703 = vmatprep.subr.bf16.mxu0 0
      %1704 = vmatpush1.bf16.msra.mxu0 0
      %1705 = vmatprep.subr.bf16.mxu0 0
      %1706 = vmatpush1.bf16.msra.mxu0 0
      %1707 = vmatprep.subr.bf16.mxu0 0
      %1708 = vmatpush1.bf16.msra.mxu0 0
      %1709 = vmatprep.subr.bf16.mxu0 0
      %1710 = vmatpush1.bf16.msra.mxu0 0
      %1711 = vmatprep.subr.bf16.mxu0 0
      %1712 = vmatpush1.bf16.msra.mxu0 0
      %1713 = vmatprep.subr.bf16.mxu0 0
      %1714 = vmatpush1.bf16.msra.mxu0 0
      %1715 = vmatprep.subr.bf16.mxu0 0
      %1716 = vmatpush1.bf16.msra.mxu0 0
      %1717 = vmatprep.subr.bf16.mxu0 0
      %1718 = vmatpush1.bf16.msra.mxu0 0
      %1719 = vmatprep.subr.bf16.mxu0 0
      %1720 = vmatpush1.bf16.msra.mxu0 0
      %1721 = vmatprep.subr.bf16.mxu0 0
      %1722 = vmatpush1.bf16.msra.mxu0 0
      %1723 = vmatprep.mubr.bf16.mxu0 0
      %1724 = vmatmul.mubr.bf16.gmra.mrb[0].mxu0 %v382
      %v1725 = vpop.f32.mrb[0].mxu0
      %v1726 = vadd.f32 0.0, %v1725
      %v1727 = vpop.f32.mrb[0].mxu0
      %v1728 = vpop.f32.mrb[0].mxu0
      %v1729 = vadd.f32 0.0, %v1728
      %v1730 = vpop.f32.mrb[0].mxu0
      %1731 = vmatprep.mubr.bf16.mxu0 0
      %1732 = vmatmul.mubr.bf16.gmra.mrb[0].mxu0 %v385
      %v1733 = vpop.f32.mrb[0].mxu0
      %v1734 = vpop.f32.mrb[0].mxu0
      %v1735 = vpop.f32.mrb[0].mxu0
      %v1736 = vadd.f32 0.0, %v1735
      %v1737 = vpop.f32.mrb[0].mxu0
      %1738 = vmatprep.mubr.bf16.mxu0 0
      %1739 = vmatmul.mubr.bf16.gmra.mrb[0].mxu0 %v388
      %v1740 = vpop.f32.mrb[0].mxu0
      %v1741 = vadd.f32 0.0, %v1740
      %v1742 = vpop.f32.mrb[0].mxu0
      %v1743 = vpop.f32.mrb[0].mxu0
      %v1744 = vpop.f32.mrb[0].mxu0
      %1745 = vmatprep.mubr.bf16.mxu0 0
      %1746 = vmatmul.mubr.bf16.gmra.mrb[0].mxu0 %v391
      %v1747 = vpop.f32.mrb[0].mxu0
      %v1748 = vadd.f32 0.0, %v1747
      %v1749 = vpop.f32.mrb[0].mxu0
      %v1750 = vpop.f32.mrb[0].mxu0
      %v1751 = vadd.f32 0.0, %v1750
      %v1752 = vpop.f32.mrb[0].mxu0
      %1753 = vmatprep.mubr.bf16.mxu0 0
      %1754 = vmatmul.mubr.bf16.gmra.mrb[0].mxu0 %v394
      %v1755 = vpop.f32.mrb[0].mxu0
      %v1756 = vpop.f32.mrb[0].mxu0
      %v1757 = vpop.f32.mrb[0].mxu0
      %v1758 = vadd.f32 0.0, %v1757
      %v1759 = vpop.f32.mrb[0].mxu0
      %1760 = vmatprep.mubr.bf16.mxu0 0
      %1761 = vmatmul.mubr.bf16.gmra.mrb[0].mxu0 %v397
      %v1762 = vpop.f32.mrb[0].mxu0
      %v1763 = vadd.f32 0.0, %v1762
      %v1764 = vpop.f32.mrb[0].mxu0
      %v1765 = vpop.f32.mrb[0].mxu0
      %v1766 = vpop.f32.mrb[0].mxu0
      %1767 = vmatprep.mubr.bf16.mxu0 0
      %1768 = vmatmul.mubr.bf16.gmra.mrb[0].mxu0 %v400
      %v1769 = vpop.f32.mrb[0].mxu0
      %v1770 = vadd.f32 0.0, %v1769
      %v1771 = vpop.f32.mrb[0].mxu0
      %v1772 = vpop.f32.mrb[0].mxu0
      %v1773 = vadd.f32 0.0, %v1772
      %v1774 = vpop.f32.mrb[0].mxu0
      %1775 = vmatprep.mubr.bf16.mxu0 0
      %1776 = vmatmul.mubr.bf16.gmra.mrb[0].mxu0 %v403
      %v1777 = vpop.f32.mrb[0].mxu0
      %v1778 = vpop.f32.mrb[0].mxu0
      %v1779 = vpop.f32.mrb[0].mxu0
      %v1780 = vadd.f32 0.0, %v1779
      %v1781 = vpop.f32.mrb[0].mxu0
      %1782 = vmatprep.mubr.bf16.mxu0 0
      %1783 = vmatmul.mubr.bf16.gmra.mrb[0].mxu0 %v406
      %v1784 = vpop.f32.mrb[0].mxu0
      %v1785 = vadd.f32 0.0, %v1784
      %v1786 = vpop.f32.mrb[0].mxu0
      %v1787 = vpop.f32.mrb[0].mxu0
      %v1788 = vpop.f32.mrb[0].mxu0
      %1789 = vmatprep.mubr.bf16.mxu0 0
      %1790 = vmatmul.mubr.bf16.gmra.mrb[0].mxu0 %v1680
      %v1791 = vpop.f32.mrb[0].mxu0
      %v1792 = vadd.f32 0.0, %v1791
      %v1793 = vpop.f32.mrb[0].mxu0
      %v1794 = vpop.f32.mrb[0].mxu0
      %v1795 = vadd.f32 0.0, %v1794
      %v1796 = vpop.f32.mrb[0].mxu0
      %1797 = vmatprep.mubr.bf16.mxu0 0
      %1798 = vmatmul.mubr.bf16.gmra.mrb[0].mxu0 %v1683
      %v1799 = vpop.f32.mrb[0].mxu0
      %v1800 = vpop.f32.mrb[0].mxu0
      %v1801 = vpop.f32.mrb[0].mxu0
      %v1802 = vadd.f32 0.0, %v1801
      %v1803 = vpop.f32.mrb[0].mxu0
      %1804 = vmatprep.mubr.bf16.mxu0 0
      %1805 = vmatmul.mubr.bf16.gmra.mrb[0].mxu0 %v1686
      %v1806 = vpop.f32.mrb[0].mxu0
      %v1807 = vadd.f32 0.0, %v1806
      %v1808 = vpop.f32.mrb[0].mxu0
      %v1809 = vpop.f32.mrb[0].mxu0
      %v1810 = vpop.f32.mrb[0].mxu0
      %1811 = vdwg.mxu0
      %v1812 = vadd.f32 %v1653, %v1726
      %v1813 = vadd.f32 %v1654, %v1729
      %v1814 = vadd.f32 %v1655, %v1736
      %v1815 = vadd.f32 %v1656, %v1741
      %v1816 = vadd.f32 %v1657, %v1748
      %v1817 = vadd.f32 %v1658, %v1751
      %v1818 = vadd.f32 %v1659, %v1758
      %v1819 = vadd.f32 %v1660, %v1763
      %v1820 = vadd.f32 %v1661, %v1770
      %v1821 = vadd.f32 %v1662, %v1773
      %v1822 = vadd.f32 %v1663, %v1780
      %v1823 = vadd.f32 %v1664, %v1785
      %v1824 = vadd.f32 %v1665, %v1792
      %v1825 = vadd.f32 %v1666, %v1795
      %v1826 = vadd.f32 %v1667, %v1802
      %v1827 = vadd.f32 %v1668, %v1807
      %v1828 = vrot.slane %v290, 2
      %v1829 = vrot.slane %v291, 2
      %v1830 = vsel %vm718, %v1828, %v1829
      %v1831 = vsel %vm718, %v1321, %v1828
      %v1832 = vsel %vm718, %v1829, %v693
      %v1833 = vpack.c.bf16 %v1323, %v1324
      %v1834 = vpack.c.bf16 %v1831, %v1322
      %v1835 = vpack.c.bf16 %v1832, %v1830
      %s1836 = scalar_lea.vmem %s1, 32
      %v1837 = vld [vmem:[%s1836] sm:$0xf]
      %v1839 = vsel %vm371, %v1833, 0
      %v1842 = vsel %vm371, %v1834, 0
      %v1845 = vsel %vm371, %v1835, 0
      %v1848 = vsel %vm408, %v1837, 0
      %1850 = vmatprep.subr.bf16.mxu0 0
      %1851 = vmatpush1.bf16.msra.mxu0 %v1848
      %1852 = vmatprep.subr.bf16.mxu0 0
      %1853 = vmatpush1.bf16.msra.mxu0 0
      %1854 = vmatprep.subr.bf16.mxu0 0
      %1855 = vmatpush1.bf16.msra.mxu0 0
      %1856 = vmatprep.subr.bf16.mxu0 0
      %1857 = vmatpush1.bf16.msra.mxu0 0
      %1858 = vmatprep.subr.bf16.mxu0 0
      %1859 = vmatpush1.bf16.msra.mxu0 0
      %1860 = vmatprep.subr.bf16.mxu0 0
      %1861 = vmatpush1.bf16.msra.mxu0 0
      %1862 = vmatprep.subr.bf16.mxu0 0
      %1863 = vmatpush1.bf16.msra.mxu0 0
      %1864 = vmatprep.subr.bf16.mxu0 0
      %1865 = vmatpush1.bf16.msra.mxu0 0
      %1866 = vmatprep.subr.bf16.mxu0 0
      %1867 = vmatpush1.bf16.msra.mxu0 0
      %1868 = vmatprep.subr.bf16.mxu0 0
      %1869 = vmatpush1.bf16.msra.mxu0 0
      %1870 = vmatprep.subr.bf16.mxu0 0
      %1871 = vmatpush1.bf16.msra.mxu0 0
      %1872 = vmatprep.subr.bf16.mxu0 0
      %1873 = vmatpush1.bf16.msra.mxu0 0
      %1874 = vmatprep.subr.bf16.mxu0 0
      %1875 = vmatpush1.bf16.msra.mxu0 0
      %1876 = vmatprep.subr.bf16.mxu0 0
      %1877 = vmatpush1.bf16.msra.mxu0 0
      %1878 = vmatprep.subr.bf16.mxu0 0
      %1879 = vmatpush1.bf16.msra.mxu0 0
      %1880 = vmatprep.subr.bf16.mxu0 0
      %1881 = vmatpush1.bf16.msra.mxu0 0
      %1882 = vmatprep.mubr.bf16.mxu0 0
      %1883 = vmatmul.mubr.bf16.gmra.mrb[0].mxu0 %v767
      %v1884 = vpop.f32.mrb[0].mxu0
      %v1885 = vadd.f32 0.0, %v1884
      %v1886 = vpop.f32.mrb[0].mxu0
      %v1887 = vpop.f32.mrb[0].mxu0
      %v1888 = vadd.f32 0.0, %v1887
      %v1889 = vpop.f32.mrb[0].mxu0
      %1890 = vmatprep.mubr.bf16.mxu0 0
      %1891 = vmatmul.mubr.bf16.gmra.mrb[0].mxu0 %v770
      %v1892 = vpop.f32.mrb[0].mxu0
      %v1893 = vpop.f32.mrb[0].mxu0
      %v1894 = vpop.f32.mrb[0].mxu0
      %v1895 = vadd.f32 0.0, %v1894
      %v1896 = vpop.f32.mrb[0].mxu0
      %1897 = vmatprep.mubr.bf16.mxu0 0
      %1898 = vmatmul.mubr.bf16.gmra.mrb[0].mxu0 %v773
      %v1899 = vpop.f32.mrb[0].mxu0
      %v1900 = vadd.f32 0.0, %v1899
      %v1901 = vpop.f32.mrb[0].mxu0
      %v1902 = vpop.f32.mrb[0].mxu0
      %v1903 = vpop.f32.mrb[0].mxu0
      %1904 = vmatprep.mubr.bf16.mxu0 0
      %1905 = vmatmul.mubr.bf16.gmra.mrb[0].mxu0 %v776
      %v1906 = vpop.f32.mrb[0].mxu0
      %v1907 = vadd.f32 0.0, %v1906
      %v1908 = vpop.f32.mrb[0].mxu0
      %v1909 = vpop.f32.mrb[0].mxu0
      %v1910 = vadd.f32 0.0, %v1909
      %v1911 = vpop.f32.mrb[0].mxu0
      %1912 = vmatprep.mubr.bf16.mxu0 0
      %1913 = vmatmul.mubr.bf16.gmra.mrb[0].mxu0 %v779
      %v1914 = vpop.f32.mrb[0].mxu0
      %v1915 = vpop.f32.mrb[0].mxu0
      %v1916 = vpop.f32.mrb[0].mxu0
      %v1917 = vadd.f32 0.0, %v1916
      %v1918 = vpop.f32.mrb[0].mxu0
      %1919 = vmatprep.mubr.bf16.mxu0 0
      %1920 = vmatmul.mubr.bf16.gmra.mrb[0].mxu0 %v782
      %v1921 = vpop.f32.mrb[0].mxu0
      %v1922 = vadd.f32 0.0, %v1921
      %v1923 = vpop.f32.mrb[0].mxu0
      %v1924 = vpop.f32.mrb[0].mxu0
      %v1925 = vpop.f32.mrb[0].mxu0
      %1926 = vmatprep.mubr.bf16.mxu0 0
      %1927 = vmatmul.mubr.bf16.gmra.mrb[0].mxu0 %v785
      %v1928 = vpop.f32.mrb[0].mxu0
      %v1929 = vadd.f32 0.0, %v1928
      %v1930 = vpop.f32.mrb[0].mxu0
      %v1931 = vpop.f32.mrb[0].mxu0
      %v1932 = vadd.f32 0.0, %v1931
      %v1933 = vpop.f32.mrb[0].mxu0
      %1934 = vmatprep.mubr.bf16.mxu0 0
      %1935 = vmatmul.mubr.bf16.gmra.mrb[0].mxu0 %v788
      %v1936 = vpop.f32.mrb[0].mxu0
      %v1937 = vpop.f32.mrb[0].mxu0
      %v1938 = vpop.f32.mrb[0].mxu0
      %v1939 = vadd.f32 0.0, %v1938
      %v1940 = vpop.f32.mrb[0].mxu0
      %1941 = vmatprep.mubr.bf16.mxu0 0
      %1942 = vmatmul.mubr.bf16.gmra.mrb[0].mxu0 %v791
      %v1943 = vpop.f32.mrb[0].mxu0
      %v1944 = vadd.f32 0.0, %v1943
      %v1945 = vpop.f32.mrb[0].mxu0
      %v1946 = vpop.f32.mrb[0].mxu0
      %v1947 = vpop.f32.mrb[0].mxu0
      %1948 = vmatprep.mubr.bf16.mxu0 0
      %1949 = vmatmul.mubr.bf16.gmra.mrb[0].mxu0 %v1839
      %v1950 = vpop.f32.mrb[0].mxu0
      %v1951 = vadd.f32 0.0, %v1950
      %v1952 = vpop.f32.mrb[0].mxu0
      %v1953 = vpop.f32.mrb[0].mxu0
      %v1954 = vadd.f32 0.0, %v1953
      %v1955 = vpop.f32.mrb[0].mxu0
      %1956 = vmatprep.mubr.bf16.mxu0 0
      %1957 = vmatmul.mubr.bf16.gmra.mrb[0].mxu0 %v1842
      %v1958 = vpop.f32.mrb[0].mxu0
      %v1959 = vpop.f32.mrb[0].mxu0
      %v1960 = vpop.f32.mrb[0].mxu0
      %v1961 = vadd.f32 0.0, %v1960
      %v1962 = vpop.f32.mrb[0].mxu0
      %1963 = vmatprep.mubr.bf16.mxu0 0
      %1964 = vmatmul.mubr.bf16.gmra.mrb[0].mxu0 %v1845
      %v1965 = vpop.f32.mrb[0].mxu0
      %v1966 = vadd.f32 0.0, %v1965
      %v1967 = vpop.f32.mrb[0].mxu0
      %v1968 = vpop.f32.mrb[0].mxu0
      %v1969 = vpop.f32.mrb[0].mxu0
      %1970 = vdwg.mxu0
      %v1971 = vadd.f32 %v1812, %v1885
      %v1972 = vadd.f32 %v1813, %v1888
      %v1973 = vadd.f32 %v1814, %v1895
      %v1974 = vadd.f32 %v1815, %v1900
      %v1975 = vadd.f32 %v1816, %v1907
      %v1976 = vadd.f32 %v1817, %v1910
      %v1977 = vadd.f32 %v1818, %v1917
      %v1978 = vadd.f32 %v1819, %v1922
      %v1979 = vadd.f32 %v1820, %v1929
      %v1980 = vadd.f32 %v1821, %v1932
      %v1981 = vadd.f32 %v1822, %v1939
      %v1982 = vadd.f32 %v1823, %v1944
      %v1983 = vadd.f32 %v1824, %v1951
      %v1984 = vadd.f32 %v1825, %v1954
      %v1985 = vadd.f32 %v1826, %v1961
      %v1986 = vadd.f32 %v1827, %v1966
      %v1987 = vpack.c.bf16 %v1972, %v1971
      %v1988 = vpack.c.bf16 %v1974, %v1973
      %v1989 = vpack.c.bf16 %v1976, %v1975
      %v1990 = vpack.c.bf16 %v1978, %v1977
      %v1991 = vpack.c.bf16 %v1980, %v1979
      %v1992 = vpack.c.bf16 %v1982, %v1981
      %v1993 = vpack.c.bf16 %v1984, %v1983
      %v1994 = vpack.c.bf16 %v1986, %v1985
      %v2003 = vunpack.c.l.b16 %v1987
      %v2004 = vunpack.c.h.b16 %v1987
      %v2005 = vunpack.c.l.b16 %v1988
      %v2006 = vunpack.c.h.b16 %v1988
      %v2007 = vunpack.c.l.b16 %v1989
      %v2008 = vunpack.c.h.b16 %v1989
      %v2009 = vunpack.c.l.b16 %v1990
      %v2010 = vunpack.c.h.b16 %v1990
      %v2011 = vunpack.c.l.b16 %v1991
      %v2012 = vunpack.c.h.b16 %v1991
      %v2013 = vunpack.c.l.b16 %v1992
      %v2014 = vunpack.c.h.b16 %v1992
      %v2015 = vunpack.c.l.b16 %v1993
      %v2016 = vunpack.c.h.b16 %v1993
      %v2017 = vunpack.c.l.b16 %v1994
      %v2018 = vunpack.c.h.b16 %v1994
      %v2019 = vpack.c.b16 %v2003, %v2003
      %v2020 = vpack.c.b16 %v2004, %v2004
      %v2021 = vpack.c.b16 %v2005, %v2005
      %v2022 = vpack.c.b16 %v2006, %v2006
      %v2023 = vpack.c.b16 %v2007, %v2007
      %v2024 = vpack.c.b16 %v2008, %v2008
      %v2025 = vpack.c.b16 %v2009, %v2009
      %v2026 = vpack.c.b16 %v2010, %v2010
      %v2027 = vpack.c.b16 %v2011, %v2011
      %v2028 = vpack.c.b16 %v2012, %v2012
      %v2029 = vpack.c.b16 %v2013, %v2013
      %v2030 = vpack.c.b16 %v2014, %v2014
      %v2031 = vpack.c.b16 %v2015, %v2015
      %v2032 = vpack.c.b16 %v2016, %v2016
      %v2033 = vpack.c.b16 %v2017, %v2017
      %v2034 = vpack.c.b16 %v2018, %v2018
      %vm2051 = vcmask 27648
      %2052 = vst.msk [vmem:[%s221] sm:$0xf] %vm2051, %v2019
      %2053 = vst.msk [vmem:[%s221 + $0x4] sm:$0xf] %vm2051, %v2020
      %2054 = vst.msk [vmem:[%s221 + $0x8] sm:$0xf] %vm2051, %v2021
      %2055 = vst.msk [vmem:[%s221 + $0xc] sm:$0xf] %vm2051, %v2022
      %2056 = vst.msk [vmem:[%s221 + $0x10] sm:$0xf] %vm2051, %v2023
      %2057 = vst.msk [vmem:[%s221 + $0x14] sm:$0xf] %vm2051, %v2024
      %2058 = vst.msk [vmem:[%s221 + $0x18] sm:$0xf] %vm2051, %v2025
      %2059 = vst.msk [vmem:[%s221 + $0x1c] sm:$0xf] %vm2051, %v2026
      %2060 = vst.msk [vmem:[%s221 + $0x20] sm:$0xf] %vm2051, %v2027
      %2061 = vst.msk [vmem:[%s221 + $0x24] sm:$0xf] %vm2051, %v2028
      %2062 = vst.msk [vmem:[%s221 + $0x28] sm:$0xf] %vm2051, %v2029
      %2063 = vst.msk [vmem:[%s221 + $0x2c] sm:$0xf] %vm2051, %v2030
      %2064 = vst.msk [vmem:[%s221 + $0x30] sm:$0xf] %vm2051, %v2031
      %2065 = vst.msk [vmem:[%s221 + $0x34] sm:$0xf] %vm2051, %v2032
      %2066 = vst.msk [vmem:[%s221 + $0x38] sm:$0xf] %vm2051, %v2033
      %2067 = vst.msk [vmem:[%s221 + $0x3c] sm:$0xf] %vm2051, %v2034
      %v2068 = vunpack.c.l.bf16 %v1987
      %v2069 = vunpack.c.h.bf16 %v1987
      %v2070 = vunpack.c.l.bf16 %v1988
      %v2071 = vunpack.c.h.bf16 %v1988
      %v2072 = vunpack.c.l.bf16 %v1989
      %v2073 = vunpack.c.h.bf16 %v1989
      %v2074 = vunpack.c.l.bf16 %v1990
      %v2075 = vunpack.c.h.bf16 %v1990
      %v2076 = vunpack.c.l.bf16 %v1991
      %v2077 = vunpack.c.h.bf16 %v1991
      %v2078 = vunpack.c.l.bf16 %v1992
      %v2079 = vunpack.c.h.bf16 %v1992
      %v2080 = vunpack.c.l.bf16 %v1993
      %v2081 = vunpack.c.h.bf16 %v1993
      %v2082 = vunpack.c.l.bf16 %v1994
      %v2083 = vunpack.c.h.bf16 %v1994
      %vm2084 = vcmask 31744
      %v2085 = vsel %vm2084, %v2068, 0.0
      %v2086 = vsel %vm2084, %v2069, 0.0
      %v2087 = vadd.f32 %v2085, %v2086
      %v2088 = vsel %vm2084, %v2070, 0.0
      %v2089 = vadd.f32 %v2087, %v2088
      %v2090 = vsel %vm2084, %v2071, 0.0
      %v2091 = vadd.f32 %v2089, %v2090
      %v2092 = vsel %vm2084, %v2072, 0.0
      %v2093 = vadd.f32 %v2091, %v2092
      %v2094 = vsel %vm2084, %v2073, 0.0
      %v2095 = vadd.f32 %v2093, %v2094
      %v2096 = vsel %vm2084, %v2074, 0.0
      %v2097 = vadd.f32 %v2095, %v2096
      %v2098 = vsel %vm2084, %v2075, 0.0
      %v2099 = vadd.f32 %v2097, %v2098
      %v2100 = vsel %vm2084, %v2076, 0.0
      %v2101 = vadd.f32 %v2099, %v2100
      %v2102 = vsel %vm2084, %v2077, 0.0
      %v2103 = vadd.f32 %v2101, %v2102
      %v2104 = vsel %vm2084, %v2078, 0.0
      %v2105 = vadd.f32 %v2103, %v2104
      %v2106 = vsel %vm2084, %v2079, 0.0
      %v2107 = vadd.f32 %v2105, %v2106
      %v2108 = vsel %vm2084, %v2080, 0.0
      %v2109 = vadd.f32 %v2107, %v2108
      %v2110 = vsel %vm2084, %v2081, 0.0
      %v2111 = vadd.f32 %v2109, %v2110
      %v2112 = vsel %vm2084, %v2082, 0.0
      %v2113 = vadd.f32 %v2111, %v2112
      %v2114 = vsel %vm2084, %v2083, 0.0
      %v2115 = vadd.f32 %v2113, %v2114
      %v2116 = vrot.slane %v2115, 4
      %v2117 = vadd.f32 %v2115, %v2116
      %v2118 = vrot.slane %v2117, 2
      %v2119 = vadd.f32 %v2117, %v2118
      %v2120 = vrot.slane %v2119, 1
      %v2121 = vadd.f32 %v2119, %v2120
      %v2122 = vrcp.pop 128.0
      %v2123 = vmul.f32 %v2121, %v2122
      %v2124 = vsub.f32 %v2068, %v2123
      %v2125 = vsub.f32 %v2069, %v2123
      %v2126 = vsub.f32 %v2070, %v2123
      %v2127 = vsub.f32 %v2071, %v2123
      %v2128 = vsub.f32 %v2072, %v2123
      %v2129 = vsub.f32 %v2073, %v2123
      %v2130 = vsub.f32 %v2074, %v2123
      %v2131 = vsub.f32 %v2075, %v2123
      %v2132 = vsub.f32 %v2076, %v2123
      %v2133 = vsub.f32 %v2077, %v2123
      %v2134 = vsub.f32 %v2078, %v2123
      %v2135 = vsub.f32 %v2079, %v2123
      %v2136 = vsub.f32 %v2080, %v2123
      %v2137 = vsub.f32 %v2081, %v2123
      %v2138 = vsub.f32 %v2082, %v2123
      %v2139 = vsub.f32 %v2083, %v2123
      %v2140 = vmul.f32 %v2124, %v2124
      %v2141 = vmul.f32 %v2125, %v2125
      %v2142 = vmul.f32 %v2126, %v2126
      %v2143 = vmul.f32 %v2127, %v2127
      %v2144 = vmul.f32 %v2128, %v2128
      %v2145 = vmul.f32 %v2129, %v2129
      %v2146 = vmul.f32 %v2130, %v2130
      %v2147 = vmul.f32 %v2131, %v2131
      %v2148 = vmul.f32 %v2132, %v2132
      %v2149 = vmul.f32 %v2133, %v2133
      %v2150 = vmul.f32 %v2134, %v2134
      %v2151 = vmul.f32 %v2135, %v2135
      %v2152 = vmul.f32 %v2136, %v2136
      %v2153 = vmul.f32 %v2137, %v2137
      %v2154 = vmul.f32 %v2138, %v2138
      %v2155 = vmul.f32 %v2139, %v2139
      %v2156 = vsel %vm2084, %v2140, 0.0
      %v2157 = vsel %vm2084, %v2141, 0.0
      %v2158 = vadd.f32 %v2156, %v2157
      %v2159 = vsel %vm2084, %v2142, 0.0
      %v2160 = vadd.f32 %v2158, %v2159
      %v2161 = vsel %vm2084, %v2143, 0.0
      %v2162 = vadd.f32 %v2160, %v2161
      %v2163 = vsel %vm2084, %v2144, 0.0
      %v2164 = vadd.f32 %v2162, %v2163
      %v2165 = vsel %vm2084, %v2145, 0.0
      %v2166 = vadd.f32 %v2164, %v2165
      %v2167 = vsel %vm2084, %v2146, 0.0
      %v2168 = vadd.f32 %v2166, %v2167
      %v2169 = vsel %vm2084, %v2147, 0.0
      %v2170 = vadd.f32 %v2168, %v2169
      %v2171 = vsel %vm2084, %v2148, 0.0
      %v2172 = vadd.f32 %v2170, %v2171
      %v2173 = vsel %vm2084, %v2149, 0.0
      %v2174 = vadd.f32 %v2172, %v2173
      %v2175 = vsel %vm2084, %v2150, 0.0
      %v2176 = vadd.f32 %v2174, %v2175
      %v2177 = vsel %vm2084, %v2151, 0.0
      %v2178 = vadd.f32 %v2176, %v2177
      %v2179 = vsel %vm2084, %v2152, 0.0
      %v2180 = vadd.f32 %v2178, %v2179
      %v2181 = vsel %vm2084, %v2153, 0.0
      %v2182 = vadd.f32 %v2180, %v2181
      %v2183 = vsel %vm2084, %v2154, 0.0
      %v2184 = vadd.f32 %v2182, %v2183
      %v2185 = vsel %vm2084, %v2155, 0.0
      %v2186 = vadd.f32 %v2184, %v2185
      %v2187 = vrot.slane %v2186, 4
      %v2188 = vadd.f32 %v2186, %v2187
      %v2189 = vrot.slane %v2188, 2
      %v2190 = vadd.f32 %v2188, %v2189
      %v2191 = vrot.slane %v2190, 1
      %v2192 = vadd.f32 %v2190, %v2191
      %vm2193 = vcmask 1040384
      %v2194 = vsel %vm2193, %v2121, %v2192
      %vm2195 = vcmask 25600
      %2196 = vst.msk [vmem:[%s230] sm:$0x3] %vm2195, %v2194
      %s2197 = smul.u32 8, %s20
      %p2198 = scmp.lt.s32.totalorder %s19, 1
      %s2199 = scalar_select %p2198, %s19, 1
      %p2200 = scmp.lt.s32.totalorder %s2197, 15
      %s2201 = scalar_select %p2200, %s2197, 15
      %s2202 = smul.addr %s2201, 2
      %s2203 = smul.addr %s2199, 32
      %s2204 = sadd.s32 %s2202, %s2203
      %s2205 = smul.addr %s2204, 4
      %s2206 = scalar_lea.vmem %s2, %s2205
      %p2207 = scmp.lt.s32.totalorder %s19, 1
      %s2208 = scalar_select %p2207, %s19, 1
      %p2209 = scmp.lt.s32.totalorder %s20, 1
      %s2210 = scalar_select %p2209, %s20, 1
      %s2211 = smul.addr %s2208, 2
      %s2212 = sadd.s32 %s2210, %s2211
      %s2213 = smul.addr %s2212, 2
      %s2214 = scalar_lea.vmem %s3, %s2213
      // Predicated region
      $region29: #{up_forward.2} parent=27 // pred_check
        %p2215 = pneg %p96
      $region30: #{up_forward.2} parent=27 // pred_check_branch
        %2217 = sbr.rel (%p2215) target = $region32
      $region31: #{up_forward.2} parent=27 // pred_region
        %s2218 = smul.u32 8, %s20
      $region32: #{up_forward.2} parent=27 // pred_fallthru
        _
      // Predicated region
      $region33: #{up_forward.2} parent=27 // pred_check
        %p2219 = pneg %p124
      $region34: #{up_forward.2} parent=27 // pred_check_branch
        %2221 = sbr.rel (%p2219) target = $region36
      $region35: #{up_forward.2} parent=27 // pred_region
        _
      $region36: #{up_forward.2} parent=27 // pred_fallthru
        _
    $region28: #{up_forward.2} parent=5 // pred_fallthru
      _
    %p2222 = scmp.le.s32.totalorder 2, %s10
    // Predicated region
    $region37: #{up_forward.2} parent=5 // pred_check
      %p2223 = pneg %p2222
    $region38: #{up_forward.2} parent=5 // pred_check_branch
      %2225 = sbr.rel (%p2223) target = $region40
    $region39: #{up_forward.2} parent=5 // pred_region
      %s2226 = ssub.s32 %s10, 2
      // Predicated region
      $region41: #{up_forward.2} parent=39 // pred_check
        %p2227 = pneg %p102
      $region42: #{up_forward.2} parent=39 // pred_check_branch
        %2229 = sbr.rel (%p2227) target = $region44
      $region43: #{up_forward.2} parent=39 // pred_region
        %s2230 = smul.u32 8, %s22
        %p2231 = scmp.lt.s32.totalorder %s21, 1
        %s2232 = scalar_select %p2231, %s21, 1
        %p2233 = scmp.lt.s32.totalorder %s2230, 15
        %s2234 = scalar_select %p2233, %s2230, 15
        %s2235 = smul.addr %s2234, 2
        %s2236 = smul.addr %s2232, 32
        %s2237 = sadd.s32 %s2235, %s2236
        %s2238 = smul.addr %s2237, 4
        %s2239 = scalar_lea.vmem %s2, %s2238
      $region44: #{up_forward.2} parent=39 // pred_fallthru
        _
      // Predicated region
      $region45: #{up_forward.2} parent=39 // pred_check
        %p2240 = pneg %p130
      $region46: #{up_forward.2} parent=39 // pred_check_branch
        %2242 = sbr.rel (%p2240) target = $region48
      $region47: #{up_forward.2} parent=39 // pred_region
        %p2243 = scmp.lt.s32.totalorder %s21, 1
        %s2244 = scalar_select %p2243, %s21, 1
        %p2245 = scmp.lt.s32.totalorder %s22, 1
        %s2246 = scalar_select %p2245, %s22, 1
        %s2247 = smul.addr %s2244, 2
        %s2248 = sadd.s32 %s2246, %s2247
        %s2249 = smul.addr %s2248, 2
        %s2250 = scalar_lea.vmem %s3, %s2249
      $region48: #{up_forward.2} parent=39 // pred_fallthru
        _
    $region40: #{up_forward.2} parent=5 // pred_fallthru
      _
  $region6: #{up_forward.2} parent=0 // loop_footer
    %s14 = sadd.s32 1, %s10
  $region7: #{up_forward.2} parent=0 // loop_footer_branch
    %9 = sbr.rel target = $region3
  $region8: #{up_forward.2} parent=0 // loop_exit
    _

// kernel: up_forward.3
$region0: #{up_forward.3}
  #allocation0 [shape = 'u32[]', space=smem, size = 0x4, offset = 0x4, fixed_abs, tag = 'smem constant byte address 0x4 - core index']
  #allocation1 [shape = 'u32[144,128]{1,0:T(1,128)}', space=vmem, size = 0x12000, scoped, tag = 'internal scratch']
  %s0 = inlined_call_operand.vmem [shape: bf16[2,2,10,24,4], index: 0, kind: input, shape index: {}]
  %s1 = inlined_call_operand.vmem [shape: f32[1,4], index: 1, kind: input, shape index: {}]
  %s2 = inlined_call_operand.vmem [shape: f32[1,4], index: 2, kind: input, shape index: {}]
  %s3 = inlined_call_operand.vmem [shape: bf16[9,4,4], index: 3, kind: input, shape index: {}]
  %s4 = inlined_call_operand.vmem [shape: f32[2,16,16,4], index: 4, kind: output, shape index: {}]
  %s5 = sld [smem:[#allocation0]]
  $region49: #{up_forward.3} parent=0
    _
  %s7 = ssub.s32 1, %s5
  %s8 = scalar_select 0, %s7, %s5
  loop: start=0, step=1, limit=6
  $region2: #{up_forward.3} parent=0 // loop_pre_header
    _
  $region3: #{up_forward.3} parent=0 // loop_header
    %s10 = sphi 0, %s14
    %p11 = scmp.ge.s32.totalorder %s10, 6
    %s17 = sphi 0, %s29
    %s18 = sphi 0, %s25
    %s19 = sphi 0, %s17
    %s20 = sphi 0, %s18
    %s21 = sphi 0, %s19
    %s22 = sphi 0, %s20
    %s34 = sphi 0, %s36
    %s37 = sphi 0, %s34
    %s38 = sphi 0, %s37
    %s54 = sphi 0, %s38
    %s58 = sphi 0, %s58
    %s60 = sphi 0, %s58
    %s61 = sphi 0, %s60
    %s75 = sphi 0, %s61
    %s79 = sphi 0, %s79
    %s81 = sphi 0, %s79
    %s82 = sphi 0, %s81
    %s96 = sphi 0, %s82
    %s100 = sphi 0, %s100
    %s102 = sphi 0, %s100
    %s103 = sphi 0, %s102
    %s117 = sphi 0, %s103
    %s125 = sphi 0, %s127
    %s128 = sphi 0, %s125
    %s129 = sphi 0, %s128
    %s145 = sphi 0, %s129
  $region4: #{up_forward.3} parent=0 // loop_header_branch
    %13 = sbr.rel (%p11) target = $region8
  $region5: #{up_forward.3} parent=0 // loop_body
    %s15 = ssub.s32 %s10, 1
    %s16 = ssub.s32 %s10, 2
    %s23 = sadd.s32 1, %s18
    %p24 = scmp.ge.s32.totalorder %s23, 2
    %s25 = scalar_select %p24, 0, %s23
    %s26 = sadd.s32 1, %s17
    %s27 = scalar_select %p24, %s26, %s17
    %p28 = scmp.ge.s32.totalorder %s27, 2
    %s29 = scalar_select %p28, 0, %s27
    %s30 = ssub.s32 %s17, %s29
    %s31 = ssub.s32 %s18, %s25
    %s32 = sor.u32 %s30, %s31
    %p33 = scmp.eq.s32.totalorder %s32, 0
    %s35 = sadd.s32 %s34, 1
    %s36 = scalar_select %p33, %s34, %s35
    %p39 = pneg %p33
    %p40 = scmp.eq.s32.totalorder %s10, 3
    %p41 = por %p39, %p40
    %p42 = scmp.ne.s32.totalorder %s34, %s37
    %p43 = scmp.eq.s32.totalorder %s10, 0
    %p44 = por %p42, %p43
    %p45 = scmp.ne.s32.totalorder %s34, %s37
    %p46 = scmp.eq.s32.totalorder %s15, 3
    %p47 = por %p45, %p46
    %p48 = scmp.ne.s32.totalorder %s37, %s38
    %p49 = scmp.eq.s32.totalorder %s15, 0
    %p50 = por %p48, %p49
    %p51 = scmp.ne.s32.totalorder %s37, %s38
    %p52 = scmp.eq.s32.totalorder %s16, 3
    %p53 = por %p51, %p52
    %p55 = scmp.ne.s32.totalorder %s38, %s54
    %p56 = scmp.eq.s32.totalorder %s16, 0
    %p57 = por %p55, %p56
    %s59 = sadd.s32 %s58, 1
    %p62 = scmp.eq.s32.totalorder %s10, 3
    %p63 = scmp.ne.s32.totalorder %s58, %s60
    %p64 = scmp.eq.s32.totalorder %s10, 0
    %p65 = por %p63, %p64
    %p66 = scmp.ne.s32.totalorder %s58, %s60
    %p67 = scmp.eq.s32.totalorder %s15, 3
    %p68 = por %p66, %p67
    %p69 = scmp.ne.s32.totalorder %s60, %s61
    %p70 = scmp.eq.s32.totalorder %s15, 0
    %p71 = por %p69, %p70
    %p72 = scmp.ne.s32.totalorder %s60, %s61
    %p73 = scmp.eq.s32.totalorder %s16, 3
    %p74 = por %p72, %p73
    %p76 = scmp.ne.s32.totalorder %s61, %s75
    %p77 = scmp.eq.s32.totalorder %s16, 0
    %p78 = por %p76, %p77
    %s80 = sadd.s32 %s79, 1
    %p83 = scmp.eq.s32.totalorder %s10, 3
    %p84 = scmp.ne.s32.totalorder %s79, %s81
    %p85 = scmp.eq.s32.totalorder %s10, 0
    %p86 = por %p84, %p85
    %p87 = scmp.ne.s32.totalorder %s79, %s81
    %p88 = scmp.eq.s32.totalorder %s15, 3
    %p89 = por %p87, %p88
    %p90 = scmp.ne.s32.totalorder %s81, %s82
    %p91 = scmp.eq.s32.totalorder %s15, 0
    %p92 = por %p90, %p91
    %p93 = scmp.ne.s32.totalorder %s81, %s82
    %p94 = scmp.eq.s32.totalorder %s16, 3
    %p95 = por %p93, %p94
    %p97 = scmp.ne.s32.totalorder %s82, %s96
    %p98 = scmp.eq.s32.totalorder %s16, 0
    %p99 = por %p97, %p98
    %s101 = sadd.s32 %s100, 1
    %p104 = scmp.eq.s32.totalorder %s10, 3
    %p105 = scmp.ne.s32.totalorder %s100, %s102
    %p106 = scmp.eq.s32.totalorder %s10, 0
    %p107 = por %p105, %p106
    %p108 = scmp.ne.s32.totalorder %s100, %s102
    %p109 = scmp.eq.s32.totalorder %s15, 3
    %p110 = por %p108, %p109
    %p111 = scmp.ne.s32.totalorder %s102, %s103
    %p112 = scmp.eq.s32.totalorder %s15, 0
    %p113 = por %p111, %p112
    %p114 = scmp.ne.s32.totalorder %s102, %s103
    %p115 = scmp.eq.s32.totalorder %s16, 3
    %p116 = por %p114, %p115
    %p118 = scmp.ne.s32.totalorder %s103, %s117
    %p119 = scmp.eq.s32.totalorder %s16, 0
    %p120 = por %p118, %p119
    %s121 = ssub.s32 %s17, %s29
    %s122 = ssub.s32 %s18, %s25
    %s123 = sor.u32 %s121, %s122
    %p124 = scmp.eq.s32.totalorder %s123, 0
    %s126 = sadd.s32 %s125, 1
    %s127 = scalar_select %p124, %s125, %s126
    %p130 = pneg %p124
    %p131 = scmp.eq.s32.totalorder %s10, 3
    %p132 = por %p130, %p131
    %p133 = scmp.ne.s32.totalorder %s125, %s128
    %p134 = scmp.eq.s32.totalorder %s10, 0
    %p135 = por %p133, %p134
    %p136 = scmp.ne.s32.totalorder %s125, %s128
    %p137 = scmp.eq.s32.totalorder %s15, 3
    %p138 = por %p136, %p137
    %p139 = scmp.ne.s32.totalorder %s128, %s129
    %p140 = scmp.eq.s32.totalorder %s15, 0
    %p141 = por %p139, %p140
    %p142 = scmp.ne.s32.totalorder %s128, %s129
    %p143 = scmp.eq.s32.totalorder %s16, 3
    %p144 = por %p142, %p143
    %p146 = scmp.ne.s32.totalorder %s129, %s145
    %p147 = scmp.eq.s32.totalorder %s16, 0
    %p148 = por %p146, %p147
    %p149 = scmp.le.s32.totalorder 1, %s10
    %p150 = scmp.lt.s32.totalorder %s10, 5
    %p151 = pnand %p149, %p150
    %p152 = pneg %p151
    // Predicated region
    $region9: #{up_forward.3} parent=5 // pred_check
      _
    $region10: #{up_forward.3} parent=5 // pred_check_branch
      %154 = sbr.rel (%p151) target = $region12
    $region11: #{up_forward.3} parent=5 // pred_region
      %s155 = ssub.s32 %s10, 1
      // Predicated region
      $region13: #{up_forward.3} parent=11 // pred_check
        %p156 = pneg %p71
      $region14: #{up_forward.3} parent=11 // pred_check_branch
        %158 = sbr.rel (%p156) target = $region16
      $region15: #{up_forward.3} parent=11 // pred_region
        _
      $region16: #{up_forward.3} parent=11 // pred_fallthru
        _
      // Predicated region
      $region17: #{up_forward.3} parent=11 // pred_check
        %p159 = pneg %p92
      $region18: #{up_forward.3} parent=11 // pred_check_branch
        %161 = sbr.rel (%p159) target = $region20
      $region19: #{up_forward.3} parent=11 // pred_region
        _
      $region20: #{up_forward.3} parent=11 // pred_fallthru
        _
      // Predicated region
      $region21: #{up_forward.3} parent=11 // pred_check
        %p162 = pneg %p113
      $region22: #{up_forward.3} parent=11 // pred_check_branch
        %164 = sbr.rel (%p162) target = $region24
      $region23: #{up_forward.3} parent=11 // pred_region
        _
      $region24: #{up_forward.3} parent=11 // pred_fallthru
        _
    $region12: #{up_forward.3} parent=5 // pred_fallthru
      _
    %p165 = scmp.lt.s32.totalorder %s10, 4
    // Predicated region
    $region25: #{up_forward.3} parent=5 // pred_check
      %p166 = pneg %p165
    $region26: #{up_forward.3} parent=5 // pred_check_branch
      %168 = sbr.rel (%p166) target = $region28
    $region27: #{up_forward.3} parent=5 // pred_region
      // Predicated region
      $region29: #{up_forward.3} parent=27 // pred_check
        %p169 = pneg %p44
      $region30: #{up_forward.3} parent=27 // pred_check_branch
        %171 = sbr.rel (%p169) target = $region32
      $region31: #{up_forward.3} parent=27 // pred_region
        %p172 = scmp.lt.s32.totalorder %s17, 1
        %s173 = scalar_select %p172, %s17, 1
        %p174 = scmp.lt.s32.totalorder %s18, 1
        %s175 = scalar_select %p174, %s18, 1
        %s176 = smul.addr %s175, 30
        %s177 = smul.addr %s173, 60
        %s178 = sadd.s32 %s176, %s177
        %s179 = smul.addr %s178, 4
        %s180 = scalar_lea.vmem %s0, %s179
      $region32: #{up_forward.3} parent=27 // pred_fallthru
        _
    $region28: #{up_forward.3} parent=5 // pred_fallthru
      _
    %p181 = scmp.le.s32.totalorder 1, %s10
    %p182 = scmp.lt.s32.totalorder %s10, 5
    %p183 = pnand %p181, %p182
    %p184 = pneg %p183
    // Predicated region
    $region33: #{up_forward.3} parent=5 // pred_check
      _
    $region34: #{up_forward.3} parent=5 // pred_check_branch
      %186 = sbr.rel (%p183) target = $region36
    $region35: #{up_forward.3} parent=5 // pred_region
      %s187 = ssub.s32 %s10, 1
      %p188 = scmp.lt.s32.totalorder %s19, 1
      %s189 = scalar_select %p188, %s19, 1
      %p190 = scmp.lt.s32.totalorder %s20, 1
      %s191 = scalar_select %p190, %s20, 1
      %s192 = smul.addr %s191, 30
      %s193 = smul.addr %s189, 60
      %s194 = sadd.s32 %s192, %s193
      %s195 = smul.addr %s194, 4
      %s196 = scalar_lea.vmem %s0, %s195
      %p197 = pneg %p50
      %p198 = pneg %p47
      %p199 = pneg %p71
      %p200 = pneg %p68
      %p201 = pneg %p92
      %p202 = pneg %p89
      %p203 = pneg %p113
      %p204 = pneg %p110
      %p205 = pneg %p141
      %p206 = pneg %p138
      %s207 = smul.u32 8, %s20
      %p208 = scmp.lt.s32.totalorder %s19, 1
      %s209 = scalar_select %p208, %s19, 1
      %p210 = scmp.lt.s32.totalorder %s207, 15
      %s211 = scalar_select %p210, %s207, 15
      %s212 = smul.addr %s211, 2
      %s213 = smul.addr %s209, 32
      %s214 = sadd.s32 %s212, %s213
      %s215 = smul.addr %s214, 8
      %s216 = scalar_lea.vmem %s4, %s215
      %p217 = scmp.lt.s32.totalorder %s19, 1
      %s218 = scalar_select %p217, %s19, 1
      %p219 = scmp.lt.s32.totalorder %s20, 1
      %s220 = scalar_select %p219, %s20, 1
      %s221 = smul.addr %s220, 30
      %s222 = smul.addr %s218, 60
      %s223 = sadd.s32 %s221, %s222
      %s224 = smul.addr %s223, 4
      %s225 = scalar_lea.vmem %s0, %s224
      %s226 = smul.u32 8, %s20
      %p227 = scmp.lt.s32.totalorder %s19, 1
      %s228 = scalar_select %p227, %s19, 1
      %p229 = scmp.lt.s32.totalorder %s226, 15
      %s230 = scalar_select %p229, %s226, 15
      %s231 = smul.addr %s230, 2
      %s232 = smul.addr %s228, 32
      %s233 = sadd.s32 %s231, %s232
      %s234 = smul.addr %s233, 8
      %s235 = scalar_lea.vmem %s4, %s234
      %s236 = smul.u32 8, %s20
      %v238 = vld [vmem:[%s225] sm:$0xf]
      %v239 = vld [vmem:[%s225 + $0x4] sm:$0xf]
      %v240 = vld [vmem:[%s225 + $0x8] sm:$0xf]
      %v241 = vld [vmem:[%s225 + $0xc] sm:$0xf]
      %v242 = vld [vmem:[%s225 + $0x10] sm:$0xf]
      %v243 = vld [vmem:[%s225 + $0x14] sm:$0xf]
      %v244 = vld [vmem:[%s225 + $0x18] sm:$0xf]
      %v245 = vld [vmem:[%s225 + $0x1c] sm:$0xf]
      %v246 = vld [vmem:[%s225 + $0x20] sm:$0xf]
      %v247 = vld [vmem:[%s225 + $0x24] sm:$0xf]
      %v248 = vld [vmem:[%s225 + $0x28] sm:$0xf]
      %v249 = vld [vmem:[%s225 + $0x2c] sm:$0xf]
      %v250 = vld [vmem:[%s225 + $0x30] sm:$0xf]
      %v251 = vld [vmem:[%s225 + $0x34] sm:$0xf]
      %v252 = vld [vmem:[%s225 + $0x38] sm:$0xf]
      %v253 = vld [vmem:[%s225 + $0x3c] sm:$0xf]
      %v254 = vld [vmem:[%s225 + $0x40] sm:$0xf]
      %v255 = vld [vmem:[%s225 + $0x44] sm:$0xf]
      %v256 = vld [vmem:[%s225 + $0x48] sm:$0xf]
      %v257 = vld [vmem:[%s225 + $0x4c] sm:$0xf]
      %v258 = vld [vmem:[%s225 + $0x50] sm:$0xf]
      %v259 = vld [vmem:[%s225 + $0x54] sm:$0xf]
      %v260 = vld [vmem:[%s225 + $0x58] sm:$0xf]
      %v261 = vld [vmem:[%s225 + $0x5c] sm:$0xf]
      %v262 = vld [vmem:[%s225 + $0x60] sm:$0xf]
      %v263 = vld [vmem:[%s225 + $0x64] sm:$0xf]
      %v264 = vld [vmem:[%s225 + $0x68] sm:$0xf]
      %v265 = vld [vmem:[%s225 + $0x6c] sm:$0xf]
      %v266 = vld [vmem:[%s225 + $0x70] sm:$0xf]
      %v267 = vld [vmem:[%s225 + $0x74] sm:$0xf]
      %v268 = vunpack.c.l.bf16 %v238
      %v269 = vunpack.c.l.bf16 %v239
      %v270 = vunpack.c.l.bf16 %v240
      %v271 = vunpack.c.l.bf16 %v241
      %v272 = vunpack.c.l.bf16 %v242
      %v273 = vunpack.c.l.bf16 %v243
      %v274 = vunpack.c.l.bf16 %v244
      %v275 = vunpack.c.l.bf16 %v245
      %v276 = vunpack.c.l.bf16 %v246
      %v277 = vunpack.c.l.bf16 %v247
      %v278 = vunpack.c.l.bf16 %v248
      %v279 = vunpack.c.l.bf16 %v249
      %v280 = vunpack.c.l.bf16 %v250
      %v281 = vunpack.c.l.bf16 %v251
      %v282 = vunpack.c.l.bf16 %v252
      %v283 = vunpack.c.l.bf16 %v253
      %v284 = vunpack.c.l.bf16 %v254
      %v285 = vunpack.c.l.bf16 %v255
      %v286 = vunpack.c.l.bf16 %v256
      %v287 = vunpack.c.l.bf16 %v257
      %v288 = vunpack.c.l.bf16 %v258
      %v289 = vunpack.c.l.bf16 %v259
      %v290 = vunpack.c.l.bf16 %v260
      %v291 = vunpack.c.l.bf16 %v261
      %v292 = vunpack.c.l.bf16 %v262
      %v293 = vunpack.c.l.bf16 %v263
      %v294 = vunpack.c.l.bf16 %v264
      %v295 = vunpack.c.l.bf16 %v265
      %v296 = vunpack.c.l.bf16 %v266
      %v297 = vunpack.c.l.bf16 %v267
      %v298 = vlaneseq
      %v299 = vshrl.u32 %v298, 7
      %v300 = vadd.s32 %v299, 8
      %v301 = vadd.s32 %v299, 16
      %p302 = scmp.eq.s32.totalorder %s20, 0
      %s303 = scalar_select %p302, 1, 0
      %p304 = scmp.eq.s32.totalorder %s20, 1
      %s305 = scalar_select %p304, 8, 9
      %v306 = vstv %s303
      %vm307 = vcmp.le.s32.totalorder %v306, 0
      %vm308 = vcmp.le.s32.totalorder %v306, 1
      %vm309 = vcmp.le.s32.totalorder %v306, 2
      %vm310 = vcmp.le.s32.totalorder %v306, 3
      %vm311 = vcmp.le.s32.totalorder %v306, 4
      %vm312 = vcmp.le.s32.totalorder %v306, 5
      %vm313 = vcmp.le.s32.totalorder %v306, 6
      %vm314 = vcmp.le.s32.totalorder %v306, 7
      %vm315 = vcmp.le.s32.totalorder %v306, 8
      %vm316 = vcmp.le.s32.totalorder %v306, 9
      %v317 = vstv %s305
      %vm318 = vcmp.ge.s32.totalorder %v317, 0
      %vm319 = vcmp.ge.s32.totalorder %v317, 1
      %vm320 = vcmp.ge.s32.totalorder %v317, 2
      %vm321 = vcmp.ge.s32.totalorder %v317, 3
      %vm322 = vcmp.ge.s32.totalorder %v317, 4
      %vm323 = vcmp.ge.s32.totalorder %v317, 5
      %vm324 = vcmp.ge.s32.totalorder %v317, 6
      %vm325 = vcmp.ge.s32.totalorder %v317, 7
      %vm326 = vcmp.ge.s32.totalorder %v317, 8
      %vm327 = vcmp.ge.s32.totalorder %v317, 9
      %vm328 = vmand %vm307, %vm318
      %vm329 = vmand %vm308, %vm319
      %vm330 = vmand %vm309, %vm320
      %vm331 = vmand %vm310, %vm321
      %vm332 = vmand %vm311, %vm322
      %vm333 = vmand %vm312, %vm323
      %vm334 = vmand %vm313, %vm324
      %vm335 = vmand %vm314, %vm325
      %vm336 = vmand %vm315, %vm326
      %vm337 = vmand %vm316, %vm327
      %vm338 = vcmp.ge.s32.totalorder %v299, 1
      %vm339 = vcmp.ge.s32.totalorder %v300, 1
      %vm340 = vcmp.ge.s32.totalorder %v301, 1
      %vm341 = vmand %vm328, %vm338
      %vm342 = vmand %vm328, %vm339
      %vm343 = vmand %vm328, %vm340
      %vm344 = vmand %vm329, %vm338
      %vm345 = vmand %vm329, %vm339
      %vm346 = vmand %vm329, %vm340
      %vm347 = vmand %vm330, %vm338
      %vm348 = vmand %vm330, %vm339
      %vm349 = vmand %vm330, %vm340
      %vm350 = vmand %vm331, %vm338
      %vm351 = vmand %vm331, %vm339
      %vm352 = vmand %vm331, %vm340
      %vm353 = vmand %vm332, %vm338
      %vm354 = vmand %vm332, %vm339
      %vm355 = vmand %vm332, %vm340
      %vm356 = vmand %vm333, %vm338
      %vm357 = vmand %vm333, %vm339
      %vm358 = vmand %vm333, %vm340
      %vm359 = vmand %vm334, %vm338
      %vm360 = vmand %vm334, %vm339
      %vm361 = vmand %vm334, %vm340
      %vm362 = vmand %vm335, %vm338
      %vm363 = vmand %vm335, %vm339
      %vm364 = vmand %vm335, %vm340
      %vm365 = vmand %vm336, %vm338
      %vm366 = vmand %vm336, %vm339
      %vm367 = vmand %vm336, %vm340
      %vm368 = vmand %vm337, %vm338
      %vm369 = vmand %vm337, %vm339
      %vm370 = vmand %vm337, %vm340
      %vm371 = vcmp.le.s32.totalorder %v299, 16
      %vm372 = vcmp.le.s32.totalorder %v300, 16
      %vm373 = vcmp.le.s32.totalorder %v301, 16
      %vm374 = vmand %vm341, %vm371
      %vm375 = vmand %vm342, %vm372
      %vm376 = vmand %vm343, %vm373
      %vm377 = vmand %vm344, %vm371
      %vm378 = vmand %vm345, %vm372
      %vm379 = vmand %vm346, %vm373
      %vm380 = vmand %vm347, %vm371
      %vm381 = vmand %vm348, %vm372
      %vm382 = vmand %vm349, %vm373
      %vm383 = vmand %vm350, %vm371
      %vm384 = vmand %vm351, %vm372
      %vm385 = vmand %vm352, %vm373
      %vm386 = vmand %vm353, %vm371
      %vm387 = vmand %vm354, %vm372
      %vm388 = vmand %vm355, %vm373
      %vm389 = vmand %vm356, %vm371
      %vm390 = vmand %vm357, %vm372
      %vm391 = vmand %vm358, %vm373
      %vm392 = vmand %vm359, %vm371
      %vm393 = vmand %vm360, %vm372
      %vm394 = vmand %vm361, %vm373
      %vm395 = vmand %vm362, %vm371
      %vm396 = vmand %vm363, %vm372
      %vm397 = vmand %vm364, %vm373
      %vm398 = vmand %vm365, %vm371
      %vm399 = vmand %vm366, %vm372
      %vm400 = vmand %vm367, %vm373
      %vm401 = vmand %vm368, %vm371
      %vm402 = vmand %vm369, %vm372
      %vm403 = vmand %vm370, %vm373
      %v404 = vld [vmem:[%s1] sm:$0x1]
      %v406 = vlaneseq
      %v407 = vshrl.u32 %v406, 7
      %v408 = vsub.s32 0, %v407
      %v409 = vrot.slane %v404, %v408
      %v411 = vmul.f32 %v268, %v409
      %v412 = vmul.f32 %v269, %v409
      %v413 = vmul.f32 %v270, %v409
      %v414 = vmul.f32 %v271, %v409
      %v415 = vmul.f32 %v272, %v409
      %v416 = vmul.f32 %v273, %v409
      %v417 = vmul.f32 %v274, %v409
      %v418 = vmul.f32 %v275, %v409
      %v419 = vmul.f32 %v276, %v409
      %v420 = vmul.f32 %v277, %v409
      %v421 = vmul.f32 %v278, %v409
      %v422 = vmul.f32 %v279, %v409
      %v423 = vmul.f32 %v280, %v409
      %v424 = vmul.f32 %v281, %v409
      %v425 = vmul.f32 %v282, %v409
      %v426 = vmul.f32 %v283, %v409
      %v427 = vmul.f32 %v284, %v409
      %v428 = vmul.f32 %v285, %v409
      %v429 = vmul.f32 %v286, %v409
      %v430 = vmul.f32 %v287, %v409
      %v431 = vmul.f32 %v288, %v409
      %v432 = vmul.f32 %v289, %v409
      %v433 = vmul.f32 %v290, %v409
      %v434 = vmul.f32 %v291, %v409
      %v435 = vmul.f32 %v292, %v409
      %v436 = vmul.f32 %v293, %v409
      %v437 = vmul.f32 %v294, %v409
      %v438 = vmul.f32 %v295, %v409
      %v439 = vmul.f32 %v296, %v409
      %v440 = vmul.f32 %v297, %v409
      %v441 = vld [vmem:[%s2] sm:$0x1]
      %v443 = vlaneseq
      %v444 = vshrl.u32 %v443, 7
      %v445 = vsub.s32 0, %v444
      %v446 = vrot.slane %v441, %v445
      %v448 = vadd.f32 %v411, %v446
      %v449 = vadd.f32 %v412, %v446
      %v450 = vadd.f32 %v413, %v446
      %v451 = vadd.f32 %v414, %v446
      %v452 = vadd.f32 %v415, %v446
      %v453 = vadd.f32 %v416, %v446
      %v454 = vadd.f32 %v417, %v446
      %v455 = vadd.f32 %v418, %v446
      %v456 = vadd.f32 %v419, %v446
      %v457 = vadd.f32 %v420, %v446
      %v458 = vadd.f32 %v421, %v446
      %v459 = vadd.f32 %v422, %v446
      %v460 = vadd.f32 %v423, %v446
      %v461 = vadd.f32 %v424, %v446
      %v462 = vadd.f32 %v425, %v446
      %v463 = vadd.f32 %v426, %v446
      %v464 = vadd.f32 %v427, %v446
      %v465 = vadd.f32 %v428, %v446
      %v466 = vadd.f32 %v429, %v446
      %v467 = vadd.f32 %v430, %v446
      %v468 = vadd.f32 %v431, %v446
      %v469 = vadd.f32 %v432, %v446
      %v470 = vadd.f32 %v433, %v446
      %v471 = vadd.f32 %v434, %v446
      %v472 = vadd.f32 %v435, %v446
      %v473 = vadd.f32 %v436, %v446
      %v474 = vadd.f32 %v437, %v446
      %v475 = vadd.f32 %v438, %v446
      %v476 = vadd.f32 %v439, %v446
      %v477 = vadd.f32 %v440, %v446
      %v478 = vsel %vm374, %v448, 0.0
      %v479 = vsel %vm375, %v449, 0.0
      %v480 = vsel %vm376, %v450, 0.0
      %v481 = vsel %vm377, %v451, 0.0
      %v482 = vsel %vm378, %v452, 0.0
      %v483 = vsel %vm379, %v453, 0.0
      %v484 = vsel %vm380, %v454, 0.0
      %v485 = vsel %vm381, %v455, 0.0
      %v486 = vsel %vm382, %v456, 0.0
      %v487 = vsel %vm383, %v457, 0.0
      %v488 = vsel %vm384, %v458, 0.0
      %v489 = vsel %vm385, %v459, 0.0
      %v490 = vsel %vm386, %v460, 0.0
      %v491 = vsel %vm387, %v461, 0.0
      %v492 = vsel %vm388, %v462, 0.0
      %v493 = vsel %vm389, %v463, 0.0
      %v494 = vsel %vm390, %v464, 0.0
      %v495 = vsel %vm391, %v465, 0.0
      %v496 = vsel %vm392, %v466, 0.0
      %v497 = vsel %vm393, %v467, 0.0
      %v498 = vsel %vm394, %v468, 0.0
      %v499 = vsel %vm395, %v469, 0.0
      %v500 = vsel %vm396, %v470, 0.0
      %v501 = vsel %vm397, %v471, 0.0
      %v502 = vsel %vm398, %v472, 0.0
      %v503 = vsel %vm399, %v473, 0.0
      %v504 = vsel %vm400, %v474, 0.0
      %v505 = vsel %vm401, %v475, 0.0
      %v506 = vsel %vm402, %v476, 0.0
      %v507 = vsel %vm403, %v477, 0.0
      %v508 = vpack.c.bf16 %v479, %v478
      %v509 = vpack.c.bf16 %v481, %v480
      %v510 = vpack.c.bf16 %v483, %v482
      %v511 = vpack.c.bf16 %v485, %v484
      %v512 = vpack.c.bf16 %v487, %v486
      %v513 = vpack.c.bf16 %v489, %v488
      %v514 = vpack.c.bf16 %v491, %v490
      %v515 = vpack.c.bf16 %v493, %v492
      %v516 = vpack.c.bf16 %v495, %v494
      %v517 = vpack.c.bf16 %v497, %v496
      %v518 = vpack.c.bf16 %v499, %v498
      %v519 = vpack.c.bf16 %v501, %v500
      %v520 = vld [vmem:[%s3] sm:$0x3]
      %v521 = vrot.slane %v478, 1
      %v522 = vrot.slane %v479, 1
      %v523 = vrot.slane %v480, 1
      %v524 = vrot.slane %v481, 1
      %v525 = vrot.slane %v482, 1
      %v526 = vrot.slane %v483, 1
      %v527 = vrot.slane %v484, 1
      %v528 = vrot.slane %v485, 1
      %v529 = vrot.slane %v486, 1
      %v530 = vrot.slane %v487, 1
      %v531 = vrot.slane %v488, 1
      %v532 = vrot.slane %v489, 1
      %v533 = vrot.slane %v490, 1
      %v534 = vrot.slane %v491, 1
      %v535 = vrot.slane %v492, 1
      %v536 = vrot.slane %v493, 1
      %v537 = vrot.slane %v494, 1
      %v538 = vrot.slane %v495, 1
      %v539 = vrot.slane %v496, 1
      %v540 = vrot.slane %v497, 1
      %v541 = vrot.slane %v498, 1
      %v542 = vrot.slane %v499, 1
      %v543 = vrot.slane %v500, 1
      %v544 = vrot.slane %v501, 1
      %v545 = vrot.slane %v502, 1
      %vm546 = vcmp.lt.s32.totalorder %v299, 7
      %v547 = vsel %vm546, %v544, %v545
      %v548 = vsel %vm546, %v543, %v544
      %v549 = vsel %vm546, %v542, %v543
      %v550 = vsel %vm546, %v541, %v542
      %v551 = vsel %vm546, %v540, %v541
      %v552 = vsel %vm546, %v539, %v540
      %v553 = vsel %vm546, %v538, %v539
      %v554 = vsel %vm546, %v537, %v538
      %v555 = vsel %vm546, %v536, %v537
      %v556 = vsel %vm546, %v535, %v536
      %v557 = vsel %vm546, %v534, %v535
      %v558 = vsel %vm546, %v533, %v534
      %v559 = vsel %vm546, %v532, %v533
      %v560 = vsel %vm546, %v531, %v532
      %v561 = vsel %vm546, %v530, %v531
      %v562 = vsel %vm546, %v529, %v530
      %v563 = vsel %vm546, %v528, %v529
      %v564 = vsel %vm546, %v527, %v528
      %v565 = vsel %vm546, %v526, %v527
      %v566 = vsel %vm546, %v525, %v526
      %v567 = vsel %vm546, %v524, %v525
      %v568 = vsel %vm546, %v523, %v524
      %v569 = vsel %vm546, %v522, %v523
      %v570 = vsel %vm546, %v521, %v522
      %v571 = vpack.c.bf16 %v569, %v570
      %v572 = vpack.c.bf16 %v567, %v568
      %v573 = vpack.c.bf16 %v565, %v566
      %v574 = vpack.c.bf16 %v563, %v564
      %v575 = vpack.c.bf16 %v561, %v562
      %v576 = vpack.c.bf16 %v559, %v560
      %v577 = vpack.c.bf16 %v557, %v558
      %v578 = vpack.c.bf16 %v555, %v556
      %v579 = vpack.c.bf16 %v553, %v554
      %v580 = vpack.c.bf16 %v551, %v552
      %v581 = vpack.c.bf16 %v549, %v550
      %v582 = vpack.c.bf16 %v547, %v548
      %s583 = scalar_lea.vmem %s3, 2
      %v584 = vld [vmem:[%s583] sm:$0x3]
      %vm585 = vcmask 31744
      %v587 = vsel %vm585, %v571, 0
      %v590 = vsel %vm585, %v572, 0
      %v593 = vsel %vm585, %v573, 0
      %v596 = vsel %vm585, %v574, 0
      %v599 = vsel %vm585, %v575, 0
      %v602 = vsel %vm585, %v576, 0
      %v605 = vsel %vm585, %v577, 0
      %v608 = vsel %vm585, %v578, 0
      %v611 = vsel %vm585, %v579, 0
      %v614 = vsel %vm585, %v580, 0
      %v617 = vsel %vm585, %v581, 0
      %v620 = vsel %vm585, %v582, 0
      %vm622 = vcmask 1041408
      %v624 = vsel %vm622, %v584, 0
      %626 = vmatprep.subr.bf16.mxu0 0
      %627 = vmatpush1.bf16.msra.mxu0 %v624
      %628 = vmatprep.subr.bf16.mxu0 0
      %629 = vmatpush1.bf16.msra.mxu0 0
      %630 = vmatprep.subr.bf16.mxu0 0
      %631 = vmatpush1.bf16.msra.mxu0 0
      %632 = vmatprep.subr.bf16.mxu0 0
      %633 = vmatpush1.bf16.msra.mxu0 0
      %634 = vmatprep.subr.bf16.mxu0 0
      %635 = vmatpush1.bf16.msra.mxu0 0
      %636 = vmatprep.subr.bf16.mxu0 0
      %637 = vmatpush1.bf16.msra.mxu0 0
      %638 = vmatprep.subr.bf16.mxu0 0
      %639 = vmatpush1.bf16.msra.mxu0 0
      %640 = vmatprep.subr.bf16.mxu0 0
      %641 = vmatpush1.bf16.msra.mxu0 0
      %642 = vmatprep.subr.bf16.mxu0 0
      %643 = vmatpush1.bf16.msra.mxu0 0
      %644 = vmatprep.subr.bf16.mxu0 0
      %645 = vmatpush1.bf16.msra.mxu0 0
      %646 = vmatprep.subr.bf16.mxu0 0
      %647 = vmatpush1.bf16.msra.mxu0 0
      %648 = vmatprep.subr.bf16.mxu0 0
      %649 = vmatpush1.bf16.msra.mxu0 0
      %650 = vmatprep.subr.bf16.mxu0 0
      %651 = vmatpush1.bf16.msra.mxu0 0
      %652 = vmatprep.subr.bf16.mxu0 0
      %653 = vmatpush1.bf16.msra.mxu0 0
      %654 = vmatprep.subr.bf16.mxu0 0
      %655 = vmatpush1.bf16.msra.mxu0 0
      %656 = vmatprep.subr.bf16.mxu0 0
      %657 = vmatpush1.bf16.msra.mxu0 0
      %658 = vmatprep.mubr.bf16.mxu0 0
      %659 = vmatmul.mubr.bf16.gmra.mrb[0].mxu0 %v587
      %v660 = vpop.f32.mrb[0].mxu0
      %v661 = vadd.f32 0.0, %v660
      %v662 = vpop.f32.mrb[0].mxu0
      %v663 = vpop.f32.mrb[0].mxu0
      %v664 = vadd.f32 0.0, %v663
      %v665 = vpop.f32.mrb[0].mxu0
      %666 = vmatprep.mubr.bf16.mxu0 0
      %667 = vmatmul.mubr.bf16.gmra.mrb[0].mxu0 %v590
      %v668 = vpop.f32.mrb[0].mxu0
      %v669 = vpop.f32.mrb[0].mxu0
      %v670 = vpop.f32.mrb[0].mxu0
      %v671 = vadd.f32 0.0, %v670
      %v672 = vpop.f32.mrb[0].mxu0
      %673 = vmatprep.mubr.bf16.mxu0 0
      %674 = vmatmul.mubr.bf16.gmra.mrb[0].mxu0 %v593
      %v675 = vpop.f32.mrb[0].mxu0
      %v676 = vadd.f32 0.0, %v675
      %v677 = vpop.f32.mrb[0].mxu0
      %v678 = vpop.f32.mrb[0].mxu0
      %v679 = vpop.f32.mrb[0].mxu0
      %680 = vmatprep.mubr.bf16.mxu0 0
      %681 = vmatmul.mubr.bf16.gmra.mrb[0].mxu0 %v596
      %v682 = vpop.f32.mrb[0].mxu0
      %v683 = vadd.f32 0.0, %v682
      %v684 = vpop.f32.mrb[0].mxu0
      %v685 = vpop.f32.mrb[0].mxu0
      %v686 = vadd.f32 0.0, %v685
      %v687 = vpop.f32.mrb[0].mxu0
      %688 = vmatprep.mubr.bf16.mxu0 0
      %689 = vmatmul.mubr.bf16.gmra.mrb[0].mxu0 %v599
      %v690 = vpop.f32.mrb[0].mxu0
      %v691 = vpop.f32.mrb[0].mxu0
      %v692 = vpop.f32.mrb[0].mxu0
      %v693 = vadd.f32 0.0, %v692
      %v694 = vpop.f32.mrb[0].mxu0
      %695 = vmatprep.mubr.bf16.mxu0 0
      %696 = vmatmul.mubr.bf16.gmra.mrb[0].mxu0 %v602
      %v697 = vpop.f32.mrb[0].mxu0
      %v698 = vadd.f32 0.0, %v697
      %v699 = vpop.f32.mrb[0].mxu0
      %v700 = vpop.f32.mrb[0].mxu0
      %v701 = vpop.f32.mrb[0].mxu0
      %702 = vmatprep.mubr.bf16.mxu0 0
      %703 = vmatmul.mubr.bf16.gmra.mrb[0].mxu0 %v605
      %v704 = vpop.f32.mrb[0].mxu0
      %v705 = vadd.f32 0.0, %v704
      %v706 = vpop.f32.mrb[0].mxu0
      %v707 = vpop.f32.mrb[0].mxu0
      %v708 = vadd.f32 0.0, %v707
      %v709 = vpop.f32.mrb[0].mxu0
      %710 = vmatprep.mubr.bf16.mxu0 0
      %711 = vmatmul.mubr.bf16.gmra.mrb[0].mxu0 %v608
      %v712 = vpop.f32.mrb[0].mxu0
      %v713 = vpop.f32.mrb[0].mxu0
      %v714 = vpop.f32.mrb[0].mxu0
      %v715 = vadd.f32 0.0, %v714
      %v716 = vpop.f32.mrb[0].mxu0
      %717 = vmatprep.mubr.bf16.mxu0 0
      %718 = vmatmul.mubr.bf16.gmra.mrb[0].mxu0 %v611
      %v719 = vpop.f32.mrb[0].mxu0
      %v720 = vadd.f32 0.0, %v719
      %v721 = vpop.f32.mrb[0].mxu0
      %v722 = vpop.f32.mrb[0].mxu0
      %v723 = vpop.f32.mrb[0].mxu0
      %724 = vmatprep.mubr.bf16.mxu0 0
      %725 = vmatmul.mubr.bf16.gmra.mrb[0].mxu0 %v614
      %v726 = vpop.f32.mrb[0].mxu0
      %v727 = vadd.f32 0.0, %v726
      %v728 = vpop.f32.mrb[0].mxu0
      %v729 = vpop.f32.mrb[0].mxu0
      %v730 = vadd.f32 0.0, %v729
      %v731 = vpop.f32.mrb[0].mxu0
      %732 = vmatprep.mubr.bf16.mxu0 0
      %733 = vmatmul.mubr.bf16.gmra.mrb[0].mxu0 %v617
      %v734 = vpop.f32.mrb[0].mxu0
      %v735 = vpop.f32.mrb[0].mxu0
      %v736 = vpop.f32.mrb[0].mxu0
      %v737 = vadd.f32 0.0, %v736
      %v738 = vpop.f32.mrb[0].mxu0
      %739 = vmatprep.mubr.bf16.mxu0 0
      %740 = vmatmul.mubr.bf16.gmra.mrb[0].mxu0 %v620
      %v741 = vpop.f32.mrb[0].mxu0
      %v742 = vadd.f32 0.0, %v741
      %v743 = vpop.f32.mrb[0].mxu0
      %v744 = vpop.f32.mrb[0].mxu0
      %v745 = vpop.f32.mrb[0].mxu0
      %746 = vdwg.mxu0
      %v748 = vsel %vm585, %v508, 0
      %v751 = vsel %vm585, %v509, 0
      %v754 = vsel %vm585, %v510, 0
      %v757 = vsel %vm585, %v511, 0
      %v760 = vsel %vm585, %v512, 0
      %v763 = vsel %vm585, %v513, 0
      %v766 = vsel %vm585, %v514, 0
      %v769 = vsel %vm585, %v515, 0
      %v772 = vsel %vm585, %v516, 0
      %v775 = vsel %vm585, %v517, 0
      %v778 = vsel %vm585, %v518, 0
      %v781 = vsel %vm585, %v519, 0
      %v784 = vsel %vm622, %v520, 0
      %786 = vmatprep.subr.bf16.mxu0 0
      %787 = vmatpush1.bf16.msra.mxu0 %v784
      %788 = vmatprep.subr.bf16.mxu0 0
      %789 = vmatpush1.bf16.msra.mxu0 0
      %790 = vmatprep.subr.bf16.mxu0 0
      %791 = vmatpush1.bf16.msra.mxu0 0
      %792 = vmatprep.subr.bf16.mxu0 0
      %793 = vmatpush1.bf16.msra.mxu0 0
      %794 = vmatprep.subr.bf16.mxu0 0
      %795 = vmatpush1.bf16.msra.mxu0 0
      %796 = vmatprep.subr.bf16.mxu0 0
      %797 = vmatpush1.bf16.msra.mxu0 0
      %798 = vmatprep.subr.bf16.mxu0 0
      %799 = vmatpush1.bf16.msra.mxu0 0
      %800 = vmatprep.subr.bf16.mxu0 0
      %801 = vmatpush1.bf16.msra.mxu0 0
      %802 = vmatprep.subr.bf16.mxu0 0
      %803 = vmatpush1.bf16.msra.mxu0 0
      %804 = vmatprep.subr.bf16.mxu0 0
      %805 = vmatpush1.bf16.msra.mxu0 0
      %806 = vmatprep.subr.bf16.mxu0 0
      %807 = vmatpush1.bf16.msra.mxu0 0
      %808 = vmatprep.subr.bf16.mxu0 0
      %809 = vmatpush1.bf16.msra.mxu0 0
      %810 = vmatprep.subr.bf16.mxu0 0
      %811 = vmatpush1.bf16.msra.mxu0 0
      %812 = vmatprep.subr.bf16.mxu0 0
      %813 = vmatpush1.bf16.msra.mxu0 0
      %814 = vmatprep.subr.bf16.mxu0 0
      %815 = vmatpush1.bf16.msra.mxu0 0
      %816 = vmatprep.subr.bf16.mxu0 0
      %817 = vmatpush1.bf16.msra.mxu0 0
      %818 = vmatprep.mubr.bf16.mxu0 0
      %819 = vmatmul.mubr.bf16.gmra.mrb[0].mxu0 %v748
      %v820 = vpop.f32.mrb[0].mxu0
      %v821 = vadd.f32 %v661, %v820
      %v822 = vpop.f32.mrb[0].mxu0
      %v823 = vpop.f32.mrb[0].mxu0
      %v824 = vadd.f32 %v664, %v823
      %v825 = vpop.f32.mrb[0].mxu0
      %826 = vmatprep.mubr.bf16.mxu0 0
      %827 = vmatmul.mubr.bf16.gmra.mrb[0].mxu0 %v751
      %v828 = vpop.f32.mrb[0].mxu0
      %v829 = vpop.f32.mrb[0].mxu0
      %v830 = vpop.f32.mrb[0].mxu0
      %v831 = vadd.f32 %v671, %v830
      %v832 = vpop.f32.mrb[0].mxu0
      %833 = vmatprep.mubr.bf16.mxu0 0
      %834 = vmatmul.mubr.bf16.gmra.mrb[0].mxu0 %v754
      %v835 = vpop.f32.mrb[0].mxu0
      %v836 = vadd.f32 %v676, %v835
      %v837 = vpop.f32.mrb[0].mxu0
      %v838 = vpop.f32.mrb[0].mxu0
      %v839 = vpop.f32.mrb[0].mxu0
      %840 = vmatprep.mubr.bf16.mxu0 0
      %841 = vmatmul.mubr.bf16.gmra.mrb[0].mxu0 %v757
      %v842 = vpop.f32.mrb[0].mxu0
      %v843 = vadd.f32 %v683, %v842
      %v844 = vpop.f32.mrb[0].mxu0
      %v845 = vpop.f32.mrb[0].mxu0
      %v846 = vadd.f32 %v686, %v845
      %v847 = vpop.f32.mrb[0].mxu0
      %848 = vmatprep.mubr.bf16.mxu0 0
      %849 = vmatmul.mubr.bf16.gmra.mrb[0].mxu0 %v760
      %v850 = vpop.f32.mrb[0].mxu0
      %v851 = vpop.f32.mrb[0].mxu0
      %v852 = vpop.f32.mrb[0].mxu0
      %v853 = vadd.f32 %v693, %v852
      %v854 = vpop.f32.mrb[0].mxu0
      %855 = vmatprep.mubr.bf16.mxu0 0
      %856 = vmatmul.mubr.bf16.gmra.mrb[0].mxu0 %v763
      %v857 = vpop.f32.mrb[0].mxu0
      %v858 = vadd.f32 %v698, %v857
      %v859 = vpop.f32.mrb[0].mxu0
      %v860 = vpop.f32.mrb[0].mxu0
      %v861 = vpop.f32.mrb[0].mxu0
      %862 = vmatprep.mubr.bf16.mxu0 0
      %863 = vmatmul.mubr.bf16.gmra.mrb[0].mxu0 %v766
      %v864 = vpop.f32.mrb[0].mxu0
      %v865 = vadd.f32 %v705, %v864
      %v866 = vpop.f32.mrb[0].mxu0
      %v867 = vpop.f32.mrb[0].mxu0
      %v868 = vadd.f32 %v708, %v867
      %v869 = vpop.f32.mrb[0].mxu0
      %870 = vmatprep.mubr.bf16.mxu0 0
      %871 = vmatmul.mubr.bf16.gmra.mrb[0].mxu0 %v769
      %v872 = vpop.f32.mrb[0].mxu0
      %v873 = vpop.f32.mrb[0].mxu0
      %v874 = vpop.f32.mrb[0].mxu0
      %v875 = vadd.f32 %v715, %v874
      %v876 = vpop.f32.mrb[0].mxu0
      %877 = vmatprep.mubr.bf16.mxu0 0
      %878 = vmatmul.mubr.bf16.gmra.mrb[0].mxu0 %v772
      %v879 = vpop.f32.mrb[0].mxu0
      %v880 = vadd.f32 %v720, %v879
      %v881 = vpop.f32.mrb[0].mxu0
      %v882 = vpop.f32.mrb[0].mxu0
      %v883 = vpop.f32.mrb[0].mxu0
      %884 = vmatprep.mubr.bf16.mxu0 0
      %885 = vmatmul.mubr.bf16.gmra.mrb[0].mxu0 %v775
      %v886 = vpop.f32.mrb[0].mxu0
      %v887 = vadd.f32 %v727, %v886
      %v888 = vpop.f32.mrb[0].mxu0
      %v889 = vpop.f32.mrb[0].mxu0
      %v890 = vadd.f32 %v730, %v889
      %v891 = vpop.f32.mrb[0].mxu0
      %892 = vmatprep.mubr.bf16.mxu0 0
      %893 = vmatmul.mubr.bf16.gmra.mrb[0].mxu0 %v778
      %v894 = vpop.f32.mrb[0].mxu0
      %v895 = vpop.f32.mrb[0].mxu0
      %v896 = vpop.f32.mrb[0].mxu0
      %v897 = vadd.f32 %v737, %v896
      %v898 = vpop.f32.mrb[0].mxu0
      %899 = vmatprep.mubr.bf16.mxu0 0
      %900 = vmatmul.mubr.bf16.gmra.mrb[0].mxu0 %v781
      %v901 = vpop.f32.mrb[0].mxu0
      %v902 = vadd.f32 %v742, %v901
      %v903 = vpop.f32.mrb[0].mxu0
      %v904 = vpop.f32.mrb[0].mxu0
      %v905 = vpop.f32.mrb[0].mxu0
      %906 = vdwg.mxu0
      %v907 = vrot.slane %v478, 2
      %v908 = vrot.slane %v479, 2
      %v909 = vrot.slane %v480, 2
      %v910 = vrot.slane %v481, 2
      %v911 = vrot.slane %v482, 2
      %v912 = vrot.slane %v483, 2
      %v913 = vrot.slane %v484, 2
      %v914 = vrot.slane %v485, 2
      %v915 = vrot.slane %v486, 2
      %v916 = vrot.slane %v487, 2
      %v917 = vrot.slane %v488, 2
      %v918 = vrot.slane %v489, 2
      %v919 = vrot.slane %v490, 2
      %v920 = vrot.slane %v491, 2
      %v921 = vrot.slane %v492, 2
      %v922 = vrot.slane %v493, 2
      %v923 = vrot.slane %v494, 2
      %v924 = vrot.slane %v495, 2
      %v925 = vrot.slane %v496, 2
      %v926 = vrot.slane %v497, 2
      %v927 = vrot.slane %v498, 2
      %v928 = vrot.slane %v499, 2
      %v929 = vrot.slane %v500, 2
      %v930 = vrot.slane %v501, 2
      %v931 = vrot.slane %v502, 2
      %vm932 = vcmp.lt.s32.totalorder %v299, 6
      %v933 = vsel %vm932, %v930, %v931
      %v934 = vsel %vm932, %v929, %v930
      %v935 = vsel %vm932, %v928, %v929
      %v936 = vsel %vm932, %v927, %v928
      %v937 = vsel %vm932, %v926, %v927
      %v938 = vsel %vm932, %v925, %v926
      %v939 = vsel %vm932, %v924, %v925
      %v940 = vsel %vm932, %v923, %v924
      %v941 = vsel %vm932, %v922, %v923
      %v942 = vsel %vm932, %v921, %v922
      %v943 = vsel %vm932, %v920, %v921
      %v944 = vsel %vm932, %v919, %v920
      %v945 = vsel %vm932, %v918, %v919
      %v946 = vsel %vm932, %v917, %v918
      %v947 = vsel %vm932, %v916, %v917
      %v948 = vsel %vm932, %v915, %v916
      %v949 = vsel %vm932, %v914, %v915
      %v950 = vsel %vm932, %v913, %v914
      %v951 = vsel %vm932, %v912, %v913
      %v952 = vsel %vm932, %v911, %v912
      %v953 = vsel %vm932, %v910, %v911
      %v954 = vsel %vm932, %v909, %v910
      %v955 = vsel %vm932, %v908, %v909
      %v956 = vsel %vm932, %v907, %v908
      %v957 = vpack.c.bf16 %v955, %v956
      %v958 = vpack.c.bf16 %v953, %v954
      %v959 = vpack.c.bf16 %v951, %v952
      %v960 = vpack.c.bf16 %v949, %v950
      %v961 = vpack.c.bf16 %v947, %v948
      %v962 = vpack.c.bf16 %v945, %v946
      %v963 = vpack.c.bf16 %v943, %v944
      %v964 = vpack.c.bf16 %v941, %v942
      %v965 = vpack.c.bf16 %v939, %v940
      %v966 = vpack.c.bf16 %v937, %v938
      %v967 = vpack.c.bf16 %v935, %v936
      %v968 = vpack.c.bf16 %v933, %v934
      %s969 = scalar_lea.vmem %s3, 4
      %v970 = vld [vmem:[%s969] sm:$0x3]
      %v972 = vsel %vm585, %v957, 0
      %v975 = vsel %vm585, %v958, 0
      %v978 = vsel %vm585, %v959, 0
      %v981 = vsel %vm585, %v960, 0
      %v984 = vsel %vm585, %v961, 0
      %v987 = vsel %vm585, %v962, 0
      %v990 = vsel %vm585, %v963, 0
      %v993 = vsel %vm585, %v964, 0
      %v996 = vsel %vm585, %v965, 0
      %v999 = vsel %vm585, %v966, 0
      %v1002 = vsel %vm585, %v967, 0
      %v1005 = vsel %vm585, %v968, 0
      %v1008 = vsel %vm622, %v970, 0
      %1010 = vmatprep.subr.bf16.mxu0 0
      %1011 = vmatpush1.bf16.msra.mxu0 %v1008
      %1012 = vmatprep.subr.bf16.mxu0 0
      %1013 = vmatpush1.bf16.msra.mxu0 0
      %1014 = vmatprep.subr.bf16.mxu0 0
      %1015 = vmatpush1.bf16.msra.mxu0 0
      %1016 = vmatprep.subr.bf16.mxu0 0
      %1017 = vmatpush1.bf16.msra.mxu0 0
      %1018 = vmatprep.subr.bf16.mxu0 0
      %1019 = vmatpush1.bf16.msra.mxu0 0
      %1020 = vmatprep.subr.bf16.mxu0 0
      %1021 = vmatpush1.bf16.msra.mxu0 0
      %1022 = vmatprep.subr.bf16.mxu0 0
      %1023 = vmatpush1.bf16.msra.mxu0 0
      %1024 = vmatprep.subr.bf16.mxu0 0
      %1025 = vmatpush1.bf16.msra.mxu0 0
      %1026 = vmatprep.subr.bf16.mxu0 0
      %1027 = vmatpush1.bf16.msra.mxu0 0
      %1028 = vmatprep.subr.bf16.mxu0 0
      %1029 = vmatpush1.bf16.msra.mxu0 0
      %1030 = vmatprep.subr.bf16.mxu0 0
      %1031 = vmatpush1.bf16.msra.mxu0 0
      %1032 = vmatprep.subr.bf16.mxu0 0
      %1033 = vmatpush1.bf16.msra.mxu0 0
      %1034 = vmatprep.subr.bf16.mxu0 0
      %1035 = vmatpush1.bf16.msra.mxu0 0
      %1036 = vmatprep.subr.bf16.mxu0 0
      %1037 = vmatpush1.bf16.msra.mxu0 0
      %1038 = vmatprep.subr.bf16.mxu0 0
      %1039 = vmatpush1.bf16.msra.mxu0 0
      %1040 = vmatprep.subr.bf16.mxu0 0
      %1041 = vmatpush1.bf16.msra.mxu0 0
      %1042 = vmatprep.mubr.bf16.mxu0 0
      %1043 = vmatmul.mubr.bf16.gmra.mrb[0].mxu0 %v972
      %v1044 = vpop.f32.mrb[0].mxu0
      %v1045 = vadd.f32 0.0, %v1044
      %v1046 = vpop.f32.mrb[0].mxu0
      %v1047 = vpop.f32.mrb[0].mxu0
      %v1048 = vadd.f32 0.0, %v1047
      %v1049 = vpop.f32.mrb[0].mxu0
      %1050 = vmatprep.mubr.bf16.mxu0 0
      %1051 = vmatmul.mubr.bf16.gmra.mrb[0].mxu0 %v975
      %v1052 = vpop.f32.mrb[0].mxu0
      %v1053 = vpop.f32.mrb[0].mxu0
      %v1054 = vpop.f32.mrb[0].mxu0
      %v1055 = vadd.f32 0.0, %v1054
      %v1056 = vpop.f32.mrb[0].mxu0
      %1057 = vmatprep.mubr.bf16.mxu0 0
      %1058 = vmatmul.mubr.bf16.gmra.mrb[0].mxu0 %v978
      %v1059 = vpop.f32.mrb[0].mxu0
      %v1060 = vadd.f32 0.0, %v1059
      %v1061 = vpop.f32.mrb[0].mxu0
      %v1062 = vpop.f32.mrb[0].mxu0
      %v1063 = vpop.f32.mrb[0].mxu0
      %1064 = vmatprep.mubr.bf16.mxu0 0
      %1065 = vmatmul.mubr.bf16.gmra.mrb[0].mxu0 %v981
      %v1066 = vpop.f32.mrb[0].mxu0
      %v1067 = vadd.f32 0.0, %v1066
      %v1068 = vpop.f32.mrb[0].mxu0
      %v1069 = vpop.f32.mrb[0].mxu0
      %v1070 = vadd.f32 0.0, %v1069
      %v1071 = vpop.f32.mrb[0].mxu0
      %1072 = vmatprep.mubr.bf16.mxu0 0
      %1073 = vmatmul.mubr.bf16.gmra.mrb[0].mxu0 %v984
      %v1074 = vpop.f32.mrb[0].mxu0
      %v1075 = vpop.f32.mrb[0].mxu0
      %v1076 = vpop.f32.mrb[0].mxu0
      %v1077 = vadd.f32 0.0, %v1076
      %v1078 = vpop.f32.mrb[0].mxu0
      %1079 = vmatprep.mubr.bf16.mxu0 0
      %1080 = vmatmul.mubr.bf16.gmra.mrb[0].mxu0 %v987
      %v1081 = vpop.f32.mrb[0].mxu0
      %v1082 = vadd.f32 0.0, %v1081
      %v1083 = vpop.f32.mrb[0].mxu0
      %v1084 = vpop.f32.mrb[0].mxu0
      %v1085 = vpop.f32.mrb[0].mxu0
      %1086 = vmatprep.mubr.bf16.mxu0 0
      %1087 = vmatmul.mubr.bf16.gmra.mrb[0].mxu0 %v990
      %v1088 = vpop.f32.mrb[0].mxu0
      %v1089 = vadd.f32 0.0, %v1088
      %v1090 = vpop.f32.mrb[0].mxu0
      %v1091 = vpop.f32.mrb[0].mxu0
      %v1092 = vadd.f32 0.0, %v1091
      %v1093 = vpop.f32.mrb[0].mxu0
      %1094 = vmatprep.mubr.bf16.mxu0 0
      %1095 = vmatmul.mubr.bf16.gmra.mrb[0].mxu0 %v993
      %v1096 = vpop.f32.mrb[0].mxu0
      %v1097 = vpop.f32.mrb[0].mxu0
      %v1098 = vpop.f32.mrb[0].mxu0
      %v1099 = vadd.f32 0.0, %v1098
      %v1100 = vpop.f32.mrb[0].mxu0
      %1101 = vmatprep.mubr.bf16.mxu0 0
      %1102 = vmatmul.mubr.bf16.gmra.mrb[0].mxu0 %v996
      %v1103 = vpop.f32.mrb[0].mxu0
      %v1104 = vadd.f32 0.0, %v1103
      %v1105 = vpop.f32.mrb[0].mxu0
      %v1106 = vpop.f32.mrb[0].mxu0
      %v1107 = vpop.f32.mrb[0].mxu0
      %1108 = vmatprep.mubr.bf16.mxu0 0
      %1109 = vmatmul.mubr.bf16.gmra.mrb[0].mxu0 %v999
      %v1110 = vpop.f32.mrb[0].mxu0
      %v1111 = vadd.f32 0.0, %v1110
      %v1112 = vpop.f32.mrb[0].mxu0
      %v1113 = vpop.f32.mrb[0].mxu0
      %v1114 = vadd.f32 0.0, %v1113
      %v1115 = vpop.f32.mrb[0].mxu0
      %1116 = vmatprep.mubr.bf16.mxu0 0
      %1117 = vmatmul.mubr.bf16.gmra.mrb[0].mxu0 %v1002
      %v1118 = vpop.f32.mrb[0].mxu0
      %v1119 = vpop.f32.mrb[0].mxu0
      %v1120 = vpop.f32.mrb[0].mxu0
      %v1121 = vadd.f32 0.0, %v1120
      %v1122 = vpop.f32.mrb[0].mxu0
      %1123 = vmatprep.mubr.bf16.mxu0 0
      %1124 = vmatmul.mubr.bf16.gmra.mrb[0].mxu0 %v1005
      %v1125 = vpop.f32.mrb[0].mxu0
      %v1126 = vadd.f32 0.0, %v1125
      %v1127 = vpop.f32.mrb[0].mxu0
      %v1128 = vpop.f32.mrb[0].mxu0
      %v1129 = vpop.f32.mrb[0].mxu0
      %1130 = vdwg.mxu0
      %v1131 = vadd.f32 %v821, %v1045
      %v1132 = vadd.f32 %v824, %v1048
      %v1133 = vadd.f32 %v831, %v1055
      %v1134 = vadd.f32 %v836, %v1060
      %v1135 = vadd.f32 %v843, %v1067
      %v1136 = vadd.f32 %v846, %v1070
      %v1137 = vadd.f32 %v853, %v1077
      %v1138 = vadd.f32 %v858, %v1082
      %v1139 = vadd.f32 %v865, %v1089
      %v1140 = vadd.f32 %v868, %v1092
      %v1141 = vadd.f32 %v875, %v1099
      %v1142 = vadd.f32 %v880, %v1104
      %v1143 = vadd.f32 %v887, %v1111
      %v1144 = vadd.f32 %v890, %v1114
      %v1145 = vadd.f32 %v897, %v1121
      %v1146 = vadd.f32 %v902, %v1126
      %v1147 = vpack.c.bf16 %v482, %v481
      %v1148 = vpack.c.bf16 %v484, %v483
      %v1149 = vpack.c.bf16 %v486, %v485
      %v1150 = vpack.c.bf16 %v488, %v487
      %v1151 = vpack.c.bf16 %v490, %v489
      %v1152 = vpack.c.bf16 %v492, %v491
      %v1153 = vpack.c.bf16 %v494, %v493
      %v1154 = vpack.c.bf16 %v496, %v495
      %v1155 = vpack.c.bf16 %v498, %v497
      %v1156 = vpack.c.bf16 %v500, %v499
      %v1157 = vpack.c.bf16 %v502, %v501
      %v1158 = vpack.c.bf16 %v504, %v503
      %s1159 = scalar_lea.vmem %s3, 6
      %v1160 = vld [vmem:[%s1159] sm:$0x3]
      %v1162 = vsel %vm585, %v1147, 0
      %v1165 = vsel %vm585, %v1148, 0
      %v1168 = vsel %vm585, %v1149, 0
      %v1171 = vsel %vm585, %v1150, 0
      %v1174 = vsel %vm585, %v1151, 0
      %v1177 = vsel %vm585, %v1152, 0
      %v1180 = vsel %vm585, %v1153, 0
      %v1183 = vsel %vm585, %v1154, 0
      %v1186 = vsel %vm585, %v1155, 0
      %v1189 = vsel %vm585, %v1156, 0
      %v1192 = vsel %vm585, %v1157, 0
      %v1195 = vsel %vm585, %v1158, 0
      %v1198 = vsel %vm622, %v1160, 0
      %1200 = vmatprep.subr.bf16.mxu0 0
      %1201 = vmatpush1.bf16.msra.mxu0 %v1198
      %1202 = vmatprep.subr.bf16.mxu0 0
      %1203 = vmatpush1.bf16.msra.mxu0 0
      %1204 = vmatprep.subr.bf16.mxu0 0
      %1205 = vmatpush1.bf16.msra.mxu0 0
      %1206 = vmatprep.subr.bf16.mxu0 0
      %1207 = vmatpush1.bf16.msra.mxu0 0
      %1208 = vmatprep.subr.bf16.mxu0 0
      %1209 = vmatpush1.bf16.msra.mxu0 0
      %1210 = vmatprep.subr.bf16.mxu0 0
      %1211 = vmatpush1.bf16.msra.mxu0 0
      %1212 = vmatprep.subr.bf16.mxu0 0
      %1213 = vmatpush1.bf16.msra.mxu0 0
      %1214 = vmatprep.subr.bf16.mxu0 0
      %1215 = vmatpush1.bf16.msra.mxu0 0
      %1216 = vmatprep.subr.bf16.mxu0 0
      %1217 = vmatpush1.bf16.msra.mxu0 0
      %1218 = vmatprep.subr.bf16.mxu0 0
      %1219 = vmatpush1.bf16.msra.mxu0 0
      %1220 = vmatprep.subr.bf16.mxu0 0
      %1221 = vmatpush1.bf16.msra.mxu0 0
      %1222 = vmatprep.subr.bf16.mxu0 0
      %1223 = vmatpush1.bf16.msra.mxu0 0
      %1224 = vmatprep.subr.bf16.mxu0 0
      %1225 = vmatpush1.bf16.msra.mxu0 0
      %1226 = vmatprep.subr.bf16.mxu0 0
      %1227 = vmatpush1.bf16.msra.mxu0 0
      %1228 = vmatprep.subr.bf16.mxu0 0
      %1229 = vmatpush1.bf16.msra.mxu0 0
      %1230 = vmatprep.subr.bf16.mxu0 0
      %1231 = vmatpush1.bf16.msra.mxu0 0
      %1232 = vmatprep.mubr.bf16.mxu0 0
      %1233 = vmatmul.mubr.bf16.gmra.mrb[0].mxu0 %v1162
      %v1234 = vpop.f32.mrb[0].mxu0
      %v1235 = vadd.f32 0.0, %v1234
      %v1236 = vpop.f32.mrb[0].mxu0
      %v1237 = vpop.f32.mrb[0].mxu0
      %v1238 = vadd.f32 0.0, %v1237
      %v1239 = vpop.f32.mrb[0].mxu0
      %1240 = vmatprep.mubr.bf16.mxu0 0
      %1241 = vmatmul.mubr.bf16.gmra.mrb[0].mxu0 %v1165
      %v1242 = vpop.f32.mrb[0].mxu0
      %v1243 = vpop.f32.mrb[0].mxu0
      %v1244 = vpop.f32.mrb[0].mxu0
      %v1245 = vadd.f32 0.0, %v1244
      %v1246 = vpop.f32.mrb[0].mxu0
      %1247 = vmatprep.mubr.bf16.mxu0 0
      %1248 = vmatmul.mubr.bf16.gmra.mrb[0].mxu0 %v1168
      %v1249 = vpop.f32.mrb[0].mxu0
      %v1250 = vadd.f32 0.0, %v1249
      %v1251 = vpop.f32.mrb[0].mxu0
      %v1252 = vpop.f32.mrb[0].mxu0
      %v1253 = vpop.f32.mrb[0].mxu0
      %1254 = vmatprep.mubr.bf16.mxu0 0
      %1255 = vmatmul.mubr.bf16.gmra.mrb[0].mxu0 %v1171
      %v1256 = vpop.f32.mrb[0].mxu0
      %v1257 = vadd.f32 0.0, %v1256
      %v1258 = vpop.f32.mrb[0].mxu0
      %v1259 = vpop.f32.mrb[0].mxu0
      %v1260 = vadd.f32 0.0, %v1259
      %v1261 = vpop.f32.mrb[0].mxu0
      %1262 = vmatprep.mubr.bf16.mxu0 0
      %1263 = vmatmul.mubr.bf16.gmra.mrb[0].mxu0 %v1174
      %v1264 = vpop.f32.mrb[0].mxu0
      %v1265 = vpop.f32.mrb[0].mxu0
      %v1266 = vpop.f32.mrb[0].mxu0
      %v1267 = vadd.f32 0.0, %v1266
      %v1268 = vpop.f32.mrb[0].mxu0
      %1269 = vmatprep.mubr.bf16.mxu0 0
      %1270 = vmatmul.mubr.bf16.gmra.mrb[0].mxu0 %v1177
      %v1271 = vpop.f32.mrb[0].mxu0
      %v1272 = vadd.f32 0.0, %v1271
      %v1273 = vpop.f32.mrb[0].mxu0
      %v1274 = vpop.f32.mrb[0].mxu0
      %v1275 = vpop.f32.mrb[0].mxu0
      %1276 = vmatprep.mubr.bf16.mxu0 0
      %1277 = vmatmul.mubr.bf16.gmra.mrb[0].mxu0 %v1180
      %v1278 = vpop.f32.mrb[0].mxu0
      %v1279 = vadd.f32 0.0, %v1278
      %v1280 = vpop.f32.mrb[0].mxu0
      %v1281 = vpop.f32.mrb[0].mxu0
      %v1282 = vadd.f32 0.0, %v1281
      %v1283 = vpop.f32.mrb[0].mxu0
      %1284 = vmatprep.mubr.bf16.mxu0 0
      %1285 = vmatmul.mubr.bf16.gmra.mrb[0].mxu0 %v1183
      %v1286 = vpop.f32.mrb[0].mxu0
      %v1287 = vpop.f32.mrb[0].mxu0
      %v1288 = vpop.f32.mrb[0].mxu0
      %v1289 = vadd.f32 0.0, %v1288
      %v1290 = vpop.f32.mrb[0].mxu0
      %1291 = vmatprep.mubr.bf16.mxu0 0
      %1292 = vmatmul.mubr.bf16.gmra.mrb[0].mxu0 %v1186
      %v1293 = vpop.f32.mrb[0].mxu0
      %v1294 = vadd.f32 0.0, %v1293
      %v1295 = vpop.f32.mrb[0].mxu0
      %v1296 = vpop.f32.mrb[0].mxu0
      %v1297 = vpop.f32.mrb[0].mxu0
      %1298 = vmatprep.mubr.bf16.mxu0 0
      %1299 = vmatmul.mubr.bf16.gmra.mrb[0].mxu0 %v1189
      %v1300 = vpop.f32.mrb[0].mxu0
      %v1301 = vadd.f32 0.0, %v1300
      %v1302 = vpop.f32.mrb[0].mxu0
      %v1303 = vpop.f32.mrb[0].mxu0
      %v1304 = vadd.f32 0.0, %v1303
      %v1305 = vpop.f32.mrb[0].mxu0
      %1306 = vmatprep.mubr.bf16.mxu0 0
      %1307 = vmatmul.mubr.bf16.gmra.mrb[0].mxu0 %v1192
      %v1308 = vpop.f32.mrb[0].mxu0
      %v1309 = vpop.f32.mrb[0].mxu0
      %v1310 = vpop.f32.mrb[0].mxu0
      %v1311 = vadd.f32 0.0, %v1310
      %v1312 = vpop.f32.mrb[0].mxu0
      %1313 = vmatprep.mubr.bf16.mxu0 0
      %1314 = vmatmul.mubr.bf16.gmra.mrb[0].mxu0 %v1195
      %v1315 = vpop.f32.mrb[0].mxu0
      %v1316 = vadd.f32 0.0, %v1315
      %v1317 = vpop.f32.mrb[0].mxu0
      %v1318 = vpop.f32.mrb[0].mxu0
      %v1319 = vpop.f32.mrb[0].mxu0
      %1320 = vdwg.mxu0
      %v1321 = vadd.f32 %v1131, %v1235
      %v1322 = vadd.f32 %v1132, %v1238
      %v1323 = vadd.f32 %v1133, %v1245
      %v1324 = vadd.f32 %v1134, %v1250
      %v1325 = vadd.f32 %v1135, %v1257
      %v1326 = vadd.f32 %v1136, %v1260
      %v1327 = vadd.f32 %v1137, %v1267
      %v1328 = vadd.f32 %v1138, %v1272
      %v1329 = vadd.f32 %v1139, %v1279
      %v1330 = vadd.f32 %v1140, %v1282
      %v1331 = vadd.f32 %v1141, %v1289
      %v1332 = vadd.f32 %v1142, %v1294
      %v1333 = vadd.f32 %v1143, %v1301
      %v1334 = vadd.f32 %v1144, %v1304
      %v1335 = vadd.f32 %v1145, %v1311
      %v1336 = vadd.f32 %v1146, %v1316
      %v1337 = vrot.slane %v503, 1
      %v1338 = vrot.slane %v504, 1
      %v1339 = vrot.slane %v505, 1
      %v1340 = vsel %vm546, %v1338, %v1339
      %v1341 = vsel %vm546, %v1337, %v1338
      %v1342 = vsel %vm546, %v545, %v1337
      %v1343 = vpack.c.bf16 %v566, %v567
      %v1344 = vpack.c.bf16 %v564, %v565
      %v1345 = vpack.c.bf16 %v562, %v563
      %v1346 = vpack.c.bf16 %v560, %v561
      %v1347 = vpack.c.bf16 %v558, %v559
      %v1348 = vpack.c.bf16 %v556, %v557
      %v1349 = vpack.c.bf16 %v554, %v555
      %v1350 = vpack.c.bf16 %v552, %v553
      %v1351 = vpack.c.bf16 %v550, %v551
      %v1352 = vpack.c.bf16 %v548, %v549
      %v1353 = vpack.c.bf16 %v1342, %v547
      %v1354 = vpack.c.bf16 %v1340, %v1341
      %s1355 = scalar_lea.vmem %s3, 8
      %v1356 = vld [vmem:[%s1355] sm:$0x3]
      %v1358 = vsel %vm585, %v1343, 0
      %v1361 = vsel %vm585, %v1344, 0
      %v1364 = vsel %vm585, %v1345, 0
      %v1367 = vsel %vm585, %v1346, 0
      %v1370 = vsel %vm585, %v1347, 0
      %v1373 = vsel %vm585, %v1348, 0
      %v1376 = vsel %vm585, %v1349, 0
      %v1379 = vsel %vm585, %v1350, 0
      %v1382 = vsel %vm585, %v1351, 0
      %v1385 = vsel %vm585, %v1352, 0
      %v1388 = vsel %vm585, %v1353, 0
      %v1391 = vsel %vm585, %v1354, 0
      %v1394 = vsel %vm622, %v1356, 0
      %1396 = vmatprep.subr.bf16.mxu0 0
      %1397 = vmatpush1.bf16.msra.mxu0 %v1394
      %1398 = vmatprep.subr.bf16.mxu0 0
      %1399 = vmatpush1.bf16.msra.mxu0 0
      %1400 = vmatprep.subr.bf16.mxu0 0
      %1401 = vmatpush1.bf16.msra.mxu0 0
      %1402 = vmatprep.subr.bf16.mxu0 0
      %1403 = vmatpush1.bf16.msra.mxu0 0
      %1404 = vmatprep.subr.bf16.mxu0 0
      %1405 = vmatpush1.bf16.msra.mxu0 0
      %1406 = vmatprep.subr.bf16.mxu0 0
      %1407 = vmatpush1.bf16.msra.mxu0 0
      %1408 = vmatprep.subr.bf16.mxu0 0
      %1409 = vmatpush1.bf16.msra.mxu0 0
      %1410 = vmatprep.subr.bf16.mxu0 0
      %1411 = vmatpush1.bf16.msra.mxu0 0
      %1412 = vmatprep.subr.bf16.mxu0 0
      %1413 = vmatpush1.bf16.msra.mxu0 0
      %1414 = vmatprep.subr.bf16.mxu0 0
      %1415 = vmatpush1.bf16.msra.mxu0 0
      %1416 = vmatprep.subr.bf16.mxu0 0
      %1417 = vmatpush1.bf16.msra.mxu0 0
      %1418 = vmatprep.subr.bf16.mxu0 0
      %1419 = vmatpush1.bf16.msra.mxu0 0
      %1420 = vmatprep.subr.bf16.mxu0 0
      %1421 = vmatpush1.bf16.msra.mxu0 0
      %1422 = vmatprep.subr.bf16.mxu0 0
      %1423 = vmatpush1.bf16.msra.mxu0 0
      %1424 = vmatprep.subr.bf16.mxu0 0
      %1425 = vmatpush1.bf16.msra.mxu0 0
      %1426 = vmatprep.subr.bf16.mxu0 0
      %1427 = vmatpush1.bf16.msra.mxu0 0
      %1428 = vmatprep.mubr.bf16.mxu0 0
      %1429 = vmatmul.mubr.bf16.gmra.mrb[0].mxu0 %v1358
      %v1430 = vpop.f32.mrb[0].mxu0
      %v1431 = vadd.f32 0.0, %v1430
      %v1432 = vpop.f32.mrb[0].mxu0
      %v1433 = vpop.f32.mrb[0].mxu0
      %v1434 = vadd.f32 0.0, %v1433
      %v1435 = vpop.f32.mrb[0].mxu0
      %1436 = vmatprep.mubr.bf16.mxu0 0
      %1437 = vmatmul.mubr.bf16.gmra.mrb[0].mxu0 %v1361
      %v1438 = vpop.f32.mrb[0].mxu0
      %v1439 = vpop.f32.mrb[0].mxu0
      %v1440 = vpop.f32.mrb[0].mxu0
      %v1441 = vadd.f32 0.0, %v1440
      %v1442 = vpop.f32.mrb[0].mxu0
      %1443 = vmatprep.mubr.bf16.mxu0 0
      %1444 = vmatmul.mubr.bf16.gmra.mrb[0].mxu0 %v1364
      %v1445 = vpop.f32.mrb[0].mxu0
      %v1446 = vadd.f32 0.0, %v1445
      %v1447 = vpop.f32.mrb[0].mxu0
      %v1448 = vpop.f32.mrb[0].mxu0
      %v1449 = vpop.f32.mrb[0].mxu0
      %1450 = vmatprep.mubr.bf16.mxu0 0
      %1451 = vmatmul.mubr.bf16.gmra.mrb[0].mxu0 %v1367
      %v1452 = vpop.f32.mrb[0].mxu0
      %v1453 = vadd.f32 0.0, %v1452
      %v1454 = vpop.f32.mrb[0].mxu0
      %v1455 = vpop.f32.mrb[0].mxu0
      %v1456 = vadd.f32 0.0, %v1455
      %v1457 = vpop.f32.mrb[0].mxu0
      %1458 = vmatprep.mubr.bf16.mxu0 0
      %1459 = vmatmul.mubr.bf16.gmra.mrb[0].mxu0 %v1370
      %v1460 = vpop.f32.mrb[0].mxu0
      %v1461 = vpop.f32.mrb[0].mxu0
      %v1462 = vpop.f32.mrb[0].mxu0
      %v1463 = vadd.f32 0.0, %v1462
      %v1464 = vpop.f32.mrb[0].mxu0
      %1465 = vmatprep.mubr.bf16.mxu0 0
      %1466 = vmatmul.mubr.bf16.gmra.mrb[0].mxu0 %v1373
      %v1467 = vpop.f32.mrb[0].mxu0
      %v1468 = vadd.f32 0.0, %v1467
      %v1469 = vpop.f32.mrb[0].mxu0
      %v1470 = vpop.f32.mrb[0].mxu0
      %v1471 = vpop.f32.mrb[0].mxu0
      %1472 = vmatprep.mubr.bf16.mxu0 0
      %1473 = vmatmul.mubr.bf16.gmra.mrb[0].mxu0 %v1376
      %v1474 = vpop.f32.mrb[0].mxu0
      %v1475 = vadd.f32 0.0, %v1474
      %v1476 = vpop.f32.mrb[0].mxu0
      %v1477 = vpop.f32.mrb[0].mxu0
      %v1478 = vadd.f32 0.0, %v1477
      %v1479 = vpop.f32.mrb[0].mxu0
      %1480 = vmatprep.mubr.bf16.mxu0 0
      %1481 = vmatmul.mubr.bf16.gmra.mrb[0].mxu0 %v1379
      %v1482 = vpop.f32.mrb[0].mxu0
      %v1483 = vpop.f32.mrb[0].mxu0
      %v1484 = vpop.f32.mrb[0].mxu0
      %v1485 = vadd.f32 0.0, %v1484
      %v1486 = vpop.f32.mrb[0].mxu0
      %1487 = vmatprep.mubr.bf16.mxu0 0
      %1488 = vmatmul.mubr.bf16.gmra.mrb[0].mxu0 %v1382
      %v1489 = vpop.f32.mrb[0].mxu0
      %v1490 = vadd.f32 0.0, %v1489
      %v1491 = vpop.f32.mrb[0].mxu0
      %v1492 = vpop.f32.mrb[0].mxu0
      %v1493 = vpop.f32.mrb[0].mxu0
      %1494 = vmatprep.mubr.bf16.mxu0 0
      %1495 = vmatmul.mubr.bf16.gmra.mrb[0].mxu0 %v1385
      %v1496 = vpop.f32.mrb[0].mxu0
      %v1497 = vadd.f32 0.0, %v1496
      %v1498 = vpop.f32.mrb[0].mxu0
      %v1499 = vpop.f32.mrb[0].mxu0
      %v1500 = vadd.f32 0.0, %v1499
      %v1501 = vpop.f32.mrb[0].mxu0
      %1502 = vmatprep.mubr.bf16.mxu0 0
      %1503 = vmatmul.mubr.bf16.gmra.mrb[0].mxu0 %v1388
      %v1504 = vpop.f32.mrb[0].mxu0
      %v1505 = vpop.f32.mrb[0].mxu0
      %v1506 = vpop.f32.mrb[0].mxu0
      %v1507 = vadd.f32 0.0, %v1506
      %v1508 = vpop.f32.mrb[0].mxu0
      %1509 = vmatprep.mubr.bf16.mxu0 0
      %1510 = vmatmul.mubr.bf16.gmra.mrb[0].mxu0 %v1391
      %v1511 = vpop.f32.mrb[0].mxu0
      %v1512 = vadd.f32 0.0, %v1511
      %v1513 = vpop.f32.mrb[0].mxu0
      %v1514 = vpop.f32.mrb[0].mxu0
      %v1515 = vpop.f32.mrb[0].mxu0
      %1516 = vdwg.mxu0
      %v1517 = vadd.f32 %v1321, %v1431
      %v1518 = vadd.f32 %v1322, %v1434
      %v1519 = vadd.f32 %v1323, %v1441
      %v1520 = vadd.f32 %v1324, %v1446
      %v1521 = vadd.f32 %v1325, %v1453
      %v1522 = vadd.f32 %v1326, %v1456
      %v1523 = vadd.f32 %v1327, %v1463
      %v1524 = vadd.f32 %v1328, %v1468
      %v1525 = vadd.f32 %v1329, %v1475
      %v1526 = vadd.f32 %v1330, %v1478
      %v1527 = vadd.f32 %v1331, %v1485
      %v1528 = vadd.f32 %v1332, %v1490
      %v1529 = vadd.f32 %v1333, %v1497
      %v1530 = vadd.f32 %v1334, %v1500
      %v1531 = vadd.f32 %v1335, %v1507
      %v1532 = vadd.f32 %v1336, %v1512
      %v1533 = vrot.slane %v503, 2
      %v1534 = vrot.slane %v504, 2
      %v1535 = vrot.slane %v505, 2
      %v1536 = vsel %vm932, %v1534, %v1535
      %v1537 = vsel %vm932, %v1533, %v1534
      %v1538 = vsel %vm932, %v931, %v1533
      %v1539 = vpack.c.bf16 %v952, %v953
      %v1540 = vpack.c.bf16 %v950, %v951
      %v1541 = vpack.c.bf16 %v948, %v949
      %v1542 = vpack.c.bf16 %v946, %v947
      %v1543 = vpack.c.bf16 %v944, %v945
      %v1544 = vpack.c.bf16 %v942, %v943
      %v1545 = vpack.c.bf16 %v940, %v941
      %v1546 = vpack.c.bf16 %v938, %v939
      %v1547 = vpack.c.bf16 %v936, %v937
      %v1548 = vpack.c.bf16 %v934, %v935
      %v1549 = vpack.c.bf16 %v1538, %v933
      %v1550 = vpack.c.bf16 %v1536, %v1537
      %s1551 = scalar_lea.vmem %s3, 10
      %v1552 = vld [vmem:[%s1551] sm:$0x3]
      %v1554 = vsel %vm585, %v1539, 0
      %v1557 = vsel %vm585, %v1540, 0
      %v1560 = vsel %vm585, %v1541, 0
      %v1563 = vsel %vm585, %v1542, 0
      %v1566 = vsel %vm585, %v1543, 0
      %v1569 = vsel %vm585, %v1544, 0
      %v1572 = vsel %vm585, %v1545, 0
      %v1575 = vsel %vm585, %v1546, 0
      %v1578 = vsel %vm585, %v1547, 0
      %v1581 = vsel %vm585, %v1548, 0
      %v1584 = vsel %vm585, %v1549, 0
      %v1587 = vsel %vm585, %v1550, 0
      %v1590 = vsel %vm622, %v1552, 0
      %1592 = vmatprep.subr.bf16.mxu0 0
      %1593 = vmatpush1.bf16.msra.mxu0 %v1590
      %1594 = vmatprep.subr.bf16.mxu0 0
      %1595 = vmatpush1.bf16.msra.mxu0 0
      %1596 = vmatprep.subr.bf16.mxu0 0
      %1597 = vmatpush1.bf16.msra.mxu0 0
      %1598 = vmatprep.subr.bf16.mxu0 0
      %1599 = vmatpush1.bf16.msra.mxu0 0
      %1600 = vmatprep.subr.bf16.mxu0 0
      %1601 = vmatpush1.bf16.msra.mxu0 0
      %1602 = vmatprep.subr.bf16.mxu0 0
      %1603 = vmatpush1.bf16.msra.mxu0 0
      %1604 = vmatprep.subr.bf16.mxu0 0
      %1605 = vmatpush1.bf16.msra.mxu0 0
      %1606 = vmatprep.subr.bf16.mxu0 0
      %1607 = vmatpush1.bf16.msra.mxu0 0
      %1608 = vmatprep.subr.bf16.mxu0 0
      %1609 = vmatpush1.bf16.msra.mxu0 0
      %1610 = vmatprep.subr.bf16.mxu0 0
      %1611 = vmatpush1.bf16.msra.mxu0 0
      %1612 = vmatprep.subr.bf16.mxu0 0
      %1613 = vmatpush1.bf16.msra.mxu0 0
      %1614 = vmatprep.subr.bf16.mxu0 0
      %1615 = vmatpush1.bf16.msra.mxu0 0
      %1616 = vmatprep.subr.bf16.mxu0 0
      %1617 = vmatpush1.bf16.msra.mxu0 0
      %1618 = vmatprep.subr.bf16.mxu0 0
      %1619 = vmatpush1.bf16.msra.mxu0 0
      %1620 = vmatprep.subr.bf16.mxu0 0
      %1621 = vmatpush1.bf16.msra.mxu0 0
      %1622 = vmatprep.subr.bf16.mxu0 0
      %1623 = vmatpush1.bf16.msra.mxu0 0
      %1624 = vmatprep.mubr.bf16.mxu0 0
      %1625 = vmatmul.mubr.bf16.gmra.mrb[0].mxu0 %v1554
      %v1626 = vpop.f32.mrb[0].mxu0
      %v1627 = vadd.f32 0.0, %v1626
      %v1628 = vpop.f32.mrb[0].mxu0
      %v1629 = vpop.f32.mrb[0].mxu0
      %v1630 = vadd.f32 0.0, %v1629
      %v1631 = vpop.f32.mrb[0].mxu0
      %1632 = vmatprep.mubr.bf16.mxu0 0
      %1633 = vmatmul.mubr.bf16.gmra.mrb[0].mxu0 %v1557
      %v1634 = vpop.f32.mrb[0].mxu0
      %v1635 = vpop.f32.mrb[0].mxu0
      %v1636 = vpop.f32.mrb[0].mxu0
      %v1637 = vadd.f32 0.0, %v1636
      %v1638 = vpop.f32.mrb[0].mxu0
      %1639 = vmatprep.mubr.bf16.mxu0 0
      %1640 = vmatmul.mubr.bf16.gmra.mrb[0].mxu0 %v1560
      %v1641 = vpop.f32.mrb[0].mxu0
      %v1642 = vadd.f32 0.0, %v1641
      %v1643 = vpop.f32.mrb[0].mxu0
      %v1644 = vpop.f32.mrb[0].mxu0
      %v1645 = vpop.f32.mrb[0].mxu0
      %1646 = vmatprep.mubr.bf16.mxu0 0
      %1647 = vmatmul.mubr.bf16.gmra.mrb[0].mxu0 %v1563
      %v1648 = vpop.f32.mrb[0].mxu0
      %v1649 = vadd.f32 0.0, %v1648
      %v1650 = vpop.f32.mrb[0].mxu0
      %v1651 = vpop.f32.mrb[0].mxu0
      %v1652 = vadd.f32 0.0, %v1651
      %v1653 = vpop.f32.mrb[0].mxu0
      %1654 = vmatprep.mubr.bf16.mxu0 0
      %1655 = vmatmul.mubr.bf16.gmra.mrb[0].mxu0 %v1566
      %v1656 = vpop.f32.mrb[0].mxu0
      %v1657 = vpop.f32.mrb[0].mxu0
      %v1658 = vpop.f32.mrb[0].mxu0
      %v1659 = vadd.f32 0.0, %v1658
      %v1660 = vpop.f32.mrb[0].mxu0
      %1661 = vmatprep.mubr.bf16.mxu0 0
      %1662 = vmatmul.mubr.bf16.gmra.mrb[0].mxu0 %v1569
      %v1663 = vpop.f32.mrb[0].mxu0
      %v1664 = vadd.f32 0.0, %v1663
      %v1665 = vpop.f32.mrb[0].mxu0
      %v1666 = vpop.f32.mrb[0].mxu0
      %v1667 = vpop.f32.mrb[0].mxu0
      %1668 = vmatprep.mubr.bf16.mxu0 0
      %1669 = vmatmul.mubr.bf16.gmra.mrb[0].mxu0 %v1572
      %v1670 = vpop.f32.mrb[0].mxu0
      %v1671 = vadd.f32 0.0, %v1670
      %v1672 = vpop.f32.mrb[0].mxu0
      %v1673 = vpop.f32.mrb[0].mxu0
      %v1674 = vadd.f32 0.0, %v1673
      %v1675 = vpop.f32.mrb[0].mxu0
      %1676 = vmatprep.mubr.bf16.mxu0 0
      %1677 = vmatmul.mubr.bf16.gmra.mrb[0].mxu0 %v1575
      %v1678 = vpop.f32.mrb[0].mxu0
      %v1679 = vpop.f32.mrb[0].mxu0
      %v1680 = vpop.f32.mrb[0].mxu0
      %v1681 = vadd.f32 0.0, %v1680
      %v1682 = vpop.f32.mrb[0].mxu0
      %1683 = vmatprep.mubr.bf16.mxu0 0
      %1684 = vmatmul.mubr.bf16.gmra.mrb[0].mxu0 %v1578
      %v1685 = vpop.f32.mrb[0].mxu0
      %v1686 = vadd.f32 0.0, %v1685
      %v1687 = vpop.f32.mrb[0].mxu0
      %v1688 = vpop.f32.mrb[0].mxu0
      %v1689 = vpop.f32.mrb[0].mxu0
      %1690 = vmatprep.mubr.bf16.mxu0 0
      %1691 = vmatmul.mubr.bf16.gmra.mrb[0].mxu0 %v1581
      %v1692 = vpop.f32.mrb[0].mxu0
      %v1693 = vadd.f32 0.0, %v1692
      %v1694 = vpop.f32.mrb[0].mxu0
      %v1695 = vpop.f32.mrb[0].mxu0
      %v1696 = vadd.f32 0.0, %v1695
      %v1697 = vpop.f32.mrb[0].mxu0
      %1698 = vmatprep.mubr.bf16.mxu0 0
      %1699 = vmatmul.mubr.bf16.gmra.mrb[0].mxu0 %v1584
      %v1700 = vpop.f32.mrb[0].mxu0
      %v1701 = vpop.f32.mrb[0].mxu0
      %v1702 = vpop.f32.mrb[0].mxu0
      %v1703 = vadd.f32 0.0, %v1702
      %v1704 = vpop.f32.mrb[0].mxu0
      %1705 = vmatprep.mubr.bf16.mxu0 0
      %1706 = vmatmul.mubr.bf16.gmra.mrb[0].mxu0 %v1587
      %v1707 = vpop.f32.mrb[0].mxu0
      %v1708 = vadd.f32 0.0, %v1707
      %v1709 = vpop.f32.mrb[0].mxu0
      %v1710 = vpop.f32.mrb[0].mxu0
      %v1711 = vpop.f32.mrb[0].mxu0
      %1712 = vdwg.mxu0
      %v1713 = vadd.f32 %v1517, %v1627
      %v1714 = vadd.f32 %v1518, %v1630
      %v1715 = vadd.f32 %v1519, %v1637
      %v1716 = vadd.f32 %v1520, %v1642
      %v1717 = vadd.f32 %v1521, %v1649
      %v1718 = vadd.f32 %v1522, %v1652
      %v1719 = vadd.f32 %v1523, %v1659
      %v1720 = vadd.f32 %v1524, %v1664
      %v1721 = vadd.f32 %v1525, %v1671
      %v1722 = vadd.f32 %v1526, %v1674
      %v1723 = vadd.f32 %v1527, %v1681
      %v1724 = vadd.f32 %v1528, %v1686
      %v1725 = vadd.f32 %v1529, %v1693
      %v1726 = vadd.f32 %v1530, %v1696
      %v1727 = vadd.f32 %v1531, %v1703
      %v1728 = vadd.f32 %v1532, %v1708
      %v1729 = vpack.c.bf16 %v503, %v502
      %v1730 = vpack.c.bf16 %v505, %v504
      %v1731 = vpack.c.bf16 %v507, %v506
      %s1732 = scalar_lea.vmem %s3, 12
      %v1733 = vld [vmem:[%s1732] sm:$0x3]
      %v1735 = vsel %vm585, %v1729, 0
      %v1738 = vsel %vm585, %v1730, 0
      %v1741 = vsel %vm585, %v1731, 0
      %v1744 = vsel %vm622, %v1733, 0
      %1746 = vmatprep.subr.bf16.mxu0 0
      %1747 = vmatpush1.bf16.msra.mxu0 %v1744
      %1748 = vmatprep.subr.bf16.mxu0 0
      %1749 = vmatpush1.bf16.msra.mxu0 0
      %1750 = vmatprep.subr.bf16.mxu0 0
      %1751 = vmatpush1.bf16.msra.mxu0 0
      %1752 = vmatprep.subr.bf16.mxu0 0
      %1753 = vmatpush1.bf16.msra.mxu0 0
      %1754 = vmatprep.subr.bf16.mxu0 0
      %1755 = vmatpush1.bf16.msra.mxu0 0
      %1756 = vmatprep.subr.bf16.mxu0 0
      %1757 = vmatpush1.bf16.msra.mxu0 0
      %1758 = vmatprep.subr.bf16.mxu0 0
      %1759 = vmatpush1.bf16.msra.mxu0 0
      %1760 = vmatprep.subr.bf16.mxu0 0
      %1761 = vmatpush1.bf16.msra.mxu0 0
      %1762 = vmatprep.subr.bf16.mxu0 0
      %1763 = vmatpush1.bf16.msra.mxu0 0
      %1764 = vmatprep.subr.bf16.mxu0 0
      %1765 = vmatpush1.bf16.msra.mxu0 0
      %1766 = vmatprep.subr.bf16.mxu0 0
      %1767 = vmatpush1.bf16.msra.mxu0 0
      %1768 = vmatprep.subr.bf16.mxu0 0
      %1769 = vmatpush1.bf16.msra.mxu0 0
      %1770 = vmatprep.subr.bf16.mxu0 0
      %1771 = vmatpush1.bf16.msra.mxu0 0
      %1772 = vmatprep.subr.bf16.mxu0 0
      %1773 = vmatpush1.bf16.msra.mxu0 0
      %1774 = vmatprep.subr.bf16.mxu0 0
      %1775 = vmatpush1.bf16.msra.mxu0 0
      %1776 = vmatprep.subr.bf16.mxu0 0
      %1777 = vmatpush1.bf16.msra.mxu0 0
      %1778 = vmatprep.mubr.bf16.mxu0 0
      %1779 = vmatmul.mubr.bf16.gmra.mrb[0].mxu0 %v757
      %v1780 = vpop.f32.mrb[0].mxu0
      %v1781 = vadd.f32 0.0, %v1780
      %v1782 = vpop.f32.mrb[0].mxu0
      %v1783 = vpop.f32.mrb[0].mxu0
      %v1784 = vadd.f32 0.0, %v1783
      %v1785 = vpop.f32.mrb[0].mxu0
      %1786 = vmatprep.mubr.bf16.mxu0 0
      %1787 = vmatmul.mubr.bf16.gmra.mrb[0].mxu0 %v760
      %v1788 = vpop.f32.mrb[0].mxu0
      %v1789 = vpop.f32.mrb[0].mxu0
      %v1790 = vpop.f32.mrb[0].mxu0
      %v1791 = vadd.f32 0.0, %v1790
      %v1792 = vpop.f32.mrb[0].mxu0
      %1793 = vmatprep.mubr.bf16.mxu0 0
      %1794 = vmatmul.mubr.bf16.gmra.mrb[0].mxu0 %v763
      %v1795 = vpop.f32.mrb[0].mxu0
      %v1796 = vadd.f32 0.0, %v1795
      %v1797 = vpop.f32.mrb[0].mxu0
      %v1798 = vpop.f32.mrb[0].mxu0
      %v1799 = vpop.f32.mrb[0].mxu0
      %1800 = vmatprep.mubr.bf16.mxu0 0
      %1801 = vmatmul.mubr.bf16.gmra.mrb[0].mxu0 %v766
      %v1802 = vpop.f32.mrb[0].mxu0
      %v1803 = vadd.f32 0.0, %v1802
      %v1804 = vpop.f32.mrb[0].mxu0
      %v1805 = vpop.f32.mrb[0].mxu0
      %v1806 = vadd.f32 0.0, %v1805
      %v1807 = vpop.f32.mrb[0].mxu0
      %1808 = vmatprep.mubr.bf16.mxu0 0
      %1809 = vmatmul.mubr.bf16.gmra.mrb[0].mxu0 %v769
      %v1810 = vpop.f32.mrb[0].mxu0
      %v1811 = vpop.f32.mrb[0].mxu0
      %v1812 = vpop.f32.mrb[0].mxu0
      %v1813 = vadd.f32 0.0, %v1812
      %v1814 = vpop.f32.mrb[0].mxu0
      %1815 = vmatprep.mubr.bf16.mxu0 0
      %1816 = vmatmul.mubr.bf16.gmra.mrb[0].mxu0 %v772
      %v1817 = vpop.f32.mrb[0].mxu0
      %v1818 = vadd.f32 0.0, %v1817
      %v1819 = vpop.f32.mrb[0].mxu0
      %v1820 = vpop.f32.mrb[0].mxu0
      %v1821 = vpop.f32.mrb[0].mxu0
      %1822 = vmatprep.mubr.bf16.mxu0 0
      %1823 = vmatmul.mubr.bf16.gmra.mrb[0].mxu0 %v775
      %v1824 = vpop.f32.mrb[0].mxu0
      %v1825 = vadd.f32 0.0, %v1824
      %v1826 = vpop.f32.mrb[0].mxu0
      %v1827 = vpop.f32.mrb[0].mxu0
      %v1828 = vadd.f32 0.0, %v1827
      %v1829 = vpop.f32.mrb[0].mxu0
      %1830 = vmatprep.mubr.bf16.mxu0 0
      %1831 = vmatmul.mubr.bf16.gmra.mrb[0].mxu0 %v778
      %v1832 = vpop.f32.mrb[0].mxu0
      %v1833 = vpop.f32.mrb[0].mxu0
      %v1834 = vpop.f32.mrb[0].mxu0
      %v1835 = vadd.f32 0.0, %v1834
      %v1836 = vpop.f32.mrb[0].mxu0
      %1837 = vmatprep.mubr.bf16.mxu0 0
      %1838 = vmatmul.mubr.bf16.gmra.mrb[0].mxu0 %v781
      %v1839 = vpop.f32.mrb[0].mxu0
      %v1840 = vadd.f32 0.0, %v1839
      %v1841 = vpop.f32.mrb[0].mxu0
      %v1842 = vpop.f32.mrb[0].mxu0
      %v1843 = vpop.f32.mrb[0].mxu0
      %1844 = vmatprep.mubr.bf16.mxu0 0
      %1845 = vmatmul.mubr.bf16.gmra.mrb[0].mxu0 %v1735
      %v1846 = vpop.f32.mrb[0].mxu0
      %v1847 = vadd.f32 0.0, %v1846
      %v1848 = vpop.f32.mrb[0].mxu0
      %v1849 = vpop.f32.mrb[0].mxu0
      %v1850 = vadd.f32 0.0, %v1849
      %v1851 = vpop.f32.mrb[0].mxu0
      %1852 = vmatprep.mubr.bf16.mxu0 0
      %1853 = vmatmul.mubr.bf16.gmra.mrb[0].mxu0 %v1738
      %v1854 = vpop.f32.mrb[0].mxu0
      %v1855 = vpop.f32.mrb[0].mxu0
      %v1856 = vpop.f32.mrb[0].mxu0
      %v1857 = vadd.f32 0.0, %v1856
      %v1858 = vpop.f32.mrb[0].mxu0
      %1859 = vmatprep.mubr.bf16.mxu0 0
      %1860 = vmatmul.mubr.bf16.gmra.mrb[0].mxu0 %v1741
      %v1861 = vpop.f32.mrb[0].mxu0
      %v1862 = vadd.f32 0.0, %v1861
      %v1863 = vpop.f32.mrb[0].mxu0
      %v1864 = vpop.f32.mrb[0].mxu0
      %v1865 = vpop.f32.mrb[0].mxu0
      %1866 = vdwg.mxu0
      %v1867 = vadd.f32 %v1713, %v1781
      %v1868 = vadd.f32 %v1714, %v1784
      %v1869 = vadd.f32 %v1715, %v1791
      %v1870 = vadd.f32 %v1716, %v1796
      %v1871 = vadd.f32 %v1717, %v1803
      %v1872 = vadd.f32 %v1718, %v1806
      %v1873 = vadd.f32 %v1719, %v1813
      %v1874 = vadd.f32 %v1720, %v1818
      %v1875 = vadd.f32 %v1721, %v1825
      %v1876 = vadd.f32 %v1722, %v1828
      %v1877 = vadd.f32 %v1723, %v1835
      %v1878 = vadd.f32 %v1724, %v1840
      %v1879 = vadd.f32 %v1725, %v1847
      %v1880 = vadd.f32 %v1726, %v1850
      %v1881 = vadd.f32 %v1727, %v1857
      %v1882 = vadd.f32 %v1728, %v1862
      %v1883 = vrot.slane %v506, 1
      %v1884 = vrot.slane %v507, 1
      %v1885 = vsel %vm546, %v1883, %v1884
      %v1886 = vsel %vm546, %v1339, %v1883
      %v1887 = vsel %vm546, %v1884, %v521
      %v1888 = vpack.c.bf16 %v1341, %v1342
      %v1889 = vpack.c.bf16 %v1886, %v1340
      %v1890 = vpack.c.bf16 %v1887, %v1885
      %s1891 = scalar_lea.vmem %s3, 14
      %v1892 = vld [vmem:[%s1891] sm:$0x3]
      %v1894 = vsel %vm585, %v1888, 0
      %v1897 = vsel %vm585, %v1889, 0
      %v1900 = vsel %vm585, %v1890, 0
      %v1903 = vsel %vm622, %v1892, 0
      %1905 = vmatprep.subr.bf16.mxu0 0
      %1906 = vmatpush1.bf16.msra.mxu0 %v1903
      %1907 = vmatprep.subr.bf16.mxu0 0
      %1908 = vmatpush1.bf16.msra.mxu0 0
      %1909 = vmatprep.subr.bf16.mxu0 0
      %1910 = vmatpush1.bf16.msra.mxu0 0
      %1911 = vmatprep.subr.bf16.mxu0 0
      %1912 = vmatpush1.bf16.msra.mxu0 0
      %1913 = vmatprep.subr.bf16.mxu0 0
      %1914 = vmatpush1.bf16.msra.mxu0 0
      %1915 = vmatprep.subr.bf16.mxu0 0
      %1916 = vmatpush1.bf16.msra.mxu0 0
      %1917 = vmatprep.subr.bf16.mxu0 0
      %1918 = vmatpush1.bf16.msra.mxu0 0
      %1919 = vmatprep.subr.bf16.mxu0 0
      %1920 = vmatpush1.bf16.msra.mxu0 0
      %1921 = vmatprep.subr.bf16.mxu0 0
      %1922 = vmatpush1.bf16.msra.mxu0 0
      %1923 = vmatprep.subr.bf16.mxu0 0
      %1924 = vmatpush1.bf16.msra.mxu0 0
      %1925 = vmatprep.subr.bf16.mxu0 0
      %1926 = vmatpush1.bf16.msra.mxu0 0
      %1927 = vmatprep.subr.bf16.mxu0 0
      %1928 = vmatpush1.bf16.msra.mxu0 0
      %1929 = vmatprep.subr.bf16.mxu0 0
      %1930 = vmatpush1.bf16.msra.mxu0 0
      %1931 = vmatprep.subr.bf16.mxu0 0
      %1932 = vmatpush1.bf16.msra.mxu0 0
      %1933 = vmatprep.subr.bf16.mxu0 0
      %1934 = vmatpush1.bf16.msra.mxu0 0
      %1935 = vmatprep.subr.bf16.mxu0 0
      %1936 = vmatpush1.bf16.msra.mxu0 0
      %1937 = vmatprep.mubr.bf16.mxu0 0
      %1938 = vmatmul.mubr.bf16.gmra.mrb[0].mxu0 %v596
      %v1939 = vpop.f32.mrb[0].mxu0
      %v1940 = vadd.f32 0.0, %v1939
      %v1941 = vpop.f32.mrb[0].mxu0
      %v1942 = vpop.f32.mrb[0].mxu0
      %v1943 = vadd.f32 0.0, %v1942
      %v1944 = vpop.f32.mrb[0].mxu0
      %1945 = vmatprep.mubr.bf16.mxu0 0
      %1946 = vmatmul.mubr.bf16.gmra.mrb[0].mxu0 %v599
      %v1947 = vpop.f32.mrb[0].mxu0
      %v1948 = vpop.f32.mrb[0].mxu0
      %v1949 = vpop.f32.mrb[0].mxu0
      %v1950 = vadd.f32 0.0, %v1949
      %v1951 = vpop.f32.mrb[0].mxu0
      %1952 = vmatprep.mubr.bf16.mxu0 0
      %1953 = vmatmul.mubr.bf16.gmra.mrb[0].mxu0 %v602
      %v1954 = vpop.f32.mrb[0].mxu0
      %v1955 = vadd.f32 0.0, %v1954
      %v1956 = vpop.f32.mrb[0].mxu0
      %v1957 = vpop.f32.mrb[0].mxu0
      %v1958 = vpop.f32.mrb[0].mxu0
      %1959 = vmatprep.mubr.bf16.mxu0 0
      %1960 = vmatmul.mubr.bf16.gmra.mrb[0].mxu0 %v605
      %v1961 = vpop.f32.mrb[0].mxu0
      %v1962 = vadd.f32 0.0, %v1961
      %v1963 = vpop.f32.mrb[0].mxu0
      %v1964 = vpop.f32.mrb[0].mxu0
      %v1965 = vadd.f32 0.0, %v1964
      %v1966 = vpop.f32.mrb[0].mxu0
      %1967 = vmatprep.mubr.bf16.mxu0 0
      %1968 = vmatmul.mubr.bf16.gmra.mrb[0].mxu0 %v608
      %v1969 = vpop.f32.mrb[0].mxu0
      %v1970 = vpop.f32.mrb[0].mxu0
      %v1971 = vpop.f32.mrb[0].mxu0
      %v1972 = vadd.f32 0.0, %v1971
      %v1973 = vpop.f32.mrb[0].mxu0
      %1974 = vmatprep.mubr.bf16.mxu0 0
      %1975 = vmatmul.mubr.bf16.gmra.mrb[0].mxu0 %v611
      %v1976 = vpop.f32.mrb[0].mxu0
      %v1977 = vadd.f32 0.0, %v1976
      %v1978 = vpop.f32.mrb[0].mxu0
      %v1979 = vpop.f32.mrb[0].mxu0
      %v1980 = vpop.f32.mrb[0].mxu0
      %1981 = vmatprep.mubr.bf16.mxu0 0
      %1982 = vmatmul.mubr.bf16.gmra.mrb[0].mxu0 %v614
      %v1983 = vpop.f32.mrb[0].mxu0
      %v1984 = vadd.f32 0.0, %v1983
      %v1985 = vpop.f32.mrb[0].mxu0
      %v1986 = vpop.f32.mrb[0].mxu0
      %v1987 = vadd.f32 0.0, %v1986
      %v1988 = vpop.f32.mrb[0].mxu0
      %1989 = vmatprep.mubr.bf16.mxu0 0
      %1990 = vmatmul.mubr.bf16.gmra.mrb[0].mxu0 %v617
      %v1991 = vpop.f32.mrb[0].mxu0
      %v1992 = vpop.f32.mrb[0].mxu0
      %v1993 = vpop.f32.mrb[0].mxu0
      %v1994 = vadd.f32 0.0, %v1993
      %v1995 = vpop.f32.mrb[0].mxu0
      %1996 = vmatprep.mubr.bf16.mxu0 0
      %1997 = vmatmul.mubr.bf16.gmra.mrb[0].mxu0 %v620
      %v1998 = vpop.f32.mrb[0].mxu0
      %v1999 = vadd.f32 0.0, %v1998
      %v2000 = vpop.f32.mrb[0].mxu0
      %v2001 = vpop.f32.mrb[0].mxu0
      %v2002 = vpop.f32.mrb[0].mxu0
      %2003 = vmatprep.mubr.bf16.mxu0 0
      %2004 = vmatmul.mubr.bf16.gmra.mrb[0].mxu0 %v1894
      %v2005 = vpop.f32.mrb[0].mxu0
      %v2006 = vadd.f32 0.0, %v2005
      %v2007 = vpop.f32.mrb[0].mxu0
      %v2008 = vpop.f32.mrb[0].mxu0
      %v2009 = vadd.f32 0.0, %v2008
      %v2010 = vpop.f32.mrb[0].mxu0
      %2011 = vmatprep.mubr.bf16.mxu0 0
      %2012 = vmatmul.mubr.bf16.gmra.mrb[0].mxu0 %v1897
      %v2013 = vpop.f32.mrb[0].mxu0
      %v2014 = vpop.f32.mrb[0].mxu0
      %v2015 = vpop.f32.mrb[0].mxu0
      %v2016 = vadd.f32 0.0, %v2015
      %v2017 = vpop.f32.mrb[0].mxu0
      %2018 = vmatprep.mubr.bf16.mxu0 0
      %2019 = vmatmul.mubr.bf16.gmra.mrb[0].mxu0 %v1900
      %v2020 = vpop.f32.mrb[0].mxu0
      %v2021 = vadd.f32 0.0, %v2020
      %v2022 = vpop.f32.mrb[0].mxu0
      %v2023 = vpop.f32.mrb[0].mxu0
      %v2024 = vpop.f32.mrb[0].mxu0
      %2025 = vdwg.mxu0
      %v2026 = vadd.f32 %v1867, %v1940
      %v2027 = vadd.f32 %v1868, %v1943
      %v2028 = vadd.f32 %v1869, %v1950
      %v2029 = vadd.f32 %v1870, %v1955
      %v2030 = vadd.f32 %v1871, %v1962
      %v2031 = vadd.f32 %v1872, %v1965
      %v2032 = vadd.f32 %v1873, %v1972
      %v2033 = vadd.f32 %v1874, %v1977
      %v2034 = vadd.f32 %v1875, %v1984
      %v2035 = vadd.f32 %v1876, %v1987
      %v2036 = vadd.f32 %v1877, %v1994
      %v2037 = vadd.f32 %v1878, %v1999
      %v2038 = vadd.f32 %v1879, %v2006
      %v2039 = vadd.f32 %v1880, %v2009
      %v2040 = vadd.f32 %v1881, %v2016
      %v2041 = vadd.f32 %v1882, %v2021
      %v2042 = vrot.slane %v506, 2
      %v2043 = vrot.slane %v507, 2
      %v2044 = vsel %vm932, %v2042, %v2043
      %v2045 = vsel %vm932, %v1535, %v2042
      %v2046 = vsel %vm932, %v2043, %v907
      %v2047 = vpack.c.bf16 %v1537, %v1538
      %v2048 = vpack.c.bf16 %v2045, %v1536
      %v2049 = vpack.c.bf16 %v2046, %v2044
      %s2050 = scalar_lea.vmem %s3, 16
      %v2051 = vld [vmem:[%s2050] sm:$0x3]
      %v2053 = vsel %vm585, %v2047, 0
      %v2056 = vsel %vm585, %v2048, 0
      %v2059 = vsel %vm585, %v2049, 0
      %v2062 = vsel %vm622, %v2051, 0
      %2064 = vmatprep.subr.bf16.mxu0 0
      %2065 = vmatpush1.bf16.msra.mxu0 %v2062
      %2066 = vmatprep.subr.bf16.mxu0 0
      %2067 = vmatpush1.bf16.msra.mxu0 0
      %2068 = vmatprep.subr.bf16.mxu0 0
      %2069 = vmatpush1.bf16.msra.mxu0 0
      %2070 = vmatprep.subr.bf16.mxu0 0
      %2071 = vmatpush1.bf16.msra.mxu0 0
      %2072 = vmatprep.subr.bf16.mxu0 0
      %2073 = vmatpush1.bf16.msra.mxu0 0
      %2074 = vmatprep.subr.bf16.mxu0 0
      %2075 = vmatpush1.bf16.msra.mxu0 0
      %2076 = vmatprep.subr.bf16.mxu0 0
      %2077 = vmatpush1.bf16.msra.mxu0 0
      %2078 = vmatprep.subr.bf16.mxu0 0
      %2079 = vmatpush1.bf16.msra.mxu0 0
      %2080 = vmatprep.subr.bf16.mxu0 0
      %2081 = vmatpush1.bf16.msra.mxu0 0
      %2082 = vmatprep.subr.bf16.mxu0 0
      %2083 = vmatpush1.bf16.msra.mxu0 0
      %2084 = vmatprep.subr.bf16.mxu0 0
      %2085 = vmatpush1.bf16.msra.mxu0 0
      %2086 = vmatprep.subr.bf16.mxu0 0
      %2087 = vmatpush1.bf16.msra.mxu0 0
      %2088 = vmatprep.subr.bf16.mxu0 0
      %2089 = vmatpush1.bf16.msra.mxu0 0
      %2090 = vmatprep.subr.bf16.mxu0 0
      %2091 = vmatpush1.bf16.msra.mxu0 0
      %2092 = vmatprep.subr.bf16.mxu0 0
      %2093 = vmatpush1.bf16.msra.mxu0 0
      %2094 = vmatprep.subr.bf16.mxu0 0
      %2095 = vmatpush1.bf16.msra.mxu0 0
      %2096 = vmatprep.mubr.bf16.mxu0 0
      %2097 = vmatmul.mubr.bf16.gmra.mrb[0].mxu0 %v981
      %v2098 = vpop.f32.mrb[0].mxu0
      %v2099 = vadd.f32 0.0, %v2098
      %v2100 = vpop.f32.mrb[0].mxu0
      %v2101 = vpop.f32.mrb[0].mxu0
      %v2102 = vadd.f32 0.0, %v2101
      %v2103 = vpop.f32.mrb[0].mxu0
      %2104 = vmatprep.mubr.bf16.mxu0 0
      %2105 = vmatmul.mubr.bf16.gmra.mrb[0].mxu0 %v984
      %v2106 = vpop.f32.mrb[0].mxu0
      %v2107 = vpop.f32.mrb[0].mxu0
      %v2108 = vpop.f32.mrb[0].mxu0
      %v2109 = vadd.f32 0.0, %v2108
      %v2110 = vpop.f32.mrb[0].mxu0
      %2111 = vmatprep.mubr.bf16.mxu0 0
      %2112 = vmatmul.mubr.bf16.gmra.mrb[0].mxu0 %v987
      %v2113 = vpop.f32.mrb[0].mxu0
      %v2114 = vadd.f32 0.0, %v2113
      %v2115 = vpop.f32.mrb[0].mxu0
      %v2116 = vpop.f32.mrb[0].mxu0
      %v2117 = vpop.f32.mrb[0].mxu0
      %2118 = vmatprep.mubr.bf16.mxu0 0
      %2119 = vmatmul.mubr.bf16.gmra.mrb[0].mxu0 %v990
      %v2120 = vpop.f32.mrb[0].mxu0
      %v2121 = vadd.f32 0.0, %v2120
      %v2122 = vpop.f32.mrb[0].mxu0
      %v2123 = vpop.f32.mrb[0].mxu0
      %v2124 = vadd.f32 0.0, %v2123
      %v2125 = vpop.f32.mrb[0].mxu0
      %2126 = vmatprep.mubr.bf16.mxu0 0
      %2127 = vmatmul.mubr.bf16.gmra.mrb[0].mxu0 %v993
      %v2128 = vpop.f32.mrb[0].mxu0
      %v2129 = vpop.f32.mrb[0].mxu0
      %v2130 = vpop.f32.mrb[0].mxu0
      %v2131 = vadd.f32 0.0, %v2130
      %v2132 = vpop.f32.mrb[0].mxu0
      %2133 = vmatprep.mubr.bf16.mxu0 0
      %2134 = vmatmul.mubr.bf16.gmra.mrb[0].mxu0 %v996
      %v2135 = vpop.f32.mrb[0].mxu0
      %v2136 = vadd.f32 0.0, %v2135
      %v2137 = vpop.f32.mrb[0].mxu0
      %v2138 = vpop.f32.mrb[0].mxu0
      %v2139 = vpop.f32.mrb[0].mxu0
      %2140 = vmatprep.mubr.bf16.mxu0 0
      %2141 = vmatmul.mubr.bf16.gmra.mrb[0].mxu0 %v999
      %v2142 = vpop.f32.mrb[0].mxu0
      %v2143 = vadd.f32 0.0, %v2142
      %v2144 = vpop.f32.mrb[0].mxu0
      %v2145 = vpop.f32.mrb[0].mxu0
      %v2146 = vadd.f32 0.0, %v2145
      %v2147 = vpop.f32.mrb[0].mxu0
      %2148 = vmatprep.mubr.bf16.mxu0 0
      %2149 = vmatmul.mubr.bf16.gmra.mrb[0].mxu0 %v1002
      %v2150 = vpop.f32.mrb[0].mxu0
      %v2151 = vpop.f32.mrb[0].mxu0
      %v2152 = vpop.f32.mrb[0].mxu0
      %v2153 = vadd.f32 0.0, %v2152
      %v2154 = vpop.f32.mrb[0].mxu0
      %2155 = vmatprep.mubr.bf16.mxu0 0
      %2156 = vmatmul.mubr.bf16.gmra.mrb[0].mxu0 %v1005
      %v2157 = vpop.f32.mrb[0].mxu0
      %v2158 = vadd.f32 0.0, %v2157
      %v2159 = vpop.f32.mrb[0].mxu0
      %v2160 = vpop.f32.mrb[0].mxu0
      %v2161 = vpop.f32.mrb[0].mxu0
      %2162 = vmatprep.mubr.bf16.mxu0 0
      %2163 = vmatmul.mubr.bf16.gmra.mrb[0].mxu0 %v2053
      %v2164 = vpop.f32.mrb[0].mxu0
      %v2165 = vadd.f32 0.0, %v2164
      %v2166 = vpop.f32.mrb[0].mxu0
      %v2167 = vpop.f32.mrb[0].mxu0
      %v2168 = vadd.f32 0.0, %v2167
      %v2169 = vpop.f32.mrb[0].mxu0
      %2170 = vmatprep.mubr.bf16.mxu0 0
      %2171 = vmatmul.mubr.bf16.gmra.mrb[0].mxu0 %v2056
      %v2172 = vpop.f32.mrb[0].mxu0
      %v2173 = vpop.f32.mrb[0].mxu0
      %v2174 = vpop.f32.mrb[0].mxu0
      %v2175 = vadd.f32 0.0, %v2174
      %v2176 = vpop.f32.mrb[0].mxu0
      %2177 = vmatprep.mubr.bf16.mxu0 0
      %2178 = vmatmul.mubr.bf16.gmra.mrb[0].mxu0 %v2059
      %v2179 = vpop.f32.mrb[0].mxu0
      %v2180 = vadd.f32 0.0, %v2179
      %v2181 = vpop.f32.mrb[0].mxu0
      %v2182 = vpop.f32.mrb[0].mxu0
      %v2183 = vpop.f32.mrb[0].mxu0
      %2184 = vdwg.mxu0
      %v2185 = vadd.f32 %v2026, %v2099
      %v2186 = vadd.f32 %v2027, %v2102
      %v2187 = vadd.f32 %v2028, %v2109
      %v2188 = vadd.f32 %v2029, %v2114
      %v2189 = vadd.f32 %v2030, %v2121
      %v2190 = vadd.f32 %v2031, %v2124
      %v2191 = vadd.f32 %v2032, %v2131
      %v2192 = vadd.f32 %v2033, %v2136
      %v2193 = vadd.f32 %v2034, %v2143
      %v2194 = vadd.f32 %v2035, %v2146
      %v2195 = vadd.f32 %v2036, %v2153
      %v2196 = vadd.f32 %v2037, %v2158
      %v2197 = vadd.f32 %v2038, %v2165
      %v2198 = vadd.f32 %v2039, %v2168
      %v2199 = vadd.f32 %v2040, %v2175
      %v2200 = vadd.f32 %v2041, %v2180
      %v2201 = vmax.f32 %v2185, 0.0
      %v2202 = vmax.f32 %v2186, 0.0
      %v2203 = vmax.f32 %v2187, 0.0
      %v2204 = vmax.f32 %v2188, 0.0
      %v2205 = vmax.f32 %v2189, 0.0
      %v2206 = vmax.f32 %v2190, 0.0
      %v2207 = vmax.f32 %v2191, 0.0
      %v2208 = vmax.f32 %v2192, 0.0
      %v2209 = vmax.f32 %v2193, 0.0
      %v2210 = vmax.f32 %v2194, 0.0
      %v2211 = vmax.f32 %v2195, 0.0
      %v2212 = vmax.f32 %v2196, 0.0
      %v2213 = vmax.f32 %v2197, 0.0
      %v2214 = vmax.f32 %v2198, 0.0
      %v2215 = vmax.f32 %v2199, 0.0
      %v2216 = vmax.f32 %v2200, 0.0
      %2217 = vst.msk [vmem:[%s235] sm:$0xff] %vm585, %v2201
      %2218 = vst.msk [vmem:[%s235 + $0x8] sm:$0xff] %vm585, %v2202
      %2219 = vst.msk [vmem:[%s235 + $0x10] sm:$0xff] %vm585, %v2203
      %2220 = vst.msk [vmem:[%s235 + $0x18] sm:$0xff] %vm585, %v2204
      %2221 = vst.msk [vmem:[%s235 + $0x20] sm:$0xff] %vm585, %v2205
      %2222 = vst.msk [vmem:[%s235 + $0x28] sm:$0xff] %vm585, %v2206
      %2223 = vst.msk [vmem:[%s235 + $0x30] sm:$0xff] %vm585, %v2207
      %2224 = vst.msk [vmem:[%s235 + $0x38] sm:$0xff] %vm585, %v2208
      %2225 = vst.msk [vmem:[%s235 + $0x40] sm:$0xff] %vm585, %v2209
      %2226 = vst.msk [vmem:[%s235 + $0x48] sm:$0xff] %vm585, %v2210
      %2227 = vst.msk [vmem:[%s235 + $0x50] sm:$0xff] %vm585, %v2211
      %2228 = vst.msk [vmem:[%s235 + $0x58] sm:$0xff] %vm585, %v2212
      %2229 = vst.msk [vmem:[%s235 + $0x60] sm:$0xff] %vm585, %v2213
      %2230 = vst.msk [vmem:[%s235 + $0x68] sm:$0xff] %vm585, %v2214
      %2231 = vst.msk [vmem:[%s235 + $0x70] sm:$0xff] %vm585, %v2215
      %2232 = vst.msk [vmem:[%s235 + $0x78] sm:$0xff] %vm585, %v2216
      %s2233 = smul.u32 8, %s20
      %p2234 = scmp.lt.s32.totalorder %s19, 1
      %s2235 = scalar_select %p2234, %s19, 1
      %p2236 = scmp.lt.s32.totalorder %s2233, 15
      %s2237 = scalar_select %p2236, %s2233, 15
      %s2238 = smul.addr %s2237, 2
      %s2239 = smul.addr %s2235, 32
      %s2240 = sadd.s32 %s2238, %s2239
      %s2241 = smul.addr %s2240, 8
      %s2242 = scalar_lea.vmem %s4, %s2241
      // Predicated region
      $region37: #{up_forward.3} parent=35 // pred_check
        %p2243 = pneg %p138
      $region38: #{up_forward.3} parent=35 // pred_check_branch
        %2245 = sbr.rel (%p2243) target = $region40
      $region39: #{up_forward.3} parent=35 // pred_region
        %s2246 = smul.u32 8, %s20
      $region40: #{up_forward.3} parent=35 // pred_fallthru
        _
    $region36: #{up_forward.3} parent=5 // pred_fallthru
      _
    %p2247 = scmp.le.s32.totalorder 2, %s10
    // Predicated region
    $region41: #{up_forward.3} parent=5 // pred_check
      %p2248 = pneg %p2247
    $region42: #{up_forward.3} parent=5 // pred_check_branch
      %2250 = sbr.rel (%p2248) target = $region44
    $region43: #{up_forward.3} parent=5 // pred_region
      %s2251 = ssub.s32 %s10, 2
      // Predicated region
      $region45: #{up_forward.3} parent=43 // pred_check
        %p2252 = pneg %p144
      $region46: #{up_forward.3} parent=43 // pred_check_branch
        %2254 = sbr.rel (%p2252) target = $region48
      $region47: #{up_forward.3} parent=43 // pred_region
        %s2255 = smul.u32 8, %s22
        %p2256 = scmp.lt.s32.totalorder %s21, 1
        %s2257 = scalar_select %p2256, %s21, 1
        %p2258 = scmp.lt.s32.totalorder %s2255, 15
        %s2259 = scalar_select %p2258, %s2255, 15
        %s2260 = smul.addr %s2259, 2
        %s2261 = smul.addr %s2257, 32
        %s2262 = sadd.s32 %s2260, %s2261
        %s2263 = smul.addr %s2262, 8
        %s2264 = scalar_lea.vmem %s4, %s2263
      $region48: #{up_forward.3} parent=43 // pred_fallthru
        _
    $region44: #{up_forward.3} parent=5 // pred_fallthru
      _
  $region6: #{up_forward.3} parent=0 // loop_footer
    %s14 = sadd.s32 1, %s10
  $region7: #{up_forward.3} parent=0 // loop_footer_branch
    %9 = sbr.rel target = $region3
  $region8: #{up_forward.3} parent=0 // loop_exit
    _

</llo_original>
